<compile_context>
chip_gen: v7x
topology: tpu7x:2x2x1
jax: 0.10.0
libtpu: 0.0.40
codegen_flags: <defaults>
</compile_context>

<pallas_src>
import jax
import jax.numpy as jnp
from jax import lax
from jax.experimental import pallas as pl
from jax.experimental.pallas import tpu as pltpu


def _round_up(x, m):
    return (x + m - 1) // m * m


# ---------------------------------------------------------------------------
# Kernels
# ---------------------------------------------------------------------------

def _conv_pool_relu_kernel(patches_ref, w_ref, b_ref, out_ref):
    """Fused conv (im2col matmul) + 2x2 maxpool + bias + ReLU.

    patches_ref: (4, Rt, Kp)  4 = pool-window positions, rows ordered (b, yp*Wp+xp)
    w_ref:       (Kp, Cp)     K and Cout zero-padded to lane multiples
    b_ref:       (1, Cp)
    out_ref:     (Rt, Cp)
    """
    P, Rt, Kp = patches_ref.shape
    p = patches_ref[...].reshape(P * Rt, Kp)          # leading-dim merge: layout-free
    y = jnp.dot(p, w_ref[...], preferred_element_type=jnp.float32)
    y = y.reshape(P, Rt, -1)
    m = jnp.max(y, axis=0)                            # 2x2 maxpool (VPU)
    out_ref[...] = jnp.maximum(m + b_ref[...], 0.0)   # bias (channel-const) + ReLU


def _linear_kernel(x_ref, w_ref, b_ref, out_ref):
    out_ref[...] = (
        jnp.dot(x_ref[...], w_ref[...], preferred_element_type=jnp.float32)
        + b_ref[...])


# ---------------------------------------------------------------------------
# pallas_call wrappers
# ---------------------------------------------------------------------------

_MAX_ROW_TILE = 512


def conv_pool_relu(patches, w_pad, b_pad):
    """patches: (4, R, Kp) f32 -> (R, Cp) f32."""
    P, R, Kp = patches.shape
    Cp = w_pad.shape[1]
    Rt = min(_MAX_ROW_TILE, _round_up(R, 8))
    Rp = _round_up(R, Rt)
    if Rp != R:
        patches = jnp.pad(patches, ((0, 0), (0, Rp - R), (0, 0)))
    out = pl.pallas_call(
        _conv_pool_relu_kernel,
        out_shape=jax.ShapeDtypeStruct((Rp, Cp), jnp.float32),
        grid=(Rp // Rt,),
        in_specs=[
            pl.BlockSpec((P, Rt, Kp), lambda r: (0, r, 0)),
            pl.BlockSpec((Kp, Cp), lambda r: (0, 0)),
            pl.BlockSpec((1, Cp), lambda r: (0, 0)),
        ],
        out_specs=pl.BlockSpec((Rt, Cp), lambda r: (r, 0)),
        compiler_params=pltpu.CompilerParams(dimension_semantics=("parallel",)),
    )(patches, w_pad, b_pad)
    return out[:R]


def linear(x, w, b_row):
    """x: (B, K), w: (K, H), b_row: (1, H) -> (B, H)."""
    B, K = x.shape
    H = w.shape[1]
    Bt = min(256, _round_up(B, 8))
    Bp = _round_up(B, Bt)
    if Bp != B:
        x = jnp.pad(x, ((0, Bp - B), (0, 0)))
    out = pl.pallas_call(
        _linear_kernel,
        out_shape=jax.ShapeDtypeStruct((Bp, H), jnp.float32),
        grid=(Bp // Bt,),
        in_specs=[
            pl.BlockSpec((Bt, K), lambda i: (i, 0)),
            pl.BlockSpec((K, H), lambda i: (0, 0)),
            pl.BlockSpec((1, H), lambda i: (0, 0)),
        ],
        out_specs=pl.BlockSpec((Bt, H), lambda i: (i, 0)),
        compiler_params=pltpu.CompilerParams(dimension_semantics=("parallel",)),
    )(x, w, b_row)
    return out[:B]


# ---------------------------------------------------------------------------
# Glue (XLA): im2col patch extraction & one-time parameter packing
# ---------------------------------------------------------------------------

def _pool_patches_nhwc(x, k):
    """im2col for VALID conv(k) followed by 2x2/stride-2 maxpool.

    x: (B, H, W, C) -> (B, 4, Hp*Wp, k*k*C); K flattened in (kh, kw, ci) order,
    pool axis ordered (py*2 + px), rows ordered (yp*Wp + xp)."""
    B, H, W, C = x.shape
    Ho, Wo = H - k + 1, W - k + 1
    Hp, Wp = Ho // 2, Wo // 2
    cols = [x[:, dy:dy + Ho, dx:dx + Wo, :] for dy in range(k) for dx in range(k)]
    p = jnp.stack(cols, axis=3)                      # (B, Ho, Wo, k*k, C)
    p = p.reshape(B, Ho, Wo, k * k * C)              # K = (dy*k+dx)*C + ci
    p = p.reshape(B, Hp, 2, Wp, 2, k * k * C)
    p = p.transpose(0, 2, 4, 1, 3, 5)                # (B, 2, 2, Hp, Wp, K)
    return p.reshape(B, 4, Hp * Wp, k * k * C)


def prepare_params(params):
    """One-time packing: conv weights -> (Kpad, Cpad) with zero padding; fc1 weight
    row-permuted to the kernel's (spatial, padded-channel) flattening order."""
    w1, b1, w2, b2, wf, bf = params
    c1, c2 = w1.shape[0], w2.shape[0]              # 20, 50
    k1 = w1.shape[1] * 25                          # 75
    k2 = w2.shape[1] * 25                          # 500
    k1p, k2p, cp = 128, 512, 128
    hidden = wf.shape[0]

    w1f = w1.transpose(2, 3, 1, 0).reshape(k1, c1)           # K order = (kh, kw, ci)
    w1p = jnp.zeros((k1p, cp), jnp.float32).at[:k1, :c1].set(w1f)
    b1p = jnp.zeros((1, cp), jnp.float32).at[0, :c1].set(b1)

    w2f = w2.transpose(2, 3, 1, 0).reshape(k2, c2)
    w2p = jnp.zeros((k2p, cp), jnp.float32).at[:k2, :c2].set(w2f)
    b2p = jnp.zeros((1, cp), jnp.float32).at[0, :c2].set(b2)

    # torch flattens conv_out (B, 50, 4, 4) as c*16 + s (s = y*4 + x); our stage-2
    # output flattens as s*128 + c (channels padded to 128, padded lanes are 0).
    wfT = wf.T                                               # (800, hidden)
    s_idx = jnp.arange(16)
    c_idx = jnp.arange(c2)
    dst = (s_idx[:, None] * cp + c_idx[None, :]).reshape(-1)
    src = (c_idx[None, :] * 16 + s_idx[:, None]).reshape(-1)
    wf_perm = jnp.zeros((16 * cp, hidden), jnp.float32).at[dst].set(wfT[src])
    bf_row = bf.reshape(1, -1)
    return (w1p, b1p, w2p, b2p, wf_perm, bf_row)


def lenet_encoder_forward(x, prepared):
    """x: (B, 3, 28, 28) float32 NCHW. Returns (B, hidden) features (eval mode)."""
    w1p, b1p, w2p, b2p, wf_perm, bf_row = prepared
    B = x.shape[0]

    x_nhwc = jnp.transpose(x, (0, 2, 3, 1))                       # (B, 28, 28, 3)

    # Stage 1: Conv2d(3, 20, 5) + MaxPool2d(2) + ReLU (one fused Pallas kernel)
    p1 = _pool_patches_nhwc(x_nhwc, 5)                            # (B, 4, 144, 75)
    p1 = jnp.transpose(p1, (1, 0, 2, 3)).reshape(4, B * 144, 75)
    p1 = jnp.pad(p1, ((0, 0), (0, 0), (0, w1p.shape[0] - 75)))    # K -> 128
    y1 = conv_pool_relu(p1, w1p, b1p)                             # (B*144, 128)

    # Stage 2: Conv2d(20, 50, 5) + Dropout2d + MaxPool2d(2) + ReLU (fused kernel)
    # TODO(synk): Dropout2d training-mode channel masking not implemented (eval/identity).
    y1 = y1[:, :20].reshape(B, 12, 12, 20)                        # NHWC
    p2 = _pool_patches_nhwc(y1, 5)                                # (B, 4, 16, 500)
    p2 = jnp.transpose(p2, (1, 0, 2, 3)).reshape(4, B * 16, 500)
    p2 = jnp.pad(p2, ((0, 0), (0, 0), (0, w2p.shape[0] - 500)))   # K -> 512
    y2 = conv_pool_relu(p2, w2p, b2p)                             # (B*16, 128); pad ch == 0

    # fc1: flatten is a free reshape; the (c, h, w) permutation lives in wf_perm.
    flat = y2.reshape(B, 16 * 128)                                # (B, 2048)
    return linear(flat, wf_perm, bf_row)                          # (B, hidden)


# ---------------------------------------------------------------------------
# Pure-JAX reference & parameter init
# ---------------------------------------------------------------------------

def ref_forward(x, params):
    """Pure-JAX reference reproducing the PyTorch forward (eval mode)."""
    w1, b1, w2, b2, wf, bf = params
    dn = ('NCHW', 'OIHW', 'NCHW')
    y = lax.conv_general_dilated(x, w1, (1, 1), 'VALID', dimension_numbers=dn)
    y = y + b1[None, :, None, None]
    y = lax.reduce_window(y, -jnp.inf, lax.max, (1, 1, 2, 2), (1, 1, 2, 2), 'VALID')
    y = jnp.maximum(y, 0.0)
    y = lax.conv_general_dilated(y, w2, (1, 1), 'VALID', dimension_numbers=dn)
    y = y + b2[None, :, None, None]
    y = lax.reduce_window(y, -jnp.inf, lax.max, (1, 1, 2, 2), (1, 1, 2, 2), 'VALID')
    y = jnp.maximum(y, 0.0)
    y = y.reshape(y.shape[0], -1)
    return jnp.dot(y, wf.T) + bf


def init_params(key, hidden=500):
    ks = jax.random.split(key, 6)
    w1 = jax.random.normal(ks[0], (20, 3, 5, 5), jnp.float32) * 0.1    # Conv2d(3, 20, 5)
    b1 = jax.random.normal(ks[1], (20,), jnp.float32) * 0.1
    w2 = jax.random.normal(ks[2], (50, 20, 5, 5), jnp.float32) * 0.05  # Conv2d(20, 50, 5)
    b2 = jax.random.normal(ks[3], (50,), jnp.float32) * 0.05
    wf = jax.random.normal(ks[4], (hidden, 50 * 4 * 4), jnp.float32) * 0.02  # Linear(800, hidden)
    bf = jax.random.normal(ks[5], (hidden,), jnp.float32) * 0.02
    return (w1, b1, w2, b2, wf, bf)


if __name__ == "__main__":
    key = jax.random.PRNGKey(0)
    kx, kp = jax.random.split(key)
    # 28x28x3 input is what the module's fc1 (50*4*4) implies.
    x = jax.random.normal(kx, (2, 3, 28, 28), jnp.float32)
    params = init_params(kp, hidden=500)
    prepared = prepare_params(params)

    fwd = jax.jit(lenet_encoder_forward)
    out = jax.block_until_ready(fwd(x, prepared))
    assert out.shape == (2, 500), out.shape

    ref = ref_forward(x, params)
    max_err = float(jnp.max(jnp.abs(out - ref)))
    assert jnp.allclose(out, ref, atol=2e-2, rtol=2e-2), max_err
    print("KERNEL_OK")
</pallas_src>

<mosaic_0001>
module attributes {stable_mosaic.version = 11 : i64} {
  func.func @_conv_pool_relu_kernel(%arg0: i32, %arg1: memref<4x288x128xf32, #tpu.memory_space<vmem>>, %arg2: memref<128x128xf32, #tpu.memory_space<vmem>>, %arg3: memref<1x128xf32, #tpu.memory_space<vmem>>, %arg4: memref<288x128xf32, #tpu.memory_space<vmem>>) attributes {dimension_semantics = [#tpu.dimension_semantics<parallel>], iteration_bounds = array<i64: 1>, scalar_prefetch = 0 : i64, scratch_operands = 0 : i64, tpu.core_type = #tpu.core_type<tc>, window_params = [{transform_indices = @transform_0, window_bounds = array<i64: 4, 288, 128>}, {pipeline_mode = #tpu.pipeline_mode<synchronous>, transform_indices = @transform_1, window_bounds = array<i64: 128, 128>}, {pipeline_mode = #tpu.pipeline_mode<synchronous>, transform_indices = @transform_2, window_bounds = array<i64: 1, 128>}, {transform_indices = @transform_3, window_bounds = array<i64: 288, 128>}]} {
    %c0 = arith.constant 0 : index
    %c0_0 = arith.constant 0 : index
    %c0_1 = arith.constant 0 : index
    %0 = vector.load %arg1[%c0, %c0_0, %c0_1] : memref<4x288x128xf32, #tpu.memory_space<vmem>>, vector<4x288x128xf32>
    %1 = vector.shape_cast %0 : vector<4x288x128xf32> to vector<1152x128xf32>
    %c0_2 = arith.constant 0 : index
    %c0_3 = arith.constant 0 : index
    %2 = vector.load %arg2[%c0_2, %c0_3] : memref<128x128xf32, #tpu.memory_space<vmem>>, vector<128x128xf32>
    %cst = arith.constant dense<0.000000e+00> : vector<1152x128xf32>
    %3 = tpu.matmul %1, %2, %cst {dimension_numbers = #tpu.dot_dimension_numbers<[1], [0], [0], [1], [0, 0, 1, 1], [], []>} : vector<1152x128xf32>, vector<128x128xf32>, vector<1152x128xf32> -> vector<1152x128xf32>
    %4 = vector.shape_cast %3 : vector<1152x128xf32> to vector<4x288x128xf32>
    %cst_4 = arith.constant dense<0xFF800000> : vector<288x128xf32>
    %5 = vector.multi_reduction <maximumf>, %4, %cst_4 [0] : vector<4x288x128xf32> to vector<288x128xf32>
    %c0_5 = arith.constant 0 : index
    %c0_6 = arith.constant 0 : index
    %6 = vector.load %arg3[%c0_5, %c0_6] : memref<1x128xf32, #tpu.memory_space<vmem>>, vector<1x128xf32>
    %7 = vector.broadcast %6 : vector<1x128xf32> to vector<288x128xf32>
    %8 = arith.addf %5, %7 : vector<288x128xf32>
    %cst_7 = arith.constant 0.000000e+00 : f32
    %9 = vector.broadcast %cst_7 : f32 to vector<288x128xf32>
    %10 = arith.maximumf %8, %9 : vector<288x128xf32>
    %c0_8 = arith.constant 0 : index
    %c0_9 = arith.constant 0 : index
    %11 = vector.load %arg4[%c0_8, %c0_9] : memref<288x128xf32, #tpu.memory_space<vmem>>, vector<288x128xf32>
    tpu.vector_store %arg4[%c0_8, %c0_9], %10 {strides = array<i32>} : memref<288x128xf32, #tpu.memory_space<vmem>>, vector<288x128xf32>,
    return
  }
  func.func @transform_0(%arg0: i32) -> (i32, i32, i32) {
    %c0_i32 = arith.constant 0 : i32
    %c0_i32_0 = arith.constant 0 : i32
    %c0_i32_1 = arith.constant 0 : i32
    return %c0_i32, %arg0, %c0_i32_0 : i32, i32, i32
  }
  func.func @transform_1(%arg0: i32) -> (i32, i32) {
    %c0_i32 = arith.constant 0 : i32
    %c0_i32_0 = arith.constant 0 : i32
    %c0_i32_1 = arith.constant 0 : i32
    return %c0_i32, %c0_i32_0 : i32, i32
  }
  func.func @transform_2(%arg0: i32) -> (i32, i32) {
    %c0_i32 = arith.constant 0 : i32
    %c0_i32_0 = arith.constant 0 : i32
    %c0_i32_1 = arith.constant 0 : i32
    return %c0_i32, %c0_i32_0 : i32, i32
  }
  func.func @transform_3(%arg0: i32) -> (i32, i32) {
    %c0_i32 = arith.constant 0 : i32
    %c0_i32_0 = arith.constant 0 : i32
    return %arg0, %c0_i32 : i32, i32
  }
}

module attributes {stable_mosaic.version = 11 : i64} {
  func.func @_conv_pool_relu_kernel(%arg0: i32, %arg1: memref<4x32x512xf32, #tpu.memory_space<vmem>>, %arg2: memref<512x128xf32, #tpu.memory_space<vmem>>, %arg3: memref<1x128xf32, #tpu.memory_space<vmem>>, %arg4: memref<32x128xf32, #tpu.memory_space<vmem>>) attributes {dimension_semantics = [#tpu.dimension_semantics<parallel>], iteration_bounds = array<i64: 1>, scalar_prefetch = 0 : i64, scratch_operands = 0 : i64, tpu.core_type = #tpu.core_type<tc>, window_params = [{transform_indices = @transform_0, window_bounds = array<i64: 4, 32, 512>}, {pipeline_mode = #tpu.pipeline_mode<synchronous>, transform_indices = @transform_1, window_bounds = array<i64: 512, 128>}, {pipeline_mode = #tpu.pipeline_mode<synchronous>, transform_indices = @transform_2, window_bounds = array<i64: 1, 128>}, {transform_indices = @transform_3, window_bounds = array<i64: 32, 128>}]} {
    %c0 = arith.constant 0 : index
    %c0_0 = arith.constant 0 : index
    %c0_1 = arith.constant 0 : index
    %0 = vector.load %arg1[%c0, %c0_0, %c0_1] : memref<4x32x512xf32, #tpu.memory_space<vmem>>, vector<4x32x512xf32>
    %1 = vector.shape_cast %0 : vector<4x32x512xf32> to vector<128x512xf32>
    %c0_2 = arith.constant 0 : index
    %c0_3 = arith.constant 0 : index
    %2 = vector.load %arg2[%c0_2, %c0_3] : memref<512x128xf32, #tpu.memory_space<vmem>>, vector<512x128xf32>
    %cst = arith.constant dense<0.000000e+00> : vector<128x128xf32>
    %3 = tpu.matmul %1, %2, %cst {dimension_numbers = #tpu.dot_dimension_numbers<[1], [0], [0], [1], [0, 0, 1, 1], [], []>} : vector<128x512xf32>, vector<512x128xf32>, vector<128x128xf32> -> vector<128x128xf32>
    %4 = vector.shape_cast %3 : vector<128x128xf32> to vector<4x32x128xf32>
    %cst_4 = arith.constant dense<0xFF800000> : vector<32x128xf32>
    %5 = vector.multi_reduction <maximumf>, %4, %cst_4 [0] : vector<4x32x128xf32> to vector<32x128xf32>
    %c0_5 = arith.constant 0 : index
    %c0_6 = arith.constant 0 : index
    %6 = vector.load %arg3[%c0_5, %c0_6] : memref<1x128xf32, #tpu.memory_space<vmem>>, vector<1x128xf32>
    %7 = vector.broadcast %6 : vector<1x128xf32> to vector<32x128xf32>
    %8 = arith.addf %5, %7 : vector<32x128xf32>
    %cst_7 = arith.constant 0.000000e+00 : f32
    %9 = vector.broadcast %cst_7 : f32 to vector<32x128xf32>
    %10 = arith.maximumf %8, %9 : vector<32x128xf32>
    %c0_8 = arith.constant 0 : index
    %c0_9 = arith.constant 0 : index
    %11 = vector.load %arg4[%c0_8, %c0_9] : memref<32x128xf32, #tpu.memory_space<vmem>>, vector<32x128xf32>
    tpu.vector_store %arg4[%c0_8, %c0_9], %10 {strides = array<i32>} : memref<32x128xf32, #tpu.memory_space<vmem>>, vector<32x128xf32>,
    return
  }
  func.func @transform_0(%arg0: i32) -> (i32, i32, i32) {
    %c0_i32 = arith.constant 0 : i32
    %c0_i32_0 = arith.constant 0 : i32
    %c0_i32_1 = arith.constant 0 : i32
    return %c0_i32, %arg0, %c0_i32_0 : i32, i32, i32
  }
  func.func @transform_1(%arg0: i32) -> (i32, i32) {
    %c0_i32 = arith.constant 0 : i32
    %c0_i32_0 = arith.constant 0 : i32
    %c0_i32_1 = arith.constant 0 : i32
    return %c0_i32, %c0_i32_0 : i32, i32
  }
  func.func @transform_2(%arg0: i32) -> (i32, i32) {
    %c0_i32 = arith.constant 0 : i32
    %c0_i32_0 = arith.constant 0 : i32
    %c0_i32_1 = arith.constant 0 : i32
    return %c0_i32, %c0_i32_0 : i32, i32
  }
  func.func @transform_3(%arg0: i32) -> (i32, i32) {
    %c0_i32 = arith.constant 0 : i32
    %c0_i32_0 = arith.constant 0 : i32
    return %arg0, %c0_i32 : i32, i32
  }
}

module attributes {stable_mosaic.version = 11 : i64} {
  func.func @_linear_kernel(%arg0: i32, %arg1: memref<8x2048xf32, #tpu.memory_space<vmem>>, %arg2: memref<2048x500xf32, #tpu.memory_space<vmem>>, %arg3: memref<1x500xf32, #tpu.memory_space<vmem>>, %arg4: memref<8x500xf32, #tpu.memory_space<vmem>>) attributes {dimension_semantics = [#tpu.dimension_semantics<parallel>], iteration_bounds = array<i64: 1>, scalar_prefetch = 0 : i64, scratch_operands = 0 : i64, tpu.core_type = #tpu.core_type<tc>, window_params = [{transform_indices = @transform_0, window_bounds = array<i64: 8, 2048>}, {pipeline_mode = #tpu.pipeline_mode<synchronous>, transform_indices = @transform_1, window_bounds = array<i64: 2048, 500>}, {pipeline_mode = #tpu.pipeline_mode<synchronous>, transform_indices = @transform_2, window_bounds = array<i64: 1, 500>}, {transform_indices = @transform_3, window_bounds = array<i64: 8, 500>}]} {
    %c0 = arith.constant 0 : index
    %c0_0 = arith.constant 0 : index
    %0 = vector.load %arg1[%c0, %c0_0] : memref<8x2048xf32, #tpu.memory_space<vmem>>, vector<8x2048xf32>
    %c0_1 = arith.constant 0 : index
    %c0_2 = arith.constant 0 : index
    %1 = vector.load %arg2[%c0_1, %c0_2] : memref<2048x500xf32, #tpu.memory_space<vmem>>, vector<2048x500xf32>
    %cst = arith.constant dense<0.000000e+00> : vector<8x500xf32>
    %2 = tpu.matmul %0, %1, %cst {dimension_numbers = #tpu.dot_dimension_numbers<[1], [0], [0], [1], [0, 0, 1, 1], [], []>} : vector<8x2048xf32>, vector<2048x500xf32>, vector<8x500xf32> -> vector<8x500xf32>
    %c0_3 = arith.constant 0 : index
    %c0_4 = arith.constant 0 : index
    %3 = vector.load %arg3[%c0_3, %c0_4] : memref<1x500xf32, #tpu.memory_space<vmem>>, vector<1x500xf32>
    %4 = vector.broadcast %3 : vector<1x500xf32> to vector<8x500xf32>
    %5 = arith.addf %2, %4 : vector<8x500xf32>
    %c0_5 = arith.constant 0 : index
    %c0_6 = arith.constant 0 : index
    %6 = vector.load %arg4[%c0_5, %c0_6] : memref<8x500xf32, #tpu.memory_space<vmem>>, vector<8x500xf32>
    tpu.vector_store %arg4[%c0_5, %c0_6], %5 {strides = array<i32>} : memref<8x500xf32, #tpu.memory_space<vmem>>, vector<8x500xf32>,
    return
  }
  func.func @transform_0(%arg0: i32) -> (i32, i32) {
    %c0_i32 = arith.constant 0 : i32
    %c0_i32_0 = arith.constant 0 : i32
    return %arg0, %c0_i32 : i32, i32
  }
  func.func @transform_1(%arg0: i32) -> (i32, i32) {
    %c0_i32 = arith.constant 0 : i32
    %c0_i32_0 = arith.constant 0 : i32
    %c0_i32_1 = arith.constant 0 : i32
    return %c0_i32, %c0_i32_0 : i32, i32
  }
  func.func @transform_2(%arg0: i32) -> (i32, i32) {
    %c0_i32 = arith.constant 0 : i32
    %c0_i32_0 = arith.constant 0 : i32
    %c0_i32_1 = arith.constant 0 : i32
    return %c0_i32, %c0_i32_0 : i32, i32
  }
  func.func @transform_3(%arg0: i32) -> (i32, i32) {
    %c0_i32 = arith.constant 0 : i32
    %c0_i32_0 = arith.constant 0 : i32
    return %arg0, %c0_i32 : i32, i32
  }
}

</mosaic_0001>

<llo_original>
// kernel: lenet_encoder_forward.3
$region0: #{lenet_encoder_forward.3}
  #allocation0 [shape = 'u32[]', space=smem, size = 0x4, offset = 0x4, fixed_abs, tag = 'smem constant byte address 0x4 - core index']
  #allocation1 [shape = 'u32[144,128]{1,0:T(1,128)}', space=vmem, size = 0x12000, scoped, tag = 'internal scratch']
  %s0 = inlined_call_operand.vmem [shape: f32[4,288,128], index: 0, kind: input, shape index: {}]
  %s1 = inlined_call_operand.vmem [shape: f32[128,128], index: 1, kind: input, shape index: {}]
  %s2 = inlined_call_operand.vmem [shape: f32[1,128], index: 2, kind: input, shape index: {}]
  %s3 = inlined_call_operand.vmem [shape: f32[288,128], index: 3, kind: output, shape index: {}]
  %s4 = sld [smem:[#allocation0]]
  $region22: #{lenet_encoder_forward.3} parent=0
    _
  %s6 = ssub.s32 1, %s4
  %s7 = scalar_select 0, %s6, %s4
  // Predicated region
  $region2: #{lenet_encoder_forward.3} parent=0 // pred_check
    _
  $region3: #{lenet_encoder_forward.3} parent=0 // pred_check_branch
    %9 = sbr.rel (0) target = $region5
  $region4: #{lenet_encoder_forward.3} parent=0 // pred_region
    _
  $region5: #{lenet_encoder_forward.3} parent=0 // pred_fallthru
    _
  // Predicated region
  $region6: #{lenet_encoder_forward.3} parent=0 // pred_check
    _
  $region7: #{lenet_encoder_forward.3} parent=0 // pred_check_branch
    %11 = sbr.rel (0) target = $region9
  $region8: #{lenet_encoder_forward.3} parent=0 // pred_region
    _
  $region9: #{lenet_encoder_forward.3} parent=0 // pred_fallthru
    _
  // Predicated region
  $region10: #{lenet_encoder_forward.3} parent=0 // pred_check
    _
  $region11: #{lenet_encoder_forward.3} parent=0 // pred_check_branch
    %13 = sbr.rel (0) target = $region13
  $region12: #{lenet_encoder_forward.3} parent=0 // pred_region
    _
  $region13: #{lenet_encoder_forward.3} parent=0 // pred_fallthru
    _
  %v14 = vld [vmem:[%s0] sm:$0xff]
  %v15 = vld [vmem:[%s0 + $0x8] sm:$0xff]
  %v16 = vld [vmem:[%s0 + $0x10] sm:$0xff]
  %v17 = vld [vmem:[%s0 + $0x18] sm:$0xff]
  %v18 = vld [vmem:[%s0 + $0x20] sm:$0xff]
  %v19 = vld [vmem:[%s0 + $0x28] sm:$0xff]
  %v20 = vld [vmem:[%s0 + $0x30] sm:$0xff]
  %v21 = vld [vmem:[%s0 + $0x38] sm:$0xff]
  %v22 = vld [vmem:[%s0 + $0x40] sm:$0xff]
  %v23 = vld [vmem:[%s0 + $0x48] sm:$0xff]
  %v24 = vld [vmem:[%s0 + $0x50] sm:$0xff]
  %v25 = vld [vmem:[%s0 + $0x58] sm:$0xff]
  %v26 = vld [vmem:[%s0 + $0x60] sm:$0xff]
  %v27 = vld [vmem:[%s0 + $0x68] sm:$0xff]
  %v28 = vld [vmem:[%s0 + $0x70] sm:$0xff]
  %v29 = vld [vmem:[%s0 + $0x78] sm:$0xff]
  %v30 = vld [vmem:[%s0 + $0x80] sm:$0xff]
  %v31 = vld [vmem:[%s0 + $0x88] sm:$0xff]
  %v32 = vld [vmem:[%s0 + $0x90] sm:$0xff]
  %v33 = vld [vmem:[%s0 + $0x98] sm:$0xff]
  %v34 = vld [vmem:[%s0 + $0xa0] sm:$0xff]
  %v35 = vld [vmem:[%s0 + $0xa8] sm:$0xff]
  %v36 = vld [vmem:[%s0 + $0xb0] sm:$0xff]
  %v37 = vld [vmem:[%s0 + $0xb8] sm:$0xff]
  %v38 = vld [vmem:[%s0 + $0xc0] sm:$0xff]
  %v39 = vld [vmem:[%s0 + $0xc8] sm:$0xff]
  %v40 = vld [vmem:[%s0 + $0xd0] sm:$0xff]
  %v41 = vld [vmem:[%s0 + $0xd8] sm:$0xff]
  %v42 = vld [vmem:[%s0 + $0xe0] sm:$0xff]
  %v43 = vld [vmem:[%s0 + $0xe8] sm:$0xff]
  %v44 = vld [vmem:[%s0 + $0xf0] sm:$0xff]
  %v45 = vld [vmem:[%s0 + $0xf8] sm:$0xff]
  %v46 = vld [vmem:[%s0 + $0x100] sm:$0xff]
  %v47 = vld [vmem:[%s0 + $0x108] sm:$0xff]
  %v48 = vld [vmem:[%s0 + $0x110] sm:$0xff]
  %v49 = vld [vmem:[%s0 + $0x118] sm:$0xff]
  %v50 = vld [vmem:[%s0 + $0x120] sm:$0xff]
  %v51 = vld [vmem:[%s0 + $0x128] sm:$0xff]
  %v52 = vld [vmem:[%s0 + $0x130] sm:$0xff]
  %v53 = vld [vmem:[%s0 + $0x138] sm:$0xff]
  %v54 = vld [vmem:[%s0 + $0x140] sm:$0xff]
  %v55 = vld [vmem:[%s0 + $0x148] sm:$0xff]
  %v56 = vld [vmem:[%s0 + $0x150] sm:$0xff]
  %v57 = vld [vmem:[%s0 + $0x158] sm:$0xff]
  %v58 = vld [vmem:[%s0 + $0x160] sm:$0xff]
  %v59 = vld [vmem:[%s0 + $0x168] sm:$0xff]
  %v60 = vld [vmem:[%s0 + $0x170] sm:$0xff]
  %v61 = vld [vmem:[%s0 + $0x178] sm:$0xff]
  %v62 = vld [vmem:[%s0 + $0x180] sm:$0xff]
  %v63 = vld [vmem:[%s0 + $0x188] sm:$0xff]
  %v64 = vld [vmem:[%s0 + $0x190] sm:$0xff]
  %v65 = vld [vmem:[%s0 + $0x198] sm:$0xff]
  %v66 = vld [vmem:[%s0 + $0x1a0] sm:$0xff]
  %v67 = vld [vmem:[%s0 + $0x1a8] sm:$0xff]
  %v68 = vld [vmem:[%s0 + $0x1b0] sm:$0xff]
  %v69 = vld [vmem:[%s0 + $0x1b8] sm:$0xff]
  %v70 = vld [vmem:[%s0 + $0x1c0] sm:$0xff]
  %v71 = vld [vmem:[%s0 + $0x1c8] sm:$0xff]
  %v72 = vld [vmem:[%s0 + $0x1d0] sm:$0xff]
  %v73 = vld [vmem:[%s0 + $0x1d8] sm:$0xff]
  %v74 = vld [vmem:[%s0 + $0x1e0] sm:$0xff]
  %v75 = vld [vmem:[%s0 + $0x1e8] sm:$0xff]
  %v76 = vld [vmem:[%s0 + $0x1f0] sm:$0xff]
  %v77 = vld [vmem:[%s0 + $0x1f8] sm:$0xff]
  %v78 = vld [vmem:[%s0 + $0x200] sm:$0xff]
  %v79 = vld [vmem:[%s0 + $0x208] sm:$0xff]
  %v80 = vld [vmem:[%s0 + $0x210] sm:$0xff]
  %v81 = vld [vmem:[%s0 + $0x218] sm:$0xff]
  %v82 = vld [vmem:[%s0 + $0x220] sm:$0xff]
  %v83 = vld [vmem:[%s0 + $0x228] sm:$0xff]
  %v84 = vld [vmem:[%s0 + $0x230] sm:$0xff]
  %v85 = vld [vmem:[%s0 + $0x238] sm:$0xff]
  %v86 = vld [vmem:[%s0 + $0x240] sm:$0xff]
  %v87 = vld [vmem:[%s0 + $0x248] sm:$0xff]
  %v88 = vld [vmem:[%s0 + $0x250] sm:$0xff]
  %v89 = vld [vmem:[%s0 + $0x258] sm:$0xff]
  %v90 = vld [vmem:[%s0 + $0x260] sm:$0xff]
  %v91 = vld [vmem:[%s0 + $0x268] sm:$0xff]
  %v92 = vld [vmem:[%s0 + $0x270] sm:$0xff]
  %v93 = vld [vmem:[%s0 + $0x278] sm:$0xff]
  %v94 = vld [vmem:[%s0 + $0x280] sm:$0xff]
  %v95 = vld [vmem:[%s0 + $0x288] sm:$0xff]
  %v96 = vld [vmem:[%s0 + $0x290] sm:$0xff]
  %v97 = vld [vmem:[%s0 + $0x298] sm:$0xff]
  %v98 = vld [vmem:[%s0 + $0x2a0] sm:$0xff]
  %v99 = vld [vmem:[%s0 + $0x2a8] sm:$0xff]
  %v100 = vld [vmem:[%s0 + $0x2b0] sm:$0xff]
  %v101 = vld [vmem:[%s0 + $0x2b8] sm:$0xff]
  %v102 = vld [vmem:[%s0 + $0x2c0] sm:$0xff]
  %v103 = vld [vmem:[%s0 + $0x2c8] sm:$0xff]
  %v104 = vld [vmem:[%s0 + $0x2d0] sm:$0xff]
  %v105 = vld [vmem:[%s0 + $0x2d8] sm:$0xff]
  %v106 = vld [vmem:[%s0 + $0x2e0] sm:$0xff]
  %v107 = vld [vmem:[%s0 + $0x2e8] sm:$0xff]
  %v108 = vld [vmem:[%s0 + $0x2f0] sm:$0xff]
  %v109 = vld [vmem:[%s0 + $0x2f8] sm:$0xff]
  %v110 = vld [vmem:[%s0 + $0x300] sm:$0xff]
  %v111 = vld [vmem:[%s0 + $0x308] sm:$0xff]
  %v112 = vld [vmem:[%s0 + $0x310] sm:$0xff]
  %v113 = vld [vmem:[%s0 + $0x318] sm:$0xff]
  %v114 = vld [vmem:[%s0 + $0x320] sm:$0xff]
  %v115 = vld [vmem:[%s0 + $0x328] sm:$0xff]
  %v116 = vld [vmem:[%s0 + $0x330] sm:$0xff]
  %v117 = vld [vmem:[%s0 + $0x338] sm:$0xff]
  %v118 = vld [vmem:[%s0 + $0x340] sm:$0xff]
  %v119 = vld [vmem:[%s0 + $0x348] sm:$0xff]
  %v120 = vld [vmem:[%s0 + $0x350] sm:$0xff]
  %v121 = vld [vmem:[%s0 + $0x358] sm:$0xff]
  %v122 = vld [vmem:[%s0 + $0x360] sm:$0xff]
  %v123 = vld [vmem:[%s0 + $0x368] sm:$0xff]
  %v124 = vld [vmem:[%s0 + $0x370] sm:$0xff]
  %v125 = vld [vmem:[%s0 + $0x378] sm:$0xff]
  %v126 = vld [vmem:[%s0 + $0x380] sm:$0xff]
  %v127 = vld [vmem:[%s0 + $0x388] sm:$0xff]
  %v128 = vld [vmem:[%s0 + $0x390] sm:$0xff]
  %v129 = vld [vmem:[%s0 + $0x398] sm:$0xff]
  %v130 = vld [vmem:[%s0 + $0x3a0] sm:$0xff]
  %v131 = vld [vmem:[%s0 + $0x3a8] sm:$0xff]
  %v132 = vld [vmem:[%s0 + $0x3b0] sm:$0xff]
  %v133 = vld [vmem:[%s0 + $0x3b8] sm:$0xff]
  %v134 = vld [vmem:[%s0 + $0x3c0] sm:$0xff]
  %v135 = vld [vmem:[%s0 + $0x3c8] sm:$0xff]
  %v136 = vld [vmem:[%s0 + $0x3d0] sm:$0xff]
  %v137 = vld [vmem:[%s0 + $0x3d8] sm:$0xff]
  %v138 = vld [vmem:[%s0 + $0x3e0] sm:$0xff]
  %v139 = vld [vmem:[%s0 + $0x3e8] sm:$0xff]
  %v140 = vld [vmem:[%s0 + $0x3f0] sm:$0xff]
  %v141 = vld [vmem:[%s0 + $0x3f8] sm:$0xff]
  %v142 = vld [vmem:[%s0 + $0x400] sm:$0xff]
  %v143 = vld [vmem:[%s0 + $0x408] sm:$0xff]
  %v144 = vld [vmem:[%s0 + $0x410] sm:$0xff]
  %v145 = vld [vmem:[%s0 + $0x418] sm:$0xff]
  %v146 = vld [vmem:[%s0 + $0x420] sm:$0xff]
  %v147 = vld [vmem:[%s0 + $0x428] sm:$0xff]
  %v148 = vld [vmem:[%s0 + $0x430] sm:$0xff]
  %v149 = vld [vmem:[%s0 + $0x438] sm:$0xff]
  %v150 = vld [vmem:[%s0 + $0x440] sm:$0xff]
  %v151 = vld [vmem:[%s0 + $0x448] sm:$0xff]
  %v152 = vld [vmem:[%s0 + $0x450] sm:$0xff]
  %v153 = vld [vmem:[%s0 + $0x458] sm:$0xff]
  %v154 = vld [vmem:[%s0 + $0x460] sm:$0xff]
  %v155 = vld [vmem:[%s0 + $0x468] sm:$0xff]
  %v156 = vld [vmem:[%s0 + $0x470] sm:$0xff]
  %v157 = vld [vmem:[%s0 + $0x478] sm:$0xff]
  %v158 = vld [vmem:[%s1] sm:$0xff]
  %v159 = vld [vmem:[%s1 + $0x8] sm:$0xff]
  %v160 = vld [vmem:[%s1 + $0x10] sm:$0xff]
  %v161 = vld [vmem:[%s1 + $0x18] sm:$0xff]
  %v162 = vld [vmem:[%s1 + $0x20] sm:$0xff]
  %v163 = vld [vmem:[%s1 + $0x28] sm:$0xff]
  %v164 = vld [vmem:[%s1 + $0x30] sm:$0xff]
  %v165 = vld [vmem:[%s1 + $0x38] sm:$0xff]
  %v166 = vld [vmem:[%s1 + $0x40] sm:$0xff]
  %v167 = vld [vmem:[%s1 + $0x48] sm:$0xff]
  %v168 = vld [vmem:[%s1 + $0x50] sm:$0xff]
  %v169 = vld [vmem:[%s1 + $0x58] sm:$0xff]
  %v170 = vld [vmem:[%s1 + $0x60] sm:$0xff]
  %v171 = vld [vmem:[%s1 + $0x68] sm:$0xff]
  %v172 = vld [vmem:[%s1 + $0x70] sm:$0xff]
  %v173 = vld [vmem:[%s1 + $0x78] sm:$0xff]
  %174 = vmatprep.subr.mxu0 0.0
  %175 = vmatpush1.msra.mxu0 %v158
  %176 = vmatprep.subr.mxu0 0.0
  %177 = vmatpush1.msra.mxu0 %v159
  %178 = vmatprep.subr.mxu0 0.0
  %179 = vmatpush1.msra.mxu0 %v160
  %180 = vmatprep.subr.mxu0 0.0
  %181 = vmatpush1.msra.mxu0 %v161
  %182 = vmatprep.subr.mxu0 0.0
  %183 = vmatpush1.msra.mxu0 %v162
  %184 = vmatprep.subr.mxu0 0.0
  %185 = vmatpush1.msra.mxu0 %v163
  %186 = vmatprep.subr.mxu0 0.0
  %187 = vmatpush1.msra.mxu0 %v164
  %188 = vmatprep.subr.mxu0 0.0
  %189 = vmatpush1.msra.mxu0 %v165
  %190 = vmatprep.subr.mxu0 0.0
  %191 = vmatpush1.msra.mxu0 %v166
  %192 = vmatprep.subr.mxu0 0.0
  %193 = vmatpush1.msra.mxu0 %v167
  %194 = vmatprep.subr.mxu0 0.0
  %195 = vmatpush1.msra.mxu0 %v168
  %196 = vmatprep.subr.mxu0 0.0
  %197 = vmatpush1.msra.mxu0 %v169
  %198 = vmatprep.subr.mxu0 0.0
  %199 = vmatpush1.msra.mxu0 %v170
  %200 = vmatprep.subr.mxu0 0.0
  %201 = vmatpush1.msra.mxu0 %v171
  %202 = vmatprep.subr.mxu0 0.0
  %203 = vmatpush1.msra.mxu0 %v172
  %204 = vmatprep.subr.mxu0 0.0
  %205 = vmatpush1.msra.mxu0 %v173
  %206 = vmatprep.subr.mxu0 0.0
  %207 = vmatpush1.msra.mxu0 0.0
  %208 = vmatprep.subr.mxu0 0.0
  %209 = vmatpush1.msra.mxu0 0.0
  %210 = vmatprep.subr.mxu0 0.0
  %211 = vmatpush1.msra.mxu0 0.0
  %212 = vmatprep.subr.mxu0 0.0
  %213 = vmatpush1.msra.mxu0 0.0
  %214 = vmatprep.subr.mxu0 0.0
  %215 = vmatpush1.msra.mxu0 0.0
  %216 = vmatprep.subr.mxu0 0.0
  %217 = vmatpush1.msra.mxu0 0.0
  %218 = vmatprep.subr.mxu0 0.0
  %219 = vmatpush1.msra.mxu0 0.0
  %220 = vmatprep.subr.mxu0 0.0
  %221 = vmatpush1.msra.mxu0 0.0
  %222 = vmatprep.subr.mxu0 0.0
  %223 = vmatpush1.msra.mxu0 0.0
  %224 = vmatprep.subr.mxu0 0.0
  %225 = vmatpush1.msra.mxu0 0.0
  %226 = vmatprep.subr.mxu0 0.0
  %227 = vmatpush1.msra.mxu0 0.0
  %228 = vmatprep.subr.mxu0 0.0
  %229 = vmatpush1.msra.mxu0 0.0
  %230 = vmatprep.subr.mxu0 0.0
  %231 = vmatpush1.msra.mxu0 0.0
  %232 = vmatprep.subr.mxu0 0.0
  %233 = vmatpush1.msra.mxu0 0.0
  %234 = vmatprep.subr.mxu0 0.0
  %235 = vmatpush1.msra.mxu0 0.0
  %236 = vmatprep.subr.mxu0 0.0
  %237 = vmatpush1.msra.mxu0 0.0
  %238 = vmatprep.mubr.f32.mxu0 0.0
  %239 = vmatmul.mubr.f32.gmra.mrb[0].mxu0 %v14
  %v240 = vpop.f32.mrb[0].mxu0
  %v241 = vadd.f32 0.0, %v240
  %v242 = vpop.f32.mrb[0].mxu0
  %243 = vmatprep.mubr.f32.mxu0 0.0
  %244 = vmatmul.mubr.f32.gmra.mrb[0].mxu0 %v15
  %v245 = vpop.f32.mrb[0].mxu0
  %v246 = vadd.f32 0.0, %v245
  %v247 = vpop.f32.mrb[0].mxu0
  %248 = vmatprep.mubr.f32.mxu0 0.0
  %249 = vmatmul.mubr.f32.gmra.mrb[0].mxu0 %v16
  %v250 = vpop.f32.mrb[0].mxu0
  %v251 = vadd.f32 0.0, %v250
  %v252 = vpop.f32.mrb[0].mxu0
  %253 = vmatprep.mubr.f32.mxu0 0.0
  %254 = vmatmul.mubr.f32.gmra.mrb[0].mxu0 %v17
  %v255 = vpop.f32.mrb[0].mxu0
  %v256 = vadd.f32 0.0, %v255
  %v257 = vpop.f32.mrb[0].mxu0
  %258 = vmatprep.mubr.f32.mxu0 0.0
  %259 = vmatmul.mubr.f32.gmra.mrb[0].mxu0 %v18
  %v260 = vpop.f32.mrb[0].mxu0
  %v261 = vadd.f32 0.0, %v260
  %v262 = vpop.f32.mrb[0].mxu0
  %263 = vmatprep.mubr.f32.mxu0 0.0
  %264 = vmatmul.mubr.f32.gmra.mrb[0].mxu0 %v19
  %v265 = vpop.f32.mrb[0].mxu0
  %v266 = vadd.f32 0.0, %v265
  %v267 = vpop.f32.mrb[0].mxu0
  %268 = vmatprep.mubr.f32.mxu0 0.0
  %269 = vmatmul.mubr.f32.gmra.mrb[0].mxu0 %v20
  %v270 = vpop.f32.mrb[0].mxu0
  %v271 = vadd.f32 0.0, %v270
  %v272 = vpop.f32.mrb[0].mxu0
  %273 = vmatprep.mubr.f32.mxu0 0.0
  %274 = vmatmul.mubr.f32.gmra.mrb[0].mxu0 %v21
  %v275 = vpop.f32.mrb[0].mxu0
  %v276 = vadd.f32 0.0, %v275
  %v277 = vpop.f32.mrb[0].mxu0
  %278 = vmatprep.mubr.f32.mxu0 0.0
  %279 = vmatmul.mubr.f32.gmra.mrb[0].mxu0 %v22
  %v280 = vpop.f32.mrb[0].mxu0
  %v281 = vadd.f32 0.0, %v280
  %v282 = vpop.f32.mrb[0].mxu0
  %283 = vmatprep.mubr.f32.mxu0 0.0
  %284 = vmatmul.mubr.f32.gmra.mrb[0].mxu0 %v23
  %v285 = vpop.f32.mrb[0].mxu0
  %v286 = vadd.f32 0.0, %v285
  %v287 = vpop.f32.mrb[0].mxu0
  %288 = vmatprep.mubr.f32.mxu0 0.0
  %289 = vmatmul.mubr.f32.gmra.mrb[0].mxu0 %v24
  %v290 = vpop.f32.mrb[0].mxu0
  %v291 = vadd.f32 0.0, %v290
  %v292 = vpop.f32.mrb[0].mxu0
  %293 = vmatprep.mubr.f32.mxu0 0.0
  %294 = vmatmul.mubr.f32.gmra.mrb[0].mxu0 %v25
  %v295 = vpop.f32.mrb[0].mxu0
  %v296 = vadd.f32 0.0, %v295
  %v297 = vpop.f32.mrb[0].mxu0
  %298 = vmatprep.mubr.f32.mxu0 0.0
  %299 = vmatmul.mubr.f32.gmra.mrb[0].mxu0 %v26
  %v300 = vpop.f32.mrb[0].mxu0
  %v301 = vadd.f32 0.0, %v300
  %v302 = vpop.f32.mrb[0].mxu0
  %303 = vmatprep.mubr.f32.mxu0 0.0
  %304 = vmatmul.mubr.f32.gmra.mrb[0].mxu0 %v27
  %v305 = vpop.f32.mrb[0].mxu0
  %v306 = vadd.f32 0.0, %v305
  %v307 = vpop.f32.mrb[0].mxu0
  %308 = vmatprep.mubr.f32.mxu0 0.0
  %309 = vmatmul.mubr.f32.gmra.mrb[0].mxu0 %v28
  %v310 = vpop.f32.mrb[0].mxu0
  %v311 = vadd.f32 0.0, %v310
  %v312 = vpop.f32.mrb[0].mxu0
  %313 = vmatprep.mubr.f32.mxu0 0.0
  %314 = vmatmul.mubr.f32.gmra.mrb[0].mxu0 %v29
  %v315 = vpop.f32.mrb[0].mxu0
  %v316 = vadd.f32 0.0, %v315
  %v317 = vpop.f32.mrb[0].mxu0
  %318 = vmatprep.mubr.f32.mxu0 0.0
  %319 = vmatmul.mubr.f32.gmra.mrb[0].mxu0 %v30
  %v320 = vpop.f32.mrb[0].mxu0
  %v321 = vadd.f32 0.0, %v320
  %v322 = vpop.f32.mrb[0].mxu0
  %323 = vmatprep.mubr.f32.mxu0 0.0
  %324 = vmatmul.mubr.f32.gmra.mrb[0].mxu0 %v31
  %v325 = vpop.f32.mrb[0].mxu0
  %v326 = vadd.f32 0.0, %v325
  %v327 = vpop.f32.mrb[0].mxu0
  %328 = vmatprep.mubr.f32.mxu0 0.0
  %329 = vmatmul.mubr.f32.gmra.mrb[0].mxu0 %v32
  %v330 = vpop.f32.mrb[0].mxu0
  %v331 = vadd.f32 0.0, %v330
  %v332 = vpop.f32.mrb[0].mxu0
  %333 = vmatprep.mubr.f32.mxu0 0.0
  %334 = vmatmul.mubr.f32.gmra.mrb[0].mxu0 %v33
  %v335 = vpop.f32.mrb[0].mxu0
  %v336 = vadd.f32 0.0, %v335
  %v337 = vpop.f32.mrb[0].mxu0
  %338 = vmatprep.mubr.f32.mxu0 0.0
  %339 = vmatmul.mubr.f32.gmra.mrb[0].mxu0 %v34
  %v340 = vpop.f32.mrb[0].mxu0
  %v341 = vadd.f32 0.0, %v340
  %v342 = vpop.f32.mrb[0].mxu0
  %343 = vmatprep.mubr.f32.mxu0 0.0
  %344 = vmatmul.mubr.f32.gmra.mrb[0].mxu0 %v35
  %v345 = vpop.f32.mrb[0].mxu0
  %v346 = vadd.f32 0.0, %v345
  %v347 = vpop.f32.mrb[0].mxu0
  %348 = vmatprep.mubr.f32.mxu0 0.0
  %349 = vmatmul.mubr.f32.gmra.mrb[0].mxu0 %v36
  %v350 = vpop.f32.mrb[0].mxu0
  %v351 = vadd.f32 0.0, %v350
  %v352 = vpop.f32.mrb[0].mxu0
  %353 = vmatprep.mubr.f32.mxu0 0.0
  %354 = vmatmul.mubr.f32.gmra.mrb[0].mxu0 %v37
  %v355 = vpop.f32.mrb[0].mxu0
  %v356 = vadd.f32 0.0, %v355
  %v357 = vpop.f32.mrb[0].mxu0
  %358 = vmatprep.mubr.f32.mxu0 0.0
  %359 = vmatmul.mubr.f32.gmra.mrb[0].mxu0 %v38
  %v360 = vpop.f32.mrb[0].mxu0
  %v361 = vadd.f32 0.0, %v360
  %v362 = vpop.f32.mrb[0].mxu0
  %363 = vmatprep.mubr.f32.mxu0 0.0
  %364 = vmatmul.mubr.f32.gmra.mrb[0].mxu0 %v39
  %v365 = vpop.f32.mrb[0].mxu0
  %v366 = vadd.f32 0.0, %v365
  %v367 = vpop.f32.mrb[0].mxu0
  %368 = vmatprep.mubr.f32.mxu0 0.0
  %369 = vmatmul.mubr.f32.gmra.mrb[0].mxu0 %v40
  %v370 = vpop.f32.mrb[0].mxu0
  %v371 = vadd.f32 0.0, %v370
  %v372 = vpop.f32.mrb[0].mxu0
  %373 = vmatprep.mubr.f32.mxu0 0.0
  %374 = vmatmul.mubr.f32.gmra.mrb[0].mxu0 %v41
  %v375 = vpop.f32.mrb[0].mxu0
  %v376 = vadd.f32 0.0, %v375
  %v377 = vpop.f32.mrb[0].mxu0
  %378 = vmatprep.mubr.f32.mxu0 0.0
  %379 = vmatmul.mubr.f32.gmra.mrb[0].mxu0 %v42
  %v380 = vpop.f32.mrb[0].mxu0
  %v381 = vadd.f32 0.0, %v380
  %v382 = vpop.f32.mrb[0].mxu0
  %383 = vmatprep.mubr.f32.mxu0 0.0
  %384 = vmatmul.mubr.f32.gmra.mrb[0].mxu0 %v43
  %v385 = vpop.f32.mrb[0].mxu0
  %v386 = vadd.f32 0.0, %v385
  %v387 = vpop.f32.mrb[0].mxu0
  %388 = vmatprep.mubr.f32.mxu0 0.0
  %389 = vmatmul.mubr.f32.gmra.mrb[0].mxu0 %v44
  %v390 = vpop.f32.mrb[0].mxu0
  %v391 = vadd.f32 0.0, %v390
  %v392 = vpop.f32.mrb[0].mxu0
  %393 = vmatprep.mubr.f32.mxu0 0.0
  %394 = vmatmul.mubr.f32.gmra.mrb[0].mxu0 %v45
  %v395 = vpop.f32.mrb[0].mxu0
  %v396 = vadd.f32 0.0, %v395
  %v397 = vpop.f32.mrb[0].mxu0
  %398 = vmatprep.mubr.f32.mxu0 0.0
  %399 = vmatmul.mubr.f32.gmra.mrb[0].mxu0 %v46
  %v400 = vpop.f32.mrb[0].mxu0
  %v401 = vadd.f32 0.0, %v400
  %v402 = vpop.f32.mrb[0].mxu0
  %403 = vmatprep.mubr.f32.mxu0 0.0
  %404 = vmatmul.mubr.f32.gmra.mrb[0].mxu0 %v47
  %v405 = vpop.f32.mrb[0].mxu0
  %v406 = vadd.f32 0.0, %v405
  %v407 = vpop.f32.mrb[0].mxu0
  %408 = vmatprep.mubr.f32.mxu0 0.0
  %409 = vmatmul.mubr.f32.gmra.mrb[0].mxu0 %v48
  %v410 = vpop.f32.mrb[0].mxu0
  %v411 = vadd.f32 0.0, %v410
  %v412 = vpop.f32.mrb[0].mxu0
  %413 = vmatprep.mubr.f32.mxu0 0.0
  %414 = vmatmul.mubr.f32.gmra.mrb[0].mxu0 %v49
  %v415 = vpop.f32.mrb[0].mxu0
  %v416 = vadd.f32 0.0, %v415
  %v417 = vpop.f32.mrb[0].mxu0
  %418 = vmatprep.mubr.f32.mxu0 0.0
  %419 = vmatmul.mubr.f32.gmra.mrb[0].mxu0 %v50
  %v420 = vpop.f32.mrb[0].mxu0
  %v421 = vadd.f32 0.0, %v420
  %v422 = vpop.f32.mrb[0].mxu0
  %423 = vmatprep.mubr.f32.mxu0 0.0
  %424 = vmatmul.mubr.f32.gmra.mrb[0].mxu0 %v51
  %v425 = vpop.f32.mrb[0].mxu0
  %v426 = vadd.f32 0.0, %v425
  %v427 = vpop.f32.mrb[0].mxu0
  %428 = vmatprep.mubr.f32.mxu0 0.0
  %429 = vmatmul.mubr.f32.gmra.mrb[0].mxu0 %v52
  %v430 = vpop.f32.mrb[0].mxu0
  %v431 = vadd.f32 0.0, %v430
  %v432 = vpop.f32.mrb[0].mxu0
  %433 = vmatprep.mubr.f32.mxu0 0.0
  %434 = vmatmul.mubr.f32.gmra.mrb[0].mxu0 %v53
  %v435 = vpop.f32.mrb[0].mxu0
  %v436 = vadd.f32 0.0, %v435
  %v437 = vpop.f32.mrb[0].mxu0
  %438 = vmatprep.mubr.f32.mxu0 0.0
  %439 = vmatmul.mubr.f32.gmra.mrb[0].mxu0 %v54
  %v440 = vpop.f32.mrb[0].mxu0
  %v441 = vadd.f32 0.0, %v440
  %v442 = vpop.f32.mrb[0].mxu0
  %443 = vmatprep.mubr.f32.mxu0 0.0
  %444 = vmatmul.mubr.f32.gmra.mrb[0].mxu0 %v55
  %v445 = vpop.f32.mrb[0].mxu0
  %v446 = vadd.f32 0.0, %v445
  %v447 = vpop.f32.mrb[0].mxu0
  %448 = vmatprep.mubr.f32.mxu0 0.0
  %449 = vmatmul.mubr.f32.gmra.mrb[0].mxu0 %v56
  %v450 = vpop.f32.mrb[0].mxu0
  %v451 = vadd.f32 0.0, %v450
  %v452 = vpop.f32.mrb[0].mxu0
  %453 = vmatprep.mubr.f32.mxu0 0.0
  %454 = vmatmul.mubr.f32.gmra.mrb[0].mxu0 %v57
  %v455 = vpop.f32.mrb[0].mxu0
  %v456 = vadd.f32 0.0, %v455
  %v457 = vpop.f32.mrb[0].mxu0
  %458 = vmatprep.mubr.f32.mxu0 0.0
  %459 = vmatmul.mubr.f32.gmra.mrb[0].mxu0 %v58
  %v460 = vpop.f32.mrb[0].mxu0
  %v461 = vadd.f32 0.0, %v460
  %v462 = vpop.f32.mrb[0].mxu0
  %463 = vmatprep.mubr.f32.mxu0 0.0
  %464 = vmatmul.mubr.f32.gmra.mrb[0].mxu0 %v59
  %v465 = vpop.f32.mrb[0].mxu0
  %v466 = vadd.f32 0.0, %v465
  %v467 = vpop.f32.mrb[0].mxu0
  %468 = vmatprep.mubr.f32.mxu0 0.0
  %469 = vmatmul.mubr.f32.gmra.mrb[0].mxu0 %v60
  %v470 = vpop.f32.mrb[0].mxu0
  %v471 = vadd.f32 0.0, %v470
  %v472 = vpop.f32.mrb[0].mxu0
  %473 = vmatprep.mubr.f32.mxu0 0.0
  %474 = vmatmul.mubr.f32.gmra.mrb[0].mxu0 %v61
  %v475 = vpop.f32.mrb[0].mxu0
  %v476 = vadd.f32 0.0, %v475
  %v477 = vpop.f32.mrb[0].mxu0
  %478 = vmatprep.mubr.f32.mxu0 0.0
  %479 = vmatmul.mubr.f32.gmra.mrb[0].mxu0 %v62
  %v480 = vpop.f32.mrb[0].mxu0
  %v481 = vadd.f32 0.0, %v480
  %v482 = vpop.f32.mrb[0].mxu0
  %483 = vmatprep.mubr.f32.mxu0 0.0
  %484 = vmatmul.mubr.f32.gmra.mrb[0].mxu0 %v63
  %v485 = vpop.f32.mrb[0].mxu0
  %v486 = vadd.f32 0.0, %v485
  %v487 = vpop.f32.mrb[0].mxu0
  %488 = vmatprep.mubr.f32.mxu0 0.0
  %489 = vmatmul.mubr.f32.gmra.mrb[0].mxu0 %v64
  %v490 = vpop.f32.mrb[0].mxu0
  %v491 = vadd.f32 0.0, %v490
  %v492 = vpop.f32.mrb[0].mxu0
  %493 = vmatprep.mubr.f32.mxu0 0.0
  %494 = vmatmul.mubr.f32.gmra.mrb[0].mxu0 %v65
  %v495 = vpop.f32.mrb[0].mxu0
  %v496 = vadd.f32 0.0, %v495
  %v497 = vpop.f32.mrb[0].mxu0
  %498 = vmatprep.mubr.f32.mxu0 0.0
  %499 = vmatmul.mubr.f32.gmra.mrb[0].mxu0 %v66
  %v500 = vpop.f32.mrb[0].mxu0
  %v501 = vadd.f32 0.0, %v500
  %v502 = vpop.f32.mrb[0].mxu0
  %503 = vmatprep.mubr.f32.mxu0 0.0
  %504 = vmatmul.mubr.f32.gmra.mrb[0].mxu0 %v67
  %v505 = vpop.f32.mrb[0].mxu0
  %v506 = vadd.f32 0.0, %v505
  %v507 = vpop.f32.mrb[0].mxu0
  %508 = vmatprep.mubr.f32.mxu0 0.0
  %509 = vmatmul.mubr.f32.gmra.mrb[0].mxu0 %v68
  %v510 = vpop.f32.mrb[0].mxu0
  %v511 = vadd.f32 0.0, %v510
  %v512 = vpop.f32.mrb[0].mxu0
  %513 = vmatprep.mubr.f32.mxu0 0.0
  %514 = vmatmul.mubr.f32.gmra.mrb[0].mxu0 %v69
  %v515 = vpop.f32.mrb[0].mxu0
  %v516 = vadd.f32 0.0, %v515
  %v517 = vpop.f32.mrb[0].mxu0
  %518 = vmatprep.mubr.f32.mxu0 0.0
  %519 = vmatmul.mubr.f32.gmra.mrb[0].mxu0 %v70
  %v520 = vpop.f32.mrb[0].mxu0
  %v521 = vadd.f32 0.0, %v520
  %v522 = vpop.f32.mrb[0].mxu0
  %523 = vmatprep.mubr.f32.mxu0 0.0
  %524 = vmatmul.mubr.f32.gmra.mrb[0].mxu0 %v71
  %v525 = vpop.f32.mrb[0].mxu0
  %v526 = vadd.f32 0.0, %v525
  %v527 = vpop.f32.mrb[0].mxu0
  %528 = vmatprep.mubr.f32.mxu0 0.0
  %529 = vmatmul.mubr.f32.gmra.mrb[0].mxu0 %v72
  %v530 = vpop.f32.mrb[0].mxu0
  %v531 = vadd.f32 0.0, %v530
  %v532 = vpop.f32.mrb[0].mxu0
  %533 = vmatprep.mubr.f32.mxu0 0.0
  %534 = vmatmul.mubr.f32.gmra.mrb[0].mxu0 %v73
  %v535 = vpop.f32.mrb[0].mxu0
  %v536 = vadd.f32 0.0, %v535
  %v537 = vpop.f32.mrb[0].mxu0
  %538 = vmatprep.mubr.f32.mxu0 0.0
  %539 = vmatmul.mubr.f32.gmra.mrb[0].mxu0 %v74
  %v540 = vpop.f32.mrb[0].mxu0
  %v541 = vadd.f32 0.0, %v540
  %v542 = vpop.f32.mrb[0].mxu0
  %543 = vmatprep.mubr.f32.mxu0 0.0
  %544 = vmatmul.mubr.f32.gmra.mrb[0].mxu0 %v75
  %v545 = vpop.f32.mrb[0].mxu0
  %v546 = vadd.f32 0.0, %v545
  %v547 = vpop.f32.mrb[0].mxu0
  %548 = vmatprep.mubr.f32.mxu0 0.0
  %549 = vmatmul.mubr.f32.gmra.mrb[0].mxu0 %v76
  %v550 = vpop.f32.mrb[0].mxu0
  %v551 = vadd.f32 0.0, %v550
  %v552 = vpop.f32.mrb[0].mxu0
  %553 = vmatprep.mubr.f32.mxu0 0.0
  %554 = vmatmul.mubr.f32.gmra.mrb[0].mxu0 %v77
  %v555 = vpop.f32.mrb[0].mxu0
  %v556 = vadd.f32 0.0, %v555
  %v557 = vpop.f32.mrb[0].mxu0
  %558 = vmatprep.mubr.f32.mxu0 0.0
  %559 = vmatmul.mubr.f32.gmra.mrb[0].mxu0 %v78
  %v560 = vpop.f32.mrb[0].mxu0
  %v561 = vadd.f32 0.0, %v560
  %v562 = vpop.f32.mrb[0].mxu0
  %563 = vmatprep.mubr.f32.mxu0 0.0
  %564 = vmatmul.mubr.f32.gmra.mrb[0].mxu0 %v79
  %v565 = vpop.f32.mrb[0].mxu0
  %v566 = vadd.f32 0.0, %v565
  %v567 = vpop.f32.mrb[0].mxu0
  %568 = vmatprep.mubr.f32.mxu0 0.0
  %569 = vmatmul.mubr.f32.gmra.mrb[0].mxu0 %v80
  %v570 = vpop.f32.mrb[0].mxu0
  %v571 = vadd.f32 0.0, %v570
  %v572 = vpop.f32.mrb[0].mxu0
  %573 = vmatprep.mubr.f32.mxu0 0.0
  %574 = vmatmul.mubr.f32.gmra.mrb[0].mxu0 %v81
  %v575 = vpop.f32.mrb[0].mxu0
  %v576 = vadd.f32 0.0, %v575
  %v577 = vpop.f32.mrb[0].mxu0
  %578 = vmatprep.mubr.f32.mxu0 0.0
  %579 = vmatmul.mubr.f32.gmra.mrb[0].mxu0 %v82
  %v580 = vpop.f32.mrb[0].mxu0
  %v581 = vadd.f32 0.0, %v580
  %v582 = vpop.f32.mrb[0].mxu0
  %583 = vmatprep.mubr.f32.mxu0 0.0
  %584 = vmatmul.mubr.f32.gmra.mrb[0].mxu0 %v83
  %v585 = vpop.f32.mrb[0].mxu0
  %v586 = vadd.f32 0.0, %v585
  %v587 = vpop.f32.mrb[0].mxu0
  %588 = vmatprep.mubr.f32.mxu0 0.0
  %589 = vmatmul.mubr.f32.gmra.mrb[0].mxu0 %v84
  %v590 = vpop.f32.mrb[0].mxu0
  %v591 = vadd.f32 0.0, %v590
  %v592 = vpop.f32.mrb[0].mxu0
  %593 = vmatprep.mubr.f32.mxu0 0.0
  %594 = vmatmul.mubr.f32.gmra.mrb[0].mxu0 %v85
  %v595 = vpop.f32.mrb[0].mxu0
  %v596 = vadd.f32 0.0, %v595
  %v597 = vpop.f32.mrb[0].mxu0
  %598 = vmatprep.mubr.f32.mxu0 0.0
  %599 = vmatmul.mubr.f32.gmra.mrb[0].mxu0 %v86
  %v600 = vpop.f32.mrb[0].mxu0
  %v601 = vadd.f32 0.0, %v600
  %v602 = vpop.f32.mrb[0].mxu0
  %603 = vmatprep.mubr.f32.mxu0 0.0
  %604 = vmatmul.mubr.f32.gmra.mrb[0].mxu0 %v87
  %v605 = vpop.f32.mrb[0].mxu0
  %v606 = vadd.f32 0.0, %v605
  %v607 = vpop.f32.mrb[0].mxu0
  %608 = vmatprep.mubr.f32.mxu0 0.0
  %609 = vmatmul.mubr.f32.gmra.mrb[0].mxu0 %v88
  %v610 = vpop.f32.mrb[0].mxu0
  %v611 = vadd.f32 0.0, %v610
  %v612 = vpop.f32.mrb[0].mxu0
  %613 = vmatprep.mubr.f32.mxu0 0.0
  %614 = vmatmul.mubr.f32.gmra.mrb[0].mxu0 %v89
  %v615 = vpop.f32.mrb[0].mxu0
  %v616 = vadd.f32 0.0, %v615
  %v617 = vpop.f32.mrb[0].mxu0
  %618 = vmatprep.mubr.f32.mxu0 0.0
  %619 = vmatmul.mubr.f32.gmra.mrb[0].mxu0 %v90
  %v620 = vpop.f32.mrb[0].mxu0
  %v621 = vadd.f32 0.0, %v620
  %v622 = vpop.f32.mrb[0].mxu0
  %623 = vmatprep.mubr.f32.mxu0 0.0
  %624 = vmatmul.mubr.f32.gmra.mrb[0].mxu0 %v91
  %v625 = vpop.f32.mrb[0].mxu0
  %v626 = vadd.f32 0.0, %v625
  %v627 = vpop.f32.mrb[0].mxu0
  %628 = vmatprep.mubr.f32.mxu0 0.0
  %629 = vmatmul.mubr.f32.gmra.mrb[0].mxu0 %v92
  %v630 = vpop.f32.mrb[0].mxu0
  %v631 = vadd.f32 0.0, %v630
  %v632 = vpop.f32.mrb[0].mxu0
  %633 = vmatprep.mubr.f32.mxu0 0.0
  %634 = vmatmul.mubr.f32.gmra.mrb[0].mxu0 %v93
  %v635 = vpop.f32.mrb[0].mxu0
  %v636 = vadd.f32 0.0, %v635
  %v637 = vpop.f32.mrb[0].mxu0
  %638 = vmatprep.mubr.f32.mxu0 0.0
  %639 = vmatmul.mubr.f32.gmra.mrb[0].mxu0 %v94
  %v640 = vpop.f32.mrb[0].mxu0
  %v641 = vadd.f32 0.0, %v640
  %v642 = vpop.f32.mrb[0].mxu0
  %643 = vmatprep.mubr.f32.mxu0 0.0
  %644 = vmatmul.mubr.f32.gmra.mrb[0].mxu0 %v95
  %v645 = vpop.f32.mrb[0].mxu0
  %v646 = vadd.f32 0.0, %v645
  %v647 = vpop.f32.mrb[0].mxu0
  %648 = vmatprep.mubr.f32.mxu0 0.0
  %649 = vmatmul.mubr.f32.gmra.mrb[0].mxu0 %v96
  %v650 = vpop.f32.mrb[0].mxu0
  %v651 = vadd.f32 0.0, %v650
  %v652 = vpop.f32.mrb[0].mxu0
  %653 = vmatprep.mubr.f32.mxu0 0.0
  %654 = vmatmul.mubr.f32.gmra.mrb[0].mxu0 %v97
  %v655 = vpop.f32.mrb[0].mxu0
  %v656 = vadd.f32 0.0, %v655
  %v657 = vpop.f32.mrb[0].mxu0
  %658 = vmatprep.mubr.f32.mxu0 0.0
  %659 = vmatmul.mubr.f32.gmra.mrb[0].mxu0 %v98
  %v660 = vpop.f32.mrb[0].mxu0
  %v661 = vadd.f32 0.0, %v660
  %v662 = vpop.f32.mrb[0].mxu0
  %663 = vmatprep.mubr.f32.mxu0 0.0
  %664 = vmatmul.mubr.f32.gmra.mrb[0].mxu0 %v99
  %v665 = vpop.f32.mrb[0].mxu0
  %v666 = vadd.f32 0.0, %v665
  %v667 = vpop.f32.mrb[0].mxu0
  %668 = vmatprep.mubr.f32.mxu0 0.0
  %669 = vmatmul.mubr.f32.gmra.mrb[0].mxu0 %v100
  %v670 = vpop.f32.mrb[0].mxu0
  %v671 = vadd.f32 0.0, %v670
  %v672 = vpop.f32.mrb[0].mxu0
  %673 = vmatprep.mubr.f32.mxu0 0.0
  %674 = vmatmul.mubr.f32.gmra.mrb[0].mxu0 %v101
  %v675 = vpop.f32.mrb[0].mxu0
  %v676 = vadd.f32 0.0, %v675
  %v677 = vpop.f32.mrb[0].mxu0
  %678 = vmatprep.mubr.f32.mxu0 0.0
  %679 = vmatmul.mubr.f32.gmra.mrb[0].mxu0 %v102
  %v680 = vpop.f32.mrb[0].mxu0
  %v681 = vadd.f32 0.0, %v680
  %v682 = vpop.f32.mrb[0].mxu0
  %683 = vmatprep.mubr.f32.mxu0 0.0
  %684 = vmatmul.mubr.f32.gmra.mrb[0].mxu0 %v103
  %v685 = vpop.f32.mrb[0].mxu0
  %v686 = vadd.f32 0.0, %v685
  %v687 = vpop.f32.mrb[0].mxu0
  %688 = vmatprep.mubr.f32.mxu0 0.0
  %689 = vmatmul.mubr.f32.gmra.mrb[0].mxu0 %v104
  %v690 = vpop.f32.mrb[0].mxu0
  %v691 = vadd.f32 0.0, %v690
  %v692 = vpop.f32.mrb[0].mxu0
  %693 = vmatprep.mubr.f32.mxu0 0.0
  %694 = vmatmul.mubr.f32.gmra.mrb[0].mxu0 %v105
  %v695 = vpop.f32.mrb[0].mxu0
  %v696 = vadd.f32 0.0, %v695
  %v697 = vpop.f32.mrb[0].mxu0
  %698 = vmatprep.mubr.f32.mxu0 0.0
  %699 = vmatmul.mubr.f32.gmra.mrb[0].mxu0 %v106
  %v700 = vpop.f32.mrb[0].mxu0
  %v701 = vadd.f32 0.0, %v700
  %v702 = vpop.f32.mrb[0].mxu0
  %703 = vmatprep.mubr.f32.mxu0 0.0
  %704 = vmatmul.mubr.f32.gmra.mrb[0].mxu0 %v107
  %v705 = vpop.f32.mrb[0].mxu0
  %v706 = vadd.f32 0.0, %v705
  %v707 = vpop.f32.mrb[0].mxu0
  %708 = vmatprep.mubr.f32.mxu0 0.0
  %709 = vmatmul.mubr.f32.gmra.mrb[0].mxu0 %v108
  %v710 = vpop.f32.mrb[0].mxu0
  %v711 = vadd.f32 0.0, %v710
  %v712 = vpop.f32.mrb[0].mxu0
  %713 = vmatprep.mubr.f32.mxu0 0.0
  %714 = vmatmul.mubr.f32.gmra.mrb[0].mxu0 %v109
  %v715 = vpop.f32.mrb[0].mxu0
  %v716 = vadd.f32 0.0, %v715
  %v717 = vpop.f32.mrb[0].mxu0
  %718 = vmatprep.mubr.f32.mxu0 0.0
  %719 = vmatmul.mubr.f32.gmra.mrb[0].mxu0 %v110
  %v720 = vpop.f32.mrb[0].mxu0
  %v721 = vadd.f32 0.0, %v720
  %v722 = vpop.f32.mrb[0].mxu0
  %723 = vmatprep.mubr.f32.mxu0 0.0
  %724 = vmatmul.mubr.f32.gmra.mrb[0].mxu0 %v111
  %v725 = vpop.f32.mrb[0].mxu0
  %v726 = vadd.f32 0.0, %v725
  %v727 = vpop.f32.mrb[0].mxu0
  %728 = vmatprep.mubr.f32.mxu0 0.0
  %729 = vmatmul.mubr.f32.gmra.mrb[0].mxu0 %v112
  %v730 = vpop.f32.mrb[0].mxu0
  %v731 = vadd.f32 0.0, %v730
  %v732 = vpop.f32.mrb[0].mxu0
  %733 = vmatprep.mubr.f32.mxu0 0.0
  %734 = vmatmul.mubr.f32.gmra.mrb[0].mxu0 %v113
  %v735 = vpop.f32.mrb[0].mxu0
  %v736 = vadd.f32 0.0, %v735
  %v737 = vpop.f32.mrb[0].mxu0
  %738 = vmatprep.mubr.f32.mxu0 0.0
  %739 = vmatmul.mubr.f32.gmra.mrb[0].mxu0 %v114
  %v740 = vpop.f32.mrb[0].mxu0
  %v741 = vadd.f32 0.0, %v740
  %v742 = vpop.f32.mrb[0].mxu0
  %743 = vmatprep.mubr.f32.mxu0 0.0
  %744 = vmatmul.mubr.f32.gmra.mrb[0].mxu0 %v115
  %v745 = vpop.f32.mrb[0].mxu0
  %v746 = vadd.f32 0.0, %v745
  %v747 = vpop.f32.mrb[0].mxu0
  %748 = vmatprep.mubr.f32.mxu0 0.0
  %749 = vmatmul.mubr.f32.gmra.mrb[0].mxu0 %v116
  %v750 = vpop.f32.mrb[0].mxu0
  %v751 = vadd.f32 0.0, %v750
  %v752 = vpop.f32.mrb[0].mxu0
  %753 = vmatprep.mubr.f32.mxu0 0.0
  %754 = vmatmul.mubr.f32.gmra.mrb[0].mxu0 %v117
  %v755 = vpop.f32.mrb[0].mxu0
  %v756 = vadd.f32 0.0, %v755
  %v757 = vpop.f32.mrb[0].mxu0
  %758 = vmatprep.mubr.f32.mxu0 0.0
  %759 = vmatmul.mubr.f32.gmra.mrb[0].mxu0 %v118
  %v760 = vpop.f32.mrb[0].mxu0
  %v761 = vadd.f32 0.0, %v760
  %v762 = vpop.f32.mrb[0].mxu0
  %763 = vmatprep.mubr.f32.mxu0 0.0
  %764 = vmatmul.mubr.f32.gmra.mrb[0].mxu0 %v119
  %v765 = vpop.f32.mrb[0].mxu0
  %v766 = vadd.f32 0.0, %v765
  %v767 = vpop.f32.mrb[0].mxu0
  %768 = vmatprep.mubr.f32.mxu0 0.0
  %769 = vmatmul.mubr.f32.gmra.mrb[0].mxu0 %v120
  %v770 = vpop.f32.mrb[0].mxu0
  %v771 = vadd.f32 0.0, %v770
  %v772 = vpop.f32.mrb[0].mxu0
  %773 = vmatprep.mubr.f32.mxu0 0.0
  %774 = vmatmul.mubr.f32.gmra.mrb[0].mxu0 %v121
  %v775 = vpop.f32.mrb[0].mxu0
  %v776 = vadd.f32 0.0, %v775
  %v777 = vpop.f32.mrb[0].mxu0
  %778 = vmatprep.mubr.f32.mxu0 0.0
  %779 = vmatmul.mubr.f32.gmra.mrb[0].mxu0 %v122
  %v780 = vpop.f32.mrb[0].mxu0
  %v781 = vadd.f32 0.0, %v780
  %v782 = vpop.f32.mrb[0].mxu0
  %783 = vmatprep.mubr.f32.mxu0 0.0
  %784 = vmatmul.mubr.f32.gmra.mrb[0].mxu0 %v123
  %v785 = vpop.f32.mrb[0].mxu0
  %v786 = vadd.f32 0.0, %v785
  %v787 = vpop.f32.mrb[0].mxu0
  %788 = vmatprep.mubr.f32.mxu0 0.0
  %789 = vmatmul.mubr.f32.gmra.mrb[0].mxu0 %v124
  %v790 = vpop.f32.mrb[0].mxu0
  %v791 = vadd.f32 0.0, %v790
  %v792 = vpop.f32.mrb[0].mxu0
  %793 = vmatprep.mubr.f32.mxu0 0.0
  %794 = vmatmul.mubr.f32.gmra.mrb[0].mxu0 %v125
  %v795 = vpop.f32.mrb[0].mxu0
  %v796 = vadd.f32 0.0, %v795
  %v797 = vpop.f32.mrb[0].mxu0
  %798 = vmatprep.mubr.f32.mxu0 0.0
  %799 = vmatmul.mubr.f32.gmra.mrb[0].mxu0 %v126
  %v800 = vpop.f32.mrb[0].mxu0
  %v801 = vadd.f32 0.0, %v800
  %v802 = vpop.f32.mrb[0].mxu0
  %803 = vmatprep.mubr.f32.mxu0 0.0
  %804 = vmatmul.mubr.f32.gmra.mrb[0].mxu0 %v127
  %v805 = vpop.f32.mrb[0].mxu0
  %v806 = vadd.f32 0.0, %v805
  %v807 = vpop.f32.mrb[0].mxu0
  %808 = vmatprep.mubr.f32.mxu0 0.0
  %809 = vmatmul.mubr.f32.gmra.mrb[0].mxu0 %v128
  %v810 = vpop.f32.mrb[0].mxu0
  %v811 = vadd.f32 0.0, %v810
  %v812 = vpop.f32.mrb[0].mxu0
  %813 = vmatprep.mubr.f32.mxu0 0.0
  %814 = vmatmul.mubr.f32.gmra.mrb[0].mxu0 %v129
  %v815 = vpop.f32.mrb[0].mxu0
  %v816 = vadd.f32 0.0, %v815
  %v817 = vpop.f32.mrb[0].mxu0
  %818 = vmatprep.mubr.f32.mxu0 0.0
  %819 = vmatmul.mubr.f32.gmra.mrb[0].mxu0 %v130
  %v820 = vpop.f32.mrb[0].mxu0
  %v821 = vadd.f32 0.0, %v820
  %v822 = vpop.f32.mrb[0].mxu0
  %823 = vmatprep.mubr.f32.mxu0 0.0
  %824 = vmatmul.mubr.f32.gmra.mrb[0].mxu0 %v131
  %v825 = vpop.f32.mrb[0].mxu0
  %v826 = vadd.f32 0.0, %v825
  %v827 = vpop.f32.mrb[0].mxu0
  %828 = vmatprep.mubr.f32.mxu0 0.0
  %829 = vmatmul.mubr.f32.gmra.mrb[0].mxu0 %v132
  %v830 = vpop.f32.mrb[0].mxu0
  %v831 = vadd.f32 0.0, %v830
  %v832 = vpop.f32.mrb[0].mxu0
  %833 = vmatprep.mubr.f32.mxu0 0.0
  %834 = vmatmul.mubr.f32.gmra.mrb[0].mxu0 %v133
  %v835 = vpop.f32.mrb[0].mxu0
  %v836 = vadd.f32 0.0, %v835
  %v837 = vpop.f32.mrb[0].mxu0
  %838 = vmatprep.mubr.f32.mxu0 0.0
  %839 = vmatmul.mubr.f32.gmra.mrb[0].mxu0 %v134
  %v840 = vpop.f32.mrb[0].mxu0
  %v841 = vadd.f32 0.0, %v840
  %v842 = vpop.f32.mrb[0].mxu0
  %843 = vmatprep.mubr.f32.mxu0 0.0
  %844 = vmatmul.mubr.f32.gmra.mrb[0].mxu0 %v135
  %v845 = vpop.f32.mrb[0].mxu0
  %v846 = vadd.f32 0.0, %v845
  %v847 = vpop.f32.mrb[0].mxu0
  %848 = vmatprep.mubr.f32.mxu0 0.0
  %849 = vmatmul.mubr.f32.gmra.mrb[0].mxu0 %v136
  %v850 = vpop.f32.mrb[0].mxu0
  %v851 = vadd.f32 0.0, %v850
  %v852 = vpop.f32.mrb[0].mxu0
  %853 = vmatprep.mubr.f32.mxu0 0.0
  %854 = vmatmul.mubr.f32.gmra.mrb[0].mxu0 %v137
  %v855 = vpop.f32.mrb[0].mxu0
  %v856 = vadd.f32 0.0, %v855
  %v857 = vpop.f32.mrb[0].mxu0
  %858 = vmatprep.mubr.f32.mxu0 0.0
  %859 = vmatmul.mubr.f32.gmra.mrb[0].mxu0 %v138
  %v860 = vpop.f32.mrb[0].mxu0
  %v861 = vadd.f32 0.0, %v860
  %v862 = vpop.f32.mrb[0].mxu0
  %863 = vmatprep.mubr.f32.mxu0 0.0
  %864 = vmatmul.mubr.f32.gmra.mrb[0].mxu0 %v139
  %v865 = vpop.f32.mrb[0].mxu0
  %v866 = vadd.f32 0.0, %v865
  %v867 = vpop.f32.mrb[0].mxu0
  %868 = vmatprep.mubr.f32.mxu0 0.0
  %869 = vmatmul.mubr.f32.gmra.mrb[0].mxu0 %v140
  %v870 = vpop.f32.mrb[0].mxu0
  %v871 = vadd.f32 0.0, %v870
  %v872 = vpop.f32.mrb[0].mxu0
  %873 = vmatprep.mubr.f32.mxu0 0.0
  %874 = vmatmul.mubr.f32.gmra.mrb[0].mxu0 %v141
  %v875 = vpop.f32.mrb[0].mxu0
  %v876 = vadd.f32 0.0, %v875
  %v877 = vpop.f32.mrb[0].mxu0
  %878 = vmatprep.mubr.f32.mxu0 0.0
  %879 = vmatmul.mubr.f32.gmra.mrb[0].mxu0 %v142
  %v880 = vpop.f32.mrb[0].mxu0
  %v881 = vadd.f32 0.0, %v880
  %v882 = vpop.f32.mrb[0].mxu0
  %883 = vmatprep.mubr.f32.mxu0 0.0
  %884 = vmatmul.mubr.f32.gmra.mrb[0].mxu0 %v143
  %v885 = vpop.f32.mrb[0].mxu0
  %v886 = vadd.f32 0.0, %v885
  %v887 = vpop.f32.mrb[0].mxu0
  %888 = vmatprep.mubr.f32.mxu0 0.0
  %889 = vmatmul.mubr.f32.gmra.mrb[0].mxu0 %v144
  %v890 = vpop.f32.mrb[0].mxu0
  %v891 = vadd.f32 0.0, %v890
  %v892 = vpop.f32.mrb[0].mxu0
  %893 = vmatprep.mubr.f32.mxu0 0.0
  %894 = vmatmul.mubr.f32.gmra.mrb[0].mxu0 %v145
  %v895 = vpop.f32.mrb[0].mxu0
  %v896 = vadd.f32 0.0, %v895
  %v897 = vpop.f32.mrb[0].mxu0
  %898 = vmatprep.mubr.f32.mxu0 0.0
  %899 = vmatmul.mubr.f32.gmra.mrb[0].mxu0 %v146
  %v900 = vpop.f32.mrb[0].mxu0
  %v901 = vadd.f32 0.0, %v900
  %v902 = vpop.f32.mrb[0].mxu0
  %903 = vmatprep.mubr.f32.mxu0 0.0
  %904 = vmatmul.mubr.f32.gmra.mrb[0].mxu0 %v147
  %v905 = vpop.f32.mrb[0].mxu0
  %v906 = vadd.f32 0.0, %v905
  %v907 = vpop.f32.mrb[0].mxu0
  %908 = vmatprep.mubr.f32.mxu0 0.0
  %909 = vmatmul.mubr.f32.gmra.mrb[0].mxu0 %v148
  %v910 = vpop.f32.mrb[0].mxu0
  %v911 = vadd.f32 0.0, %v910
  %v912 = vpop.f32.mrb[0].mxu0
  %913 = vmatprep.mubr.f32.mxu0 0.0
  %914 = vmatmul.mubr.f32.gmra.mrb[0].mxu0 %v149
  %v915 = vpop.f32.mrb[0].mxu0
  %v916 = vadd.f32 0.0, %v915
  %v917 = vpop.f32.mrb[0].mxu0
  %918 = vmatprep.mubr.f32.mxu0 0.0
  %919 = vmatmul.mubr.f32.gmra.mrb[0].mxu0 %v150
  %v920 = vpop.f32.mrb[0].mxu0
  %v921 = vadd.f32 0.0, %v920
  %v922 = vpop.f32.mrb[0].mxu0
  %923 = vmatprep.mubr.f32.mxu0 0.0
  %924 = vmatmul.mubr.f32.gmra.mrb[0].mxu0 %v151
  %v925 = vpop.f32.mrb[0].mxu0
  %v926 = vadd.f32 0.0, %v925
  %v927 = vpop.f32.mrb[0].mxu0
  %928 = vmatprep.mubr.f32.mxu0 0.0
  %929 = vmatmul.mubr.f32.gmra.mrb[0].mxu0 %v152
  %v930 = vpop.f32.mrb[0].mxu0
  %v931 = vadd.f32 0.0, %v930
  %v932 = vpop.f32.mrb[0].mxu0
  %933 = vmatprep.mubr.f32.mxu0 0.0
  %934 = vmatmul.mubr.f32.gmra.mrb[0].mxu0 %v153
  %v935 = vpop.f32.mrb[0].mxu0
  %v936 = vadd.f32 0.0, %v935
  %v937 = vpop.f32.mrb[0].mxu0
  %938 = vmatprep.mubr.f32.mxu0 0.0
  %939 = vmatmul.mubr.f32.gmra.mrb[0].mxu0 %v154
  %v940 = vpop.f32.mrb[0].mxu0
  %v941 = vadd.f32 0.0, %v940
  %v942 = vpop.f32.mrb[0].mxu0
  %943 = vmatprep.mubr.f32.mxu0 0.0
  %944 = vmatmul.mubr.f32.gmra.mrb[0].mxu0 %v155
  %v945 = vpop.f32.mrb[0].mxu0
  %v946 = vadd.f32 0.0, %v945
  %v947 = vpop.f32.mrb[0].mxu0
  %948 = vmatprep.mubr.f32.mxu0 0.0
  %949 = vmatmul.mubr.f32.gmra.mrb[0].mxu0 %v156
  %v950 = vpop.f32.mrb[0].mxu0
  %v951 = vadd.f32 0.0, %v950
  %v952 = vpop.f32.mrb[0].mxu0
  %953 = vmatprep.mubr.f32.mxu0 0.0
  %954 = vmatmul.mubr.f32.gmra.mrb[0].mxu0 %v157
  %v955 = vpop.f32.mrb[0].mxu0
  %v956 = vadd.f32 0.0, %v955
  %v957 = vpop.f32.mrb[0].mxu0
  %958 = vdwg.mxu0
  %v959 = vmax.f32 %v241, %v421
  %v960 = vmax.f32 %v959, %v601
  %v961 = vmax.f32 %v960, %v781
  %v962 = vmax.f32 %v246, %v426
  %v963 = vmax.f32 %v962, %v606
  %v964 = vmax.f32 %v963, %v786
  %v965 = vmax.f32 %v251, %v431
  %v966 = vmax.f32 %v965, %v611
  %v967 = vmax.f32 %v966, %v791
  %v968 = vmax.f32 %v256, %v436
  %v969 = vmax.f32 %v968, %v616
  %v970 = vmax.f32 %v969, %v796
  %v971 = vmax.f32 %v261, %v441
  %v972 = vmax.f32 %v971, %v621
  %v973 = vmax.f32 %v972, %v801
  %v974 = vmax.f32 %v266, %v446
  %v975 = vmax.f32 %v974, %v626
  %v976 = vmax.f32 %v975, %v806
  %v977 = vmax.f32 %v271, %v451
  %v978 = vmax.f32 %v977, %v631
  %v979 = vmax.f32 %v978, %v811
  %v980 = vmax.f32 %v276, %v456
  %v981 = vmax.f32 %v980, %v636
  %v982 = vmax.f32 %v981, %v816
  %v983 = vmax.f32 %v281, %v461
  %v984 = vmax.f32 %v983, %v641
  %v985 = vmax.f32 %v984, %v821
  %v986 = vmax.f32 %v286, %v466
  %v987 = vmax.f32 %v986, %v646
  %v988 = vmax.f32 %v987, %v826
  %v989 = vmax.f32 %v291, %v471
  %v990 = vmax.f32 %v989, %v651
  %v991 = vmax.f32 %v990, %v831
  %v992 = vmax.f32 %v296, %v476
  %v993 = vmax.f32 %v992, %v656
  %v994 = vmax.f32 %v993, %v836
  %v995 = vmax.f32 %v301, %v481
  %v996 = vmax.f32 %v995, %v661
  %v997 = vmax.f32 %v996, %v841
  %v998 = vmax.f32 %v306, %v486
  %v999 = vmax.f32 %v998, %v666
  %v1000 = vmax.f32 %v999, %v846
  %v1001 = vmax.f32 %v311, %v491
  %v1002 = vmax.f32 %v1001, %v671
  %v1003 = vmax.f32 %v1002, %v851
  %v1004 = vmax.f32 %v316, %v496
  %v1005 = vmax.f32 %v1004, %v676
  %v1006 = vmax.f32 %v1005, %v856
  %v1007 = vmax.f32 %v321, %v501
  %v1008 = vmax.f32 %v1007, %v681
  %v1009 = vmax.f32 %v1008, %v861
  %v1010 = vmax.f32 %v326, %v506
  %v1011 = vmax.f32 %v1010, %v686
  %v1012 = vmax.f32 %v1011, %v866
  %v1013 = vmax.f32 %v331, %v511
  %v1014 = vmax.f32 %v1013, %v691
  %v1015 = vmax.f32 %v1014, %v871
  %v1016 = vmax.f32 %v336, %v516
  %v1017 = vmax.f32 %v1016, %v696
  %v1018 = vmax.f32 %v1017, %v876
  %v1019 = vmax.f32 %v341, %v521
  %v1020 = vmax.f32 %v1019, %v701
  %v1021 = vmax.f32 %v1020, %v881
  %v1022 = vmax.f32 %v346, %v526
  %v1023 = vmax.f32 %v1022, %v706
  %v1024 = vmax.f32 %v1023, %v886
  %v1025 = vmax.f32 %v351, %v531
  %v1026 = vmax.f32 %v1025, %v711
  %v1027 = vmax.f32 %v1026, %v891
  %v1028 = vmax.f32 %v356, %v536
  %v1029 = vmax.f32 %v1028, %v716
  %v1030 = vmax.f32 %v1029, %v896
  %v1031 = vmax.f32 %v361, %v541
  %v1032 = vmax.f32 %v1031, %v721
  %v1033 = vmax.f32 %v1032, %v901
  %v1034 = vmax.f32 %v366, %v546
  %v1035 = vmax.f32 %v1034, %v726
  %v1036 = vmax.f32 %v1035, %v906
  %v1037 = vmax.f32 %v371, %v551
  %v1038 = vmax.f32 %v1037, %v731
  %v1039 = vmax.f32 %v1038, %v911
  %v1040 = vmax.f32 %v376, %v556
  %v1041 = vmax.f32 %v1040, %v736
  %v1042 = vmax.f32 %v1041, %v916
  %v1043 = vmax.f32 %v381, %v561
  %v1044 = vmax.f32 %v1043, %v741
  %v1045 = vmax.f32 %v1044, %v921
  %v1046 = vmax.f32 %v386, %v566
  %v1047 = vmax.f32 %v1046, %v746
  %v1048 = vmax.f32 %v1047, %v926
  %v1049 = vmax.f32 %v391, %v571
  %v1050 = vmax.f32 %v1049, %v751
  %v1051 = vmax.f32 %v1050, %v931
  %v1052 = vmax.f32 %v396, %v576
  %v1053 = vmax.f32 %v1052, %v756
  %v1054 = vmax.f32 %v1053, %v936
  %v1055 = vmax.f32 %v401, %v581
  %v1056 = vmax.f32 %v1055, %v761
  %v1057 = vmax.f32 %v1056, %v941
  %v1058 = vmax.f32 %v406, %v586
  %v1059 = vmax.f32 %v1058, %v766
  %v1060 = vmax.f32 %v1059, %v946
  %v1061 = vmax.f32 %v411, %v591
  %v1062 = vmax.f32 %v1061, %v771
  %v1063 = vmax.f32 %v1062, %v951
  %v1064 = vmax.f32 %v416, %v596
  %v1065 = vmax.f32 %v1064, %v776
  %v1066 = vmax.f32 %v1065, %v956
  %v1067 = vld [vmem:[%s2] sm:$0x1]
  %v1069 = vlaneseq
  %v1070 = vshrl.u32 %v1069, 7
  %v1071 = vsub.s32 0, %v1070
  %v1072 = vrot.slane %v1067, %v1071
  %v1074 = vadd.f32 %v961, %v1072
  %v1075 = vadd.f32 %v964, %v1072
  %v1076 = vadd.f32 %v967, %v1072
  %v1077 = vadd.f32 %v970, %v1072
  %v1078 = vadd.f32 %v973, %v1072
  %v1079 = vadd.f32 %v976, %v1072
  %v1080 = vadd.f32 %v979, %v1072
  %v1081 = vadd.f32 %v982, %v1072
  %v1082 = vadd.f32 %v985, %v1072
  %v1083 = vadd.f32 %v988, %v1072
  %v1084 = vadd.f32 %v991, %v1072
  %v1085 = vadd.f32 %v994, %v1072
  %v1086 = vadd.f32 %v997, %v1072
  %v1087 = vadd.f32 %v1000, %v1072
  %v1088 = vadd.f32 %v1003, %v1072
  %v1089 = vadd.f32 %v1006, %v1072
  %v1090 = vadd.f32 %v1009, %v1072
  %v1091 = vadd.f32 %v1012, %v1072
  %v1092 = vadd.f32 %v1015, %v1072
  %v1093 = vadd.f32 %v1018, %v1072
  %v1094 = vadd.f32 %v1021, %v1072
  %v1095 = vadd.f32 %v1024, %v1072
  %v1096 = vadd.f32 %v1027, %v1072
  %v1097 = vadd.f32 %v1030, %v1072
  %v1098 = vadd.f32 %v1033, %v1072
  %v1099 = vadd.f32 %v1036, %v1072
  %v1100 = vadd.f32 %v1039, %v1072
  %v1101 = vadd.f32 %v1042, %v1072
  %v1102 = vadd.f32 %v1045, %v1072
  %v1103 = vadd.f32 %v1048, %v1072
  %v1104 = vadd.f32 %v1051, %v1072
  %v1105 = vadd.f32 %v1054, %v1072
  %v1106 = vadd.f32 %v1057, %v1072
  %v1107 = vadd.f32 %v1060, %v1072
  %v1108 = vadd.f32 %v1063, %v1072
  %v1109 = vadd.f32 %v1066, %v1072
  %v1110 = vmax.f32 %v1074, 0.0
  %v1111 = vmax.f32 %v1075, 0.0
  %v1112 = vmax.f32 %v1076, 0.0
  %v1113 = vmax.f32 %v1077, 0.0
  %v1114 = vmax.f32 %v1078, 0.0
  %v1115 = vmax.f32 %v1079, 0.0
  %v1116 = vmax.f32 %v1080, 0.0
  %v1117 = vmax.f32 %v1081, 0.0
  %v1118 = vmax.f32 %v1082, 0.0
  %v1119 = vmax.f32 %v1083, 0.0
  %v1120 = vmax.f32 %v1084, 0.0
  %v1121 = vmax.f32 %v1085, 0.0
  %v1122 = vmax.f32 %v1086, 0.0
  %v1123 = vmax.f32 %v1087, 0.0
  %v1124 = vmax.f32 %v1088, 0.0
  %v1125 = vmax.f32 %v1089, 0.0
  %v1126 = vmax.f32 %v1090, 0.0
  %v1127 = vmax.f32 %v1091, 0.0
  %v1128 = vmax.f32 %v1092, 0.0
  %v1129 = vmax.f32 %v1093, 0.0
  %v1130 = vmax.f32 %v1094, 0.0
  %v1131 = vmax.f32 %v1095, 0.0
  %v1132 = vmax.f32 %v1096, 0.0
  %v1133 = vmax.f32 %v1097, 0.0
  %v1134 = vmax.f32 %v1098, 0.0
  %v1135 = vmax.f32 %v1099, 0.0
  %v1136 = vmax.f32 %v1100, 0.0
  %v1137 = vmax.f32 %v1101, 0.0
  %v1138 = vmax.f32 %v1102, 0.0
  %v1139 = vmax.f32 %v1103, 0.0
  %v1140 = vmax.f32 %v1104, 0.0
  %v1141 = vmax.f32 %v1105, 0.0
  %v1142 = vmax.f32 %v1106, 0.0
  %v1143 = vmax.f32 %v1107, 0.0
  %v1144 = vmax.f32 %v1108, 0.0
  %v1145 = vmax.f32 %v1109, 0.0
  %1146 = vst [vmem:[%s3] sm:$0xff] %v1110
  %1147 = vst [vmem:[%s3 + $0x8] sm:$0xff] %v1111
  %1148 = vst [vmem:[%s3 + $0x10] sm:$0xff] %v1112
  %1149 = vst [vmem:[%s3 + $0x18] sm:$0xff] %v1113
  %1150 = vst [vmem:[%s3 + $0x20] sm:$0xff] %v1114
  %1151 = vst [vmem:[%s3 + $0x28] sm:$0xff] %v1115
  %1152 = vst [vmem:[%s3 + $0x30] sm:$0xff] %v1116
  %1153 = vst [vmem:[%s3 + $0x38] sm:$0xff] %v1117
  %1154 = vst [vmem:[%s3 + $0x40] sm:$0xff] %v1118
  %1155 = vst [vmem:[%s3 + $0x48] sm:$0xff] %v1119
  %1156 = vst [vmem:[%s3 + $0x50] sm:$0xff] %v1120
  %1157 = vst [vmem:[%s3 + $0x58] sm:$0xff] %v1121
  %1158 = vst [vmem:[%s3 + $0x60] sm:$0xff] %v1122
  %1159 = vst [vmem:[%s3 + $0x68] sm:$0xff] %v1123
  %1160 = vst [vmem:[%s3 + $0x70] sm:$0xff] %v1124
  %1161 = vst [vmem:[%s3 + $0x78] sm:$0xff] %v1125
  %1162 = vst [vmem:[%s3 + $0x80] sm:$0xff] %v1126
  %1163 = vst [vmem:[%s3 + $0x88] sm:$0xff] %v1127
  %1164 = vst [vmem:[%s3 + $0x90] sm:$0xff] %v1128
  %1165 = vst [vmem:[%s3 + $0x98] sm:$0xff] %v1129
  %1166 = vst [vmem:[%s3 + $0xa0] sm:$0xff] %v1130
  %1167 = vst [vmem:[%s3 + $0xa8] sm:$0xff] %v1131
  %1168 = vst [vmem:[%s3 + $0xb0] sm:$0xff] %v1132
  %1169 = vst [vmem:[%s3 + $0xb8] sm:$0xff] %v1133
  %1170 = vst [vmem:[%s3 + $0xc0] sm:$0xff] %v1134
  %1171 = vst [vmem:[%s3 + $0xc8] sm:$0xff] %v1135
  %1172 = vst [vmem:[%s3 + $0xd0] sm:$0xff] %v1136
  %1173 = vst [vmem:[%s3 + $0xd8] sm:$0xff] %v1137
  %1174 = vst [vmem:[%s3 + $0xe0] sm:$0xff] %v1138
  %1175 = vst [vmem:[%s3 + $0xe8] sm:$0xff] %v1139
  %1176 = vst [vmem:[%s3 + $0xf0] sm:$0xff] %v1140
  %1177 = vst [vmem:[%s3 + $0xf8] sm:$0xff] %v1141
  %1178 = vst [vmem:[%s3 + $0x100] sm:$0xff] %v1142
  %1179 = vst [vmem:[%s3 + $0x108] sm:$0xff] %v1143
  %1180 = vst [vmem:[%s3 + $0x110] sm:$0xff] %v1144
  %1181 = vst [vmem:[%s3 + $0x118] sm:$0xff] %v1145
  // Predicated region
  $region14: #{lenet_encoder_forward.3} parent=0 // pred_check
    _
  $region15: #{lenet_encoder_forward.3} parent=0 // pred_check_branch
    %1183 = sbr.rel (0) target = $region17
  $region16: #{lenet_encoder_forward.3} parent=0 // pred_region
    _
  $region17: #{lenet_encoder_forward.3} parent=0 // pred_fallthru
    _
  // Predicated region
  $region18: #{lenet_encoder_forward.3} parent=0 // pred_check
    _
  $region19: #{lenet_encoder_forward.3} parent=0 // pred_check_branch
    %1185 = sbr.rel (0) target = $region21
  $region20: #{lenet_encoder_forward.3} parent=0 // pred_region
    _
  $region21: #{lenet_encoder_forward.3} parent=0 // pred_fallthru
    _

// kernel: lenet_encoder_forward.4
$region0: #{lenet_encoder_forward.4}
  #allocation0 [shape = 'u32[]', space=smem, size = 0x4, offset = 0x4, fixed_abs, tag = 'smem constant byte address 0x4 - core index']
  #allocation1 [shape = 'u32[144,128]{1,0:T(1,128)}', space=vmem, size = 0x12000, scoped, tag = 'internal scratch']
  %s0 = inlined_call_operand.vmem [shape: f32[4,32,512], index: 0, kind: input, shape index: {}]
  %s1 = inlined_call_operand.vmem [shape: f32[512,128], index: 1, kind: input, shape index: {}]
  %s2 = inlined_call_operand.vmem [shape: f32[1,128], index: 2, kind: input, shape index: {}]
  %s3 = inlined_call_operand.vmem [shape: f32[32,128], index: 3, kind: output, shape index: {}]
  %s4 = sld [smem:[#allocation0]]
  $region22: #{lenet_encoder_forward.4} parent=0
    _
  %s6 = ssub.s32 1, %s4
  %s7 = scalar_select 0, %s6, %s4
  // Predicated region
  $region2: #{lenet_encoder_forward.4} parent=0 // pred_check
    _
  $region3: #{lenet_encoder_forward.4} parent=0 // pred_check_branch
    %9 = sbr.rel (0) target = $region5
  $region4: #{lenet_encoder_forward.4} parent=0 // pred_region
    _
  $region5: #{lenet_encoder_forward.4} parent=0 // pred_fallthru
    _
  // Predicated region
  $region6: #{lenet_encoder_forward.4} parent=0 // pred_check
    _
  $region7: #{lenet_encoder_forward.4} parent=0 // pred_check_branch
    %11 = sbr.rel (0) target = $region9
  $region8: #{lenet_encoder_forward.4} parent=0 // pred_region
    _
  $region9: #{lenet_encoder_forward.4} parent=0 // pred_fallthru
    _
  // Predicated region
  $region10: #{lenet_encoder_forward.4} parent=0 // pred_check
    _
  $region11: #{lenet_encoder_forward.4} parent=0 // pred_check_branch
    %13 = sbr.rel (0) target = $region13
  $region12: #{lenet_encoder_forward.4} parent=0 // pred_region
    _
  $region13: #{lenet_encoder_forward.4} parent=0 // pred_fallthru
    _
  %v14 = vld [vmem:[%s0] sm:$0xff]
  %v15 = vld [vmem:[%s0 + $0x8] sm:$0xff]
  %v16 = vld [vmem:[%s0 + $0x10] sm:$0xff]
  %v17 = vld [vmem:[%s0 + $0x18] sm:$0xff]
  %v18 = vld [vmem:[%s0 + $0x20] sm:$0xff]
  %v19 = vld [vmem:[%s0 + $0x28] sm:$0xff]
  %v20 = vld [vmem:[%s0 + $0x30] sm:$0xff]
  %v21 = vld [vmem:[%s0 + $0x38] sm:$0xff]
  %v22 = vld [vmem:[%s0 + $0x40] sm:$0xff]
  %v23 = vld [vmem:[%s0 + $0x48] sm:$0xff]
  %v24 = vld [vmem:[%s0 + $0x50] sm:$0xff]
  %v25 = vld [vmem:[%s0 + $0x58] sm:$0xff]
  %v26 = vld [vmem:[%s0 + $0x60] sm:$0xff]
  %v27 = vld [vmem:[%s0 + $0x68] sm:$0xff]
  %v28 = vld [vmem:[%s0 + $0x70] sm:$0xff]
  %v29 = vld [vmem:[%s0 + $0x78] sm:$0xff]
  %v30 = vld [vmem:[%s0 + $0x80] sm:$0xff]
  %v31 = vld [vmem:[%s0 + $0x88] sm:$0xff]
  %v32 = vld [vmem:[%s0 + $0x90] sm:$0xff]
  %v33 = vld [vmem:[%s0 + $0x98] sm:$0xff]
  %v34 = vld [vmem:[%s0 + $0xa0] sm:$0xff]
  %v35 = vld [vmem:[%s0 + $0xa8] sm:$0xff]
  %v36 = vld [vmem:[%s0 + $0xb0] sm:$0xff]
  %v37 = vld [vmem:[%s0 + $0xb8] sm:$0xff]
  %v38 = vld [vmem:[%s0 + $0xc0] sm:$0xff]
  %v39 = vld [vmem:[%s0 + $0xc8] sm:$0xff]
  %v40 = vld [vmem:[%s0 + $0xd0] sm:$0xff]
  %v41 = vld [vmem:[%s0 + $0xd8] sm:$0xff]
  %v42 = vld [vmem:[%s0 + $0xe0] sm:$0xff]
  %v43 = vld [vmem:[%s0 + $0xe8] sm:$0xff]
  %v44 = vld [vmem:[%s0 + $0xf0] sm:$0xff]
  %v45 = vld [vmem:[%s0 + $0xf8] sm:$0xff]
  %v46 = vld [vmem:[%s0 + $0x100] sm:$0xff]
  %v47 = vld [vmem:[%s0 + $0x108] sm:$0xff]
  %v48 = vld [vmem:[%s0 + $0x110] sm:$0xff]
  %v49 = vld [vmem:[%s0 + $0x118] sm:$0xff]
  %v50 = vld [vmem:[%s0 + $0x120] sm:$0xff]
  %v51 = vld [vmem:[%s0 + $0x128] sm:$0xff]
  %v52 = vld [vmem:[%s0 + $0x130] sm:$0xff]
  %v53 = vld [vmem:[%s0 + $0x138] sm:$0xff]
  %v54 = vld [vmem:[%s0 + $0x140] sm:$0xff]
  %v55 = vld [vmem:[%s0 + $0x148] sm:$0xff]
  %v56 = vld [vmem:[%s0 + $0x150] sm:$0xff]
  %v57 = vld [vmem:[%s0 + $0x158] sm:$0xff]
  %v58 = vld [vmem:[%s0 + $0x160] sm:$0xff]
  %v59 = vld [vmem:[%s0 + $0x168] sm:$0xff]
  %v60 = vld [vmem:[%s0 + $0x170] sm:$0xff]
  %v61 = vld [vmem:[%s0 + $0x178] sm:$0xff]
  %v62 = vld [vmem:[%s0 + $0x180] sm:$0xff]
  %v63 = vld [vmem:[%s0 + $0x188] sm:$0xff]
  %v64 = vld [vmem:[%s0 + $0x190] sm:$0xff]
  %v65 = vld [vmem:[%s0 + $0x198] sm:$0xff]
  %v66 = vld [vmem:[%s0 + $0x1a0] sm:$0xff]
  %v67 = vld [vmem:[%s0 + $0x1a8] sm:$0xff]
  %v68 = vld [vmem:[%s0 + $0x1b0] sm:$0xff]
  %v69 = vld [vmem:[%s0 + $0x1b8] sm:$0xff]
  %v70 = vld [vmem:[%s0 + $0x1c0] sm:$0xff]
  %v71 = vld [vmem:[%s0 + $0x1c8] sm:$0xff]
  %v72 = vld [vmem:[%s0 + $0x1d0] sm:$0xff]
  %v73 = vld [vmem:[%s0 + $0x1d8] sm:$0xff]
  %v74 = vld [vmem:[%s0 + $0x1e0] sm:$0xff]
  %v75 = vld [vmem:[%s0 + $0x1e8] sm:$0xff]
  %v76 = vld [vmem:[%s0 + $0x1f0] sm:$0xff]
  %v77 = vld [vmem:[%s0 + $0x1f8] sm:$0xff]
  %v78 = vld [vmem:[%s1] sm:$0xff]
  %v79 = vld [vmem:[%s1 + $0x8] sm:$0xff]
  %v80 = vld [vmem:[%s1 + $0x10] sm:$0xff]
  %v81 = vld [vmem:[%s1 + $0x18] sm:$0xff]
  %v82 = vld [vmem:[%s1 + $0x20] sm:$0xff]
  %v83 = vld [vmem:[%s1 + $0x28] sm:$0xff]
  %v84 = vld [vmem:[%s1 + $0x30] sm:$0xff]
  %v85 = vld [vmem:[%s1 + $0x38] sm:$0xff]
  %v86 = vld [vmem:[%s1 + $0x40] sm:$0xff]
  %v87 = vld [vmem:[%s1 + $0x48] sm:$0xff]
  %v88 = vld [vmem:[%s1 + $0x50] sm:$0xff]
  %v89 = vld [vmem:[%s1 + $0x58] sm:$0xff]
  %v90 = vld [vmem:[%s1 + $0x60] sm:$0xff]
  %v91 = vld [vmem:[%s1 + $0x68] sm:$0xff]
  %v92 = vld [vmem:[%s1 + $0x70] sm:$0xff]
  %v93 = vld [vmem:[%s1 + $0x78] sm:$0xff]
  %v94 = vld [vmem:[%s1 + $0x80] sm:$0xff]
  %v95 = vld [vmem:[%s1 + $0x88] sm:$0xff]
  %v96 = vld [vmem:[%s1 + $0x90] sm:$0xff]
  %v97 = vld [vmem:[%s1 + $0x98] sm:$0xff]
  %v98 = vld [vmem:[%s1 + $0xa0] sm:$0xff]
  %v99 = vld [vmem:[%s1 + $0xa8] sm:$0xff]
  %v100 = vld [vmem:[%s1 + $0xb0] sm:$0xff]
  %v101 = vld [vmem:[%s1 + $0xb8] sm:$0xff]
  %v102 = vld [vmem:[%s1 + $0xc0] sm:$0xff]
  %v103 = vld [vmem:[%s1 + $0xc8] sm:$0xff]
  %v104 = vld [vmem:[%s1 + $0xd0] sm:$0xff]
  %v105 = vld [vmem:[%s1 + $0xd8] sm:$0xff]
  %v106 = vld [vmem:[%s1 + $0xe0] sm:$0xff]
  %v107 = vld [vmem:[%s1 + $0xe8] sm:$0xff]
  %v108 = vld [vmem:[%s1 + $0xf0] sm:$0xff]
  %v109 = vld [vmem:[%s1 + $0xf8] sm:$0xff]
  %v110 = vld [vmem:[%s1 + $0x100] sm:$0xff]
  %v111 = vld [vmem:[%s1 + $0x108] sm:$0xff]
  %v112 = vld [vmem:[%s1 + $0x110] sm:$0xff]
  %v113 = vld [vmem:[%s1 + $0x118] sm:$0xff]
  %v114 = vld [vmem:[%s1 + $0x120] sm:$0xff]
  %v115 = vld [vmem:[%s1 + $0x128] sm:$0xff]
  %v116 = vld [vmem:[%s1 + $0x130] sm:$0xff]
  %v117 = vld [vmem:[%s1 + $0x138] sm:$0xff]
  %v118 = vld [vmem:[%s1 + $0x140] sm:$0xff]
  %v119 = vld [vmem:[%s1 + $0x148] sm:$0xff]
  %v120 = vld [vmem:[%s1 + $0x150] sm:$0xff]
  %v121 = vld [vmem:[%s1 + $0x158] sm:$0xff]
  %v122 = vld [vmem:[%s1 + $0x160] sm:$0xff]
  %v123 = vld [vmem:[%s1 + $0x168] sm:$0xff]
  %v124 = vld [vmem:[%s1 + $0x170] sm:$0xff]
  %v125 = vld [vmem:[%s1 + $0x178] sm:$0xff]
  %v126 = vld [vmem:[%s1 + $0x180] sm:$0xff]
  %v127 = vld [vmem:[%s1 + $0x188] sm:$0xff]
  %v128 = vld [vmem:[%s1 + $0x190] sm:$0xff]
  %v129 = vld [vmem:[%s1 + $0x198] sm:$0xff]
  %v130 = vld [vmem:[%s1 + $0x1a0] sm:$0xff]
  %v131 = vld [vmem:[%s1 + $0x1a8] sm:$0xff]
  %v132 = vld [vmem:[%s1 + $0x1b0] sm:$0xff]
  %v133 = vld [vmem:[%s1 + $0x1b8] sm:$0xff]
  %v134 = vld [vmem:[%s1 + $0x1c0] sm:$0xff]
  %v135 = vld [vmem:[%s1 + $0x1c8] sm:$0xff]
  %v136 = vld [vmem:[%s1 + $0x1d0] sm:$0xff]
  %v137 = vld [vmem:[%s1 + $0x1d8] sm:$0xff]
  %v138 = vld [vmem:[%s1 + $0x1e0] sm:$0xff]
  %v139 = vld [vmem:[%s1 + $0x1e8] sm:$0xff]
  %v140 = vld [vmem:[%s1 + $0x1f0] sm:$0xff]
  %v141 = vld [vmem:[%s1 + $0x1f8] sm:$0xff]
  %142 = vmatprep.subr.mxu0 0.0
  %143 = vmatpush1.msra.mxu0 %v78
  %144 = vmatprep.subr.mxu0 0.0
  %145 = vmatpush1.msra.mxu0 %v79
  %146 = vmatprep.subr.mxu0 0.0
  %147 = vmatpush1.msra.mxu0 %v80
  %148 = vmatprep.subr.mxu0 0.0
  %149 = vmatpush1.msra.mxu0 %v81
  %150 = vmatprep.subr.mxu0 0.0
  %151 = vmatpush1.msra.mxu0 %v82
  %152 = vmatprep.subr.mxu0 0.0
  %153 = vmatpush1.msra.mxu0 %v83
  %154 = vmatprep.subr.mxu0 0.0
  %155 = vmatpush1.msra.mxu0 %v84
  %156 = vmatprep.subr.mxu0 0.0
  %157 = vmatpush1.msra.mxu0 %v85
  %158 = vmatprep.subr.mxu0 0.0
  %159 = vmatpush1.msra.mxu0 %v86
  %160 = vmatprep.subr.mxu0 0.0
  %161 = vmatpush1.msra.mxu0 %v87
  %162 = vmatprep.subr.mxu0 0.0
  %163 = vmatpush1.msra.mxu0 %v88
  %164 = vmatprep.subr.mxu0 0.0
  %165 = vmatpush1.msra.mxu0 %v89
  %166 = vmatprep.subr.mxu0 0.0
  %167 = vmatpush1.msra.mxu0 %v90
  %168 = vmatprep.subr.mxu0 0.0
  %169 = vmatpush1.msra.mxu0 %v91
  %170 = vmatprep.subr.mxu0 0.0
  %171 = vmatpush1.msra.mxu0 %v92
  %172 = vmatprep.subr.mxu0 0.0
  %173 = vmatpush1.msra.mxu0 %v93
  %174 = vmatprep.subr.mxu0 0.0
  %175 = vmatpush1.msra.mxu0 %v94
  %176 = vmatprep.subr.mxu0 0.0
  %177 = vmatpush1.msra.mxu0 %v95
  %178 = vmatprep.subr.mxu0 0.0
  %179 = vmatpush1.msra.mxu0 %v96
  %180 = vmatprep.subr.mxu0 0.0
  %181 = vmatpush1.msra.mxu0 %v97
  %182 = vmatprep.subr.mxu0 0.0
  %183 = vmatpush1.msra.mxu0 %v98
  %184 = vmatprep.subr.mxu0 0.0
  %185 = vmatpush1.msra.mxu0 %v99
  %186 = vmatprep.subr.mxu0 0.0
  %187 = vmatpush1.msra.mxu0 %v100
  %188 = vmatprep.subr.mxu0 0.0
  %189 = vmatpush1.msra.mxu0 %v101
  %190 = vmatprep.subr.mxu0 0.0
  %191 = vmatpush1.msra.mxu0 %v102
  %192 = vmatprep.subr.mxu0 0.0
  %193 = vmatpush1.msra.mxu0 %v103
  %194 = vmatprep.subr.mxu0 0.0
  %195 = vmatpush1.msra.mxu0 %v104
  %196 = vmatprep.subr.mxu0 0.0
  %197 = vmatpush1.msra.mxu0 %v105
  %198 = vmatprep.subr.mxu0 0.0
  %199 = vmatpush1.msra.mxu0 %v106
  %200 = vmatprep.subr.mxu0 0.0
  %201 = vmatpush1.msra.mxu0 %v107
  %202 = vmatprep.subr.mxu0 0.0
  %203 = vmatpush1.msra.mxu0 %v108
  %204 = vmatprep.subr.mxu0 0.0
  %205 = vmatpush1.msra.mxu0 %v109
  %206 = vmatprep.mubr.f32.mxu0 %v15
  %207 = vmatmul.mubr.f32.gmra.mrb[0].mxu0 %v14
  %v208 = vpop.f32.mrb[0].mxu0
  %v209 = vadd.f32 0.0, %v208
  %v210 = vpop.f32.mrb[0].mxu0
  %211 = vmatprep.mubr.f32.mxu0 %v19
  %212 = vmatmul.mubr.f32.gmra.mrb[0].mxu0 %v18
  %v213 = vpop.f32.mrb[0].mxu0
  %v214 = vadd.f32 0.0, %v213
  %v215 = vpop.f32.mrb[0].mxu0
  %216 = vmatprep.mubr.f32.mxu0 %v23
  %217 = vmatmul.mubr.f32.gmra.mrb[0].mxu0 %v22
  %v218 = vpop.f32.mrb[0].mxu0
  %v219 = vadd.f32 0.0, %v218
  %v220 = vpop.f32.mrb[0].mxu0
  %221 = vmatprep.mubr.f32.mxu0 %v27
  %222 = vmatmul.mubr.f32.gmra.mrb[0].mxu0 %v26
  %v223 = vpop.f32.mrb[0].mxu0
  %v224 = vadd.f32 0.0, %v223
  %v225 = vpop.f32.mrb[0].mxu0
  %226 = vmatprep.mubr.f32.mxu0 %v31
  %227 = vmatmul.mubr.f32.gmra.mrb[0].mxu0 %v30
  %v228 = vpop.f32.mrb[0].mxu0
  %v229 = vadd.f32 0.0, %v228
  %v230 = vpop.f32.mrb[0].mxu0
  %231 = vmatprep.mubr.f32.mxu0 %v35
  %232 = vmatmul.mubr.f32.gmra.mrb[0].mxu0 %v34
  %v233 = vpop.f32.mrb[0].mxu0
  %v234 = vadd.f32 0.0, %v233
  %v235 = vpop.f32.mrb[0].mxu0
  %236 = vmatprep.mubr.f32.mxu0 %v39
  %237 = vmatmul.mubr.f32.gmra.mrb[0].mxu0 %v38
  %v238 = vpop.f32.mrb[0].mxu0
  %v239 = vadd.f32 0.0, %v238
  %v240 = vpop.f32.mrb[0].mxu0
  %241 = vmatprep.mubr.f32.mxu0 %v43
  %242 = vmatmul.mubr.f32.gmra.mrb[0].mxu0 %v42
  %v243 = vpop.f32.mrb[0].mxu0
  %v244 = vadd.f32 0.0, %v243
  %v245 = vpop.f32.mrb[0].mxu0
  %246 = vmatprep.mubr.f32.mxu0 %v47
  %247 = vmatmul.mubr.f32.gmra.mrb[0].mxu0 %v46
  %v248 = vpop.f32.mrb[0].mxu0
  %v249 = vadd.f32 0.0, %v248
  %v250 = vpop.f32.mrb[0].mxu0
  %251 = vmatprep.mubr.f32.mxu0 %v51
  %252 = vmatmul.mubr.f32.gmra.mrb[0].mxu0 %v50
  %v253 = vpop.f32.mrb[0].mxu0
  %v254 = vadd.f32 0.0, %v253
  %v255 = vpop.f32.mrb[0].mxu0
  %256 = vmatprep.mubr.f32.mxu0 %v55
  %257 = vmatmul.mubr.f32.gmra.mrb[0].mxu0 %v54
  %v258 = vpop.f32.mrb[0].mxu0
  %v259 = vadd.f32 0.0, %v258
  %v260 = vpop.f32.mrb[0].mxu0
  %261 = vmatprep.mubr.f32.mxu0 %v59
  %262 = vmatmul.mubr.f32.gmra.mrb[0].mxu0 %v58
  %v263 = vpop.f32.mrb[0].mxu0
  %v264 = vadd.f32 0.0, %v263
  %v265 = vpop.f32.mrb[0].mxu0
  %266 = vmatprep.mubr.f32.mxu0 %v63
  %267 = vmatmul.mubr.f32.gmra.mrb[0].mxu0 %v62
  %v268 = vpop.f32.mrb[0].mxu0
  %v269 = vadd.f32 0.0, %v268
  %v270 = vpop.f32.mrb[0].mxu0
  %271 = vmatprep.mubr.f32.mxu0 %v67
  %272 = vmatmul.mubr.f32.gmra.mrb[0].mxu0 %v66
  %v273 = vpop.f32.mrb[0].mxu0
  %v274 = vadd.f32 0.0, %v273
  %v275 = vpop.f32.mrb[0].mxu0
  %276 = vmatprep.mubr.f32.mxu0 %v71
  %277 = vmatmul.mubr.f32.gmra.mrb[0].mxu0 %v70
  %v278 = vpop.f32.mrb[0].mxu0
  %v279 = vadd.f32 0.0, %v278
  %v280 = vpop.f32.mrb[0].mxu0
  %281 = vmatprep.mubr.f32.mxu0 %v75
  %282 = vmatmul.mubr.f32.gmra.mrb[0].mxu0 %v74
  %v283 = vpop.f32.mrb[0].mxu0
  %v284 = vadd.f32 0.0, %v283
  %v285 = vpop.f32.mrb[0].mxu0
  %286 = vdwg.mxu0
  %287 = vmatprep.subr.mxu0 0.0
  %288 = vmatpush1.msra.mxu0 %v110
  %289 = vmatprep.subr.mxu0 0.0
  %290 = vmatpush1.msra.mxu0 %v111
  %291 = vmatprep.subr.mxu0 0.0
  %292 = vmatpush1.msra.mxu0 %v112
  %293 = vmatprep.subr.mxu0 0.0
  %294 = vmatpush1.msra.mxu0 %v113
  %295 = vmatprep.subr.mxu0 0.0
  %296 = vmatpush1.msra.mxu0 %v114
  %297 = vmatprep.subr.mxu0 0.0
  %298 = vmatpush1.msra.mxu0 %v115
  %299 = vmatprep.subr.mxu0 0.0
  %300 = vmatpush1.msra.mxu0 %v116
  %301 = vmatprep.subr.mxu0 0.0
  %302 = vmatpush1.msra.mxu0 %v117
  %303 = vmatprep.subr.mxu0 0.0
  %304 = vmatpush1.msra.mxu0 %v118
  %305 = vmatprep.subr.mxu0 0.0
  %306 = vmatpush1.msra.mxu0 %v119
  %307 = vmatprep.subr.mxu0 0.0
  %308 = vmatpush1.msra.mxu0 %v120
  %309 = vmatprep.subr.mxu0 0.0
  %310 = vmatpush1.msra.mxu0 %v121
  %311 = vmatprep.subr.mxu0 0.0
  %312 = vmatpush1.msra.mxu0 %v122
  %313 = vmatprep.subr.mxu0 0.0
  %314 = vmatpush1.msra.mxu0 %v123
  %315 = vmatprep.subr.mxu0 0.0
  %316 = vmatpush1.msra.mxu0 %v124
  %317 = vmatprep.subr.mxu0 0.0
  %318 = vmatpush1.msra.mxu0 %v125
  %319 = vmatprep.subr.mxu0 0.0
  %320 = vmatpush1.msra.mxu0 %v126
  %321 = vmatprep.subr.mxu0 0.0
  %322 = vmatpush1.msra.mxu0 %v127
  %323 = vmatprep.subr.mxu0 0.0
  %324 = vmatpush1.msra.mxu0 %v128
  %325 = vmatprep.subr.mxu0 0.0
  %326 = vmatpush1.msra.mxu0 %v129
  %327 = vmatprep.subr.mxu0 0.0
  %328 = vmatpush1.msra.mxu0 %v130
  %329 = vmatprep.subr.mxu0 0.0
  %330 = vmatpush1.msra.mxu0 %v131
  %331 = vmatprep.subr.mxu0 0.0
  %332 = vmatpush1.msra.mxu0 %v132
  %333 = vmatprep.subr.mxu0 0.0
  %334 = vmatpush1.msra.mxu0 %v133
  %335 = vmatprep.subr.mxu0 0.0
  %336 = vmatpush1.msra.mxu0 %v134
  %337 = vmatprep.subr.mxu0 0.0
  %338 = vmatpush1.msra.mxu0 %v135
  %339 = vmatprep.subr.mxu0 0.0
  %340 = vmatpush1.msra.mxu0 %v136
  %341 = vmatprep.subr.mxu0 0.0
  %342 = vmatpush1.msra.mxu0 %v137
  %343 = vmatprep.subr.mxu0 0.0
  %344 = vmatpush1.msra.mxu0 %v138
  %345 = vmatprep.subr.mxu0 0.0
  %346 = vmatpush1.msra.mxu0 %v139
  %347 = vmatprep.subr.mxu0 0.0
  %348 = vmatpush1.msra.mxu0 %v140
  %349 = vmatprep.subr.mxu0 0.0
  %350 = vmatpush1.msra.mxu0 %v141
  %351 = vmatprep.mubr.f32.mxu0 %v17
  %352 = vmatmul.mubr.f32.gmra.mrb[0].mxu0 %v16
  %v353 = vpop.f32.mrb[0].mxu0
  %v354 = vadd.f32 %v209, %v353
  %v355 = vpop.f32.mrb[0].mxu0
  %356 = vmatprep.mubr.f32.mxu0 %v21
  %357 = vmatmul.mubr.f32.gmra.mrb[0].mxu0 %v20
  %v358 = vpop.f32.mrb[0].mxu0
  %v359 = vadd.f32 %v214, %v358
  %v360 = vpop.f32.mrb[0].mxu0
  %361 = vmatprep.mubr.f32.mxu0 %v25
  %362 = vmatmul.mubr.f32.gmra.mrb[0].mxu0 %v24
  %v363 = vpop.f32.mrb[0].mxu0
  %v364 = vadd.f32 %v219, %v363
  %v365 = vpop.f32.mrb[0].mxu0
  %366 = vmatprep.mubr.f32.mxu0 %v29
  %367 = vmatmul.mubr.f32.gmra.mrb[0].mxu0 %v28
  %v368 = vpop.f32.mrb[0].mxu0
  %v369 = vadd.f32 %v224, %v368
  %v370 = vpop.f32.mrb[0].mxu0
  %371 = vmatprep.mubr.f32.mxu0 %v33
  %372 = vmatmul.mubr.f32.gmra.mrb[0].mxu0 %v32
  %v373 = vpop.f32.mrb[0].mxu0
  %v374 = vadd.f32 %v229, %v373
  %v375 = vpop.f32.mrb[0].mxu0
  %376 = vmatprep.mubr.f32.mxu0 %v37
  %377 = vmatmul.mubr.f32.gmra.mrb[0].mxu0 %v36
  %v378 = vpop.f32.mrb[0].mxu0
  %v379 = vadd.f32 %v234, %v378
  %v380 = vpop.f32.mrb[0].mxu0
  %381 = vmatprep.mubr.f32.mxu0 %v41
  %382 = vmatmul.mubr.f32.gmra.mrb[0].mxu0 %v40
  %v383 = vpop.f32.mrb[0].mxu0
  %v384 = vadd.f32 %v239, %v383
  %v385 = vpop.f32.mrb[0].mxu0
  %386 = vmatprep.mubr.f32.mxu0 %v45
  %387 = vmatmul.mubr.f32.gmra.mrb[0].mxu0 %v44
  %v388 = vpop.f32.mrb[0].mxu0
  %v389 = vadd.f32 %v244, %v388
  %v390 = vpop.f32.mrb[0].mxu0
  %391 = vmatprep.mubr.f32.mxu0 %v49
  %392 = vmatmul.mubr.f32.gmra.mrb[0].mxu0 %v48
  %v393 = vpop.f32.mrb[0].mxu0
  %v394 = vadd.f32 %v249, %v393
  %v395 = vpop.f32.mrb[0].mxu0
  %396 = vmatprep.mubr.f32.mxu0 %v53
  %397 = vmatmul.mubr.f32.gmra.mrb[0].mxu0 %v52
  %v398 = vpop.f32.mrb[0].mxu0
  %v399 = vadd.f32 %v254, %v398
  %v400 = vpop.f32.mrb[0].mxu0
  %401 = vmatprep.mubr.f32.mxu0 %v57
  %402 = vmatmul.mubr.f32.gmra.mrb[0].mxu0 %v56
  %v403 = vpop.f32.mrb[0].mxu0
  %v404 = vadd.f32 %v259, %v403
  %v405 = vpop.f32.mrb[0].mxu0
  %406 = vmatprep.mubr.f32.mxu0 %v61
  %407 = vmatmul.mubr.f32.gmra.mrb[0].mxu0 %v60
  %v408 = vpop.f32.mrb[0].mxu0
  %v409 = vadd.f32 %v264, %v408
  %v410 = vpop.f32.mrb[0].mxu0
  %411 = vmatprep.mubr.f32.mxu0 %v65
  %412 = vmatmul.mubr.f32.gmra.mrb[0].mxu0 %v64
  %v413 = vpop.f32.mrb[0].mxu0
  %v414 = vadd.f32 %v269, %v413
  %v415 = vpop.f32.mrb[0].mxu0
  %416 = vmatprep.mubr.f32.mxu0 %v69
  %417 = vmatmul.mubr.f32.gmra.mrb[0].mxu0 %v68
  %v418 = vpop.f32.mrb[0].mxu0
  %v419 = vadd.f32 %v274, %v418
  %v420 = vpop.f32.mrb[0].mxu0
  %421 = vmatprep.mubr.f32.mxu0 %v73
  %422 = vmatmul.mubr.f32.gmra.mrb[0].mxu0 %v72
  %v423 = vpop.f32.mrb[0].mxu0
  %v424 = vadd.f32 %v279, %v423
  %v425 = vpop.f32.mrb[0].mxu0
  %426 = vmatprep.mubr.f32.mxu0 %v77
  %427 = vmatmul.mubr.f32.gmra.mrb[0].mxu0 %v76
  %v428 = vpop.f32.mrb[0].mxu0
  %v429 = vadd.f32 %v284, %v428
  %v430 = vpop.f32.mrb[0].mxu0
  %431 = vdwg.mxu0
  %v432 = vmax.f32 %v354, %v374
  %v433 = vmax.f32 %v432, %v394
  %v434 = vmax.f32 %v433, %v414
  %v435 = vmax.f32 %v359, %v379
  %v436 = vmax.f32 %v435, %v399
  %v437 = vmax.f32 %v436, %v419
  %v438 = vmax.f32 %v364, %v384
  %v439 = vmax.f32 %v438, %v404
  %v440 = vmax.f32 %v439, %v424
  %v441 = vmax.f32 %v369, %v389
  %v442 = vmax.f32 %v441, %v409
  %v443 = vmax.f32 %v442, %v429
  %v444 = vld [vmem:[%s2] sm:$0x1]
  %v446 = vlaneseq
  %v447 = vshrl.u32 %v446, 7
  %v448 = vsub.s32 0, %v447
  %v449 = vrot.slane %v444, %v448
  %v451 = vadd.f32 %v434, %v449
  %v452 = vadd.f32 %v437, %v449
  %v453 = vadd.f32 %v440, %v449
  %v454 = vadd.f32 %v443, %v449
  %v455 = vmax.f32 %v451, 0.0
  %v456 = vmax.f32 %v452, 0.0
  %v457 = vmax.f32 %v453, 0.0
  %v458 = vmax.f32 %v454, 0.0
  %459 = vst [vmem:[%s3] sm:$0xff] %v455
  %460 = vst [vmem:[%s3 + $0x8] sm:$0xff] %v456
  %461 = vst [vmem:[%s3 + $0x10] sm:$0xff] %v457
  %462 = vst [vmem:[%s3 + $0x18] sm:$0xff] %v458
  // Predicated region
  $region14: #{lenet_encoder_forward.4} parent=0 // pred_check
    _
  $region15: #{lenet_encoder_forward.4} parent=0 // pred_check_branch
    %464 = sbr.rel (0) target = $region17
  $region16: #{lenet_encoder_forward.4} parent=0 // pred_region
    _
  $region17: #{lenet_encoder_forward.4} parent=0 // pred_fallthru
    _
  // Predicated region
  $region18: #{lenet_encoder_forward.4} parent=0 // pred_check
    _
  $region19: #{lenet_encoder_forward.4} parent=0 // pred_check_branch
    %466 = sbr.rel (0) target = $region21
  $region20: #{lenet_encoder_forward.4} parent=0 // pred_region
    _
  $region21: #{lenet_encoder_forward.4} parent=0 // pred_fallthru
    _

// kernel: lenet_encoder_forward.5
$region0: #{lenet_encoder_forward.5}
  #allocation0 [shape = 'u32[]', space=smem, size = 0x4, offset = 0x4, fixed_abs, tag = 'smem constant byte address 0x4 - core index']
  #allocation1 [shape = 'u32[144,128]{1,0:T(1,128)}', space=vmem, size = 0x12000, scoped, tag = 'internal scratch']
  %s0 = inlined_call_operand.vmem [shape: f32[8,2048], index: 0, kind: input, shape index: {}]
  %s1 = inlined_call_operand.vmem [shape: f32[2048,500], index: 1, kind: input, shape index: {}]
  %s2 = inlined_call_operand.vmem [shape: f32[1,500], index: 2, kind: input, shape index: {}]
  %s3 = inlined_call_operand.vmem [shape: f32[8,500], index: 3, kind: output, shape index: {}]
  %s4 = sld [smem:[#allocation0]]
  $region22: #{lenet_encoder_forward.5} parent=0
    _
  %s6 = ssub.s32 1, %s4
  %s7 = scalar_select 0, %s6, %s4
  // Predicated region
  $region2: #{lenet_encoder_forward.5} parent=0 // pred_check
    _
  $region3: #{lenet_encoder_forward.5} parent=0 // pred_check_branch
    %9 = sbr.rel (0) target = $region5
  $region4: #{lenet_encoder_forward.5} parent=0 // pred_region
    _
  $region5: #{lenet_encoder_forward.5} parent=0 // pred_fallthru
    _
  // Predicated region
  $region6: #{lenet_encoder_forward.5} parent=0 // pred_check
    _
  $region7: #{lenet_encoder_forward.5} parent=0 // pred_check_branch
    %11 = sbr.rel (0) target = $region9
  $region8: #{lenet_encoder_forward.5} parent=0 // pred_region
    _
  $region9: #{lenet_encoder_forward.5} parent=0 // pred_fallthru
    _
  // Predicated region
  $region10: #{lenet_encoder_forward.5} parent=0 // pred_check
    _
  $region11: #{lenet_encoder_forward.5} parent=0 // pred_check_branch
    %13 = sbr.rel (0) target = $region13
  $region12: #{lenet_encoder_forward.5} parent=0 // pred_region
    _
  $region13: #{lenet_encoder_forward.5} parent=0 // pred_fallthru
    _
  %v14 = vld [vmem:[%s0] sm:$0xff]
  %v15 = vld [vmem:[%s0 + $0x8] sm:$0xff]
  %v16 = vld [vmem:[%s0 + $0x10] sm:$0xff]
  %v17 = vld [vmem:[%s0 + $0x18] sm:$0xff]
  %v18 = vld [vmem:[%s0 + $0x20] sm:$0xff]
  %v19 = vld [vmem:[%s0 + $0x28] sm:$0xff]
  %v20 = vld [vmem:[%s0 + $0x30] sm:$0xff]
  %v21 = vld [vmem:[%s0 + $0x38] sm:$0xff]
  %v22 = vld [vmem:[%s0 + $0x40] sm:$0xff]
  %v23 = vld [vmem:[%s0 + $0x48] sm:$0xff]
  %v24 = vld [vmem:[%s0 + $0x50] sm:$0xff]
  %v25 = vld [vmem:[%s0 + $0x58] sm:$0xff]
  %v26 = vld [vmem:[%s0 + $0x60] sm:$0xff]
  %v27 = vld [vmem:[%s0 + $0x68] sm:$0xff]
  %v28 = vld [vmem:[%s0 + $0x70] sm:$0xff]
  %v29 = vld [vmem:[%s0 + $0x78] sm:$0xff]
  %v30 = vld [vmem:[%s1] sm:$0xff]
  %v31 = vld [vmem:[%s1 + $0x8] sm:$0xff]
  %v32 = vld [vmem:[%s1 + $0x10] sm:$0xff]
  %v33 = vld [vmem:[%s1 + $0x18] sm:$0xff]
  %v34 = vld [vmem:[%s1 + $0x20] sm:$0xff]
  %v35 = vld [vmem:[%s1 + $0x28] sm:$0xff]
  %v36 = vld [vmem:[%s1 + $0x30] sm:$0xff]
  %v37 = vld [vmem:[%s1 + $0x38] sm:$0xff]
  %v38 = vld [vmem:[%s1 + $0x40] sm:$0xff]
  %v39 = vld [vmem:[%s1 + $0x48] sm:$0xff]
  %v40 = vld [vmem:[%s1 + $0x50] sm:$0xff]
  %v41 = vld [vmem:[%s1 + $0x58] sm:$0xff]
  %v42 = vld [vmem:[%s1 + $0x60] sm:$0xff]
  %v43 = vld [vmem:[%s1 + $0x68] sm:$0xff]
  %v44 = vld [vmem:[%s1 + $0x70] sm:$0xff]
  %v45 = vld [vmem:[%s1 + $0x78] sm:$0xff]
  %v46 = vld [vmem:[%s1 + $0x80] sm:$0xff]
  %v47 = vld [vmem:[%s1 + $0x88] sm:$0xff]
  %v48 = vld [vmem:[%s1 + $0x90] sm:$0xff]
  %v49 = vld [vmem:[%s1 + $0x98] sm:$0xff]
  %v50 = vld [vmem:[%s1 + $0xa0] sm:$0xff]
  %v51 = vld [vmem:[%s1 + $0xa8] sm:$0xff]
  %v52 = vld [vmem:[%s1 + $0xb0] sm:$0xff]
  %v53 = vld [vmem:[%s1 + $0xb8] sm:$0xff]
  %v54 = vld [vmem:[%s1 + $0xc0] sm:$0xff]
  %v55 = vld [vmem:[%s1 + $0xc8] sm:$0xff]
  %v56 = vld [vmem:[%s1 + $0xd0] sm:$0xff]
  %v57 = vld [vmem:[%s1 + $0xd8] sm:$0xff]
  %v58 = vld [vmem:[%s1 + $0xe0] sm:$0xff]
  %v59 = vld [vmem:[%s1 + $0xe8] sm:$0xff]
  %v60 = vld [vmem:[%s1 + $0xf0] sm:$0xff]
  %v61 = vld [vmem:[%s1 + $0xf8] sm:$0xff]
  %v62 = vld [vmem:[%s1 + $0x100] sm:$0xff]
  %v63 = vld [vmem:[%s1 + $0x108] sm:$0xff]
  %v64 = vld [vmem:[%s1 + $0x110] sm:$0xff]
  %v65 = vld [vmem:[%s1 + $0x118] sm:$0xff]
  %v66 = vld [vmem:[%s1 + $0x120] sm:$0xff]
  %v67 = vld [vmem:[%s1 + $0x128] sm:$0xff]
  %v68 = vld [vmem:[%s1 + $0x130] sm:$0xff]
  %v69 = vld [vmem:[%s1 + $0x138] sm:$0xff]
  %v70 = vld [vmem:[%s1 + $0x140] sm:$0xff]
  %v71 = vld [vmem:[%s1 + $0x148] sm:$0xff]
  %v72 = vld [vmem:[%s1 + $0x150] sm:$0xff]
  %v73 = vld [vmem:[%s1 + $0x158] sm:$0xff]
  %v74 = vld [vmem:[%s1 + $0x160] sm:$0xff]
  %v75 = vld [vmem:[%s1 + $0x168] sm:$0xff]
  %v76 = vld [vmem:[%s1 + $0x170] sm:$0xff]
  %v77 = vld [vmem:[%s1 + $0x178] sm:$0xff]
  %v78 = vld [vmem:[%s1 + $0x180] sm:$0xff]
  %v79 = vld [vmem:[%s1 + $0x188] sm:$0xff]
  %v80 = vld [vmem:[%s1 + $0x190] sm:$0xff]
  %v81 = vld [vmem:[%s1 + $0x198] sm:$0xff]
  %v82 = vld [vmem:[%s1 + $0x1a0] sm:$0xff]
  %v83 = vld [vmem:[%s1 + $0x1a8] sm:$0xff]
  %v84 = vld [vmem:[%s1 + $0x1b0] sm:$0xff]
  %v85 = vld [vmem:[%s1 + $0x1b8] sm:$0xff]
  %v86 = vld [vmem:[%s1 + $0x1c0] sm:$0xff]
  %v87 = vld [vmem:[%s1 + $0x1c8] sm:$0xff]
  %v88 = vld [vmem:[%s1 + $0x1d0] sm:$0xff]
  %v89 = vld [vmem:[%s1 + $0x1d8] sm:$0xff]
  %v90 = vld [vmem:[%s1 + $0x1e0] sm:$0xff]
  %v91 = vld [vmem:[%s1 + $0x1e8] sm:$0xff]
  %v92 = vld [vmem:[%s1 + $0x1f0] sm:$0xff]
  %v93 = vld [vmem:[%s1 + $0x1f8] sm:$0xff]
  %v94 = vld [vmem:[%s1 + $0x200] sm:$0xff]
  %v95 = vld [vmem:[%s1 + $0x208] sm:$0xff]
  %v96 = vld [vmem:[%s1 + $0x210] sm:$0xff]
  %v97 = vld [vmem:[%s1 + $0x218] sm:$0xff]
  %v98 = vld [vmem:[%s1 + $0x220] sm:$0xff]
  %v99 = vld [vmem:[%s1 + $0x228] sm:$0xff]
  %v100 = vld [vmem:[%s1 + $0x230] sm:$0xff]
  %v101 = vld [vmem:[%s1 + $0x238] sm:$0xff]
  %v102 = vld [vmem:[%s1 + $0x240] sm:$0xff]
  %v103 = vld [vmem:[%s1 + $0x248] sm:$0xff]
  %v104 = vld [vmem:[%s1 + $0x250] sm:$0xff]
  %v105 = vld [vmem:[%s1 + $0x258] sm:$0xff]
  %v106 = vld [vmem:[%s1 + $0x260] sm:$0xff]
  %v107 = vld [vmem:[%s1 + $0x268] sm:$0xff]
  %v108 = vld [vmem:[%s1 + $0x270] sm:$0xff]
  %v109 = vld [vmem:[%s1 + $0x278] sm:$0xff]
  %v110 = vld [vmem:[%s1 + $0x280] sm:$0xff]
  %v111 = vld [vmem:[%s1 + $0x288] sm:$0xff]
  %v112 = vld [vmem:[%s1 + $0x290] sm:$0xff]
  %v113 = vld [vmem:[%s1 + $0x298] sm:$0xff]
  %v114 = vld [vmem:[%s1 + $0x2a0] sm:$0xff]
  %v115 = vld [vmem:[%s1 + $0x2a8] sm:$0xff]
  %v116 = vld [vmem:[%s1 + $0x2b0] sm:$0xff]
  %v117 = vld [vmem:[%s1 + $0x2b8] sm:$0xff]
  %v118 = vld [vmem:[%s1 + $0x2c0] sm:$0xff]
  %v119 = vld [vmem:[%s1 + $0x2c8] sm:$0xff]
  %v120 = vld [vmem:[%s1 + $0x2d0] sm:$0xff]
  %v121 = vld [vmem:[%s1 + $0x2d8] sm:$0xff]
  %v122 = vld [vmem:[%s1 + $0x2e0] sm:$0xff]
  %v123 = vld [vmem:[%s1 + $0x2e8] sm:$0xff]
  %v124 = vld [vmem:[%s1 + $0x2f0] sm:$0xff]
  %v125 = vld [vmem:[%s1 + $0x2f8] sm:$0xff]
  %v126 = vld [vmem:[%s1 + $0x300] sm:$0xff]
  %v127 = vld [vmem:[%s1 + $0x308] sm:$0xff]
  %v128 = vld [vmem:[%s1 + $0x310] sm:$0xff]
  %v129 = vld [vmem:[%s1 + $0x318] sm:$0xff]
  %v130 = vld [vmem:[%s1 + $0x320] sm:$0xff]
  %v131 = vld [vmem:[%s1 + $0x328] sm:$0xff]
  %v132 = vld [vmem:[%s1 + $0x330] sm:$0xff]
  %v133 = vld [vmem:[%s1 + $0x338] sm:$0xff]
  %v134 = vld [vmem:[%s1 + $0x340] sm:$0xff]
  %v135 = vld [vmem:[%s1 + $0x348] sm:$0xff]
  %v136 = vld [vmem:[%s1 + $0x350] sm:$0xff]
  %v137 = vld [vmem:[%s1 + $0x358] sm:$0xff]
  %v138 = vld [vmem:[%s1 + $0x360] sm:$0xff]
  %v139 = vld [vmem:[%s1 + $0x368] sm:$0xff]
  %v140 = vld [vmem:[%s1 + $0x370] sm:$0xff]
  %v141 = vld [vmem:[%s1 + $0x378] sm:$0xff]
  %v142 = vld [vmem:[%s1 + $0x380] sm:$0xff]
  %v143 = vld [vmem:[%s1 + $0x388] sm:$0xff]
  %v144 = vld [vmem:[%s1 + $0x390] sm:$0xff]
  %v145 = vld [vmem:[%s1 + $0x398] sm:$0xff]
  %v146 = vld [vmem:[%s1 + $0x3a0] sm:$0xff]
  %v147 = vld [vmem:[%s1 + $0x3a8] sm:$0xff]
  %v148 = vld [vmem:[%s1 + $0x3b0] sm:$0xff]
  %v149 = vld [vmem:[%s1 + $0x3b8] sm:$0xff]
  %v150 = vld [vmem:[%s1 + $0x3c0] sm:$0xff]
  %v151 = vld [vmem:[%s1 + $0x3c8] sm:$0xff]
  %v152 = vld [vmem:[%s1 + $0x3d0] sm:$0xff]
  %v153 = vld [vmem:[%s1 + $0x3d8] sm:$0xff]
  %v154 = vld [vmem:[%s1 + $0x3e0] sm:$0xff]
  %v155 = vld [vmem:[%s1 + $0x3e8] sm:$0xff]
  %v156 = vld [vmem:[%s1 + $0x3f0] sm:$0xff]
  %v157 = vld [vmem:[%s1 + $0x3f8] sm:$0xff]
  %v158 = vld [vmem:[%s1 + $0x400] sm:$0xff]
  %v159 = vld [vmem:[%s1 + $0x408] sm:$0xff]
  %v160 = vld [vmem:[%s1 + $0x410] sm:$0xff]
  %v161 = vld [vmem:[%s1 + $0x418] sm:$0xff]
  %v162 = vld [vmem:[%s1 + $0x420] sm:$0xff]
  %v163 = vld [vmem:[%s1 + $0x428] sm:$0xff]
  %v164 = vld [vmem:[%s1 + $0x430] sm:$0xff]
  %v165 = vld [vmem:[%s1 + $0x438] sm:$0xff]
  %v166 = vld [vmem:[%s1 + $0x440] sm:$0xff]
  %v167 = vld [vmem:[%s1 + $0x448] sm:$0xff]
  %v168 = vld [vmem:[%s1 + $0x450] sm:$0xff]
  %v169 = vld [vmem:[%s1 + $0x458] sm:$0xff]
  %v170 = vld [vmem:[%s1 + $0x460] sm:$0xff]
  %v171 = vld [vmem:[%s1 + $0x468] sm:$0xff]
  %v172 = vld [vmem:[%s1 + $0x470] sm:$0xff]
  %v173 = vld [vmem:[%s1 + $0x478] sm:$0xff]
  %v174 = vld [vmem:[%s1 + $0x480] sm:$0xff]
  %v175 = vld [vmem:[%s1 + $0x488] sm:$0xff]
  %v176 = vld [vmem:[%s1 + $0x490] sm:$0xff]
  %v177 = vld [vmem:[%s1 + $0x498] sm:$0xff]
  %v178 = vld [vmem:[%s1 + $0x4a0] sm:$0xff]
  %v179 = vld [vmem:[%s1 + $0x4a8] sm:$0xff]
  %v180 = vld [vmem:[%s1 + $0x4b0] sm:$0xff]
  %v181 = vld [vmem:[%s1 + $0x4b8] sm:$0xff]
  %v182 = vld [vmem:[%s1 + $0x4c0] sm:$0xff]
  %v183 = vld [vmem:[%s1 + $0x4c8] sm:$0xff]
  %v184 = vld [vmem:[%s1 + $0x4d0] sm:$0xff]
  %v185 = vld [vmem:[%s1 + $0x4d8] sm:$0xff]
  %v186 = vld [vmem:[%s1 + $0x4e0] sm:$0xff]
  %v187 = vld [vmem:[%s1 + $0x4e8] sm:$0xff]
  %v188 = vld [vmem:[%s1 + $0x4f0] sm:$0xff]
  %v189 = vld [vmem:[%s1 + $0x4f8] sm:$0xff]
  %v190 = vld [vmem:[%s1 + $0x500] sm:$0xff]
  %v191 = vld [vmem:[%s1 + $0x508] sm:$0xff]
  %v192 = vld [vmem:[%s1 + $0x510] sm:$0xff]
  %v193 = vld [vmem:[%s1 + $0x518] sm:$0xff]
  %v194 = vld [vmem:[%s1 + $0x520] sm:$0xff]
  %v195 = vld [vmem:[%s1 + $0x528] sm:$0xff]
  %v196 = vld [vmem:[%s1 + $0x530] sm:$0xff]
  %v197 = vld [vmem:[%s1 + $0x538] sm:$0xff]
  %v198 = vld [vmem:[%s1 + $0x540] sm:$0xff]
  %v199 = vld [vmem:[%s1 + $0x548] sm:$0xff]
  %v200 = vld [vmem:[%s1 + $0x550] sm:$0xff]
  %v201 = vld [vmem:[%s1 + $0x558] sm:$0xff]
  %v202 = vld [vmem:[%s1 + $0x560] sm:$0xff]
  %v203 = vld [vmem:[%s1 + $0x568] sm:$0xff]
  %v204 = vld [vmem:[%s1 + $0x570] sm:$0xff]
  %v205 = vld [vmem:[%s1 + $0x578] sm:$0xff]
  %v206 = vld [vmem:[%s1 + $0x580] sm:$0xff]
  %v207 = vld [vmem:[%s1 + $0x588] sm:$0xff]
  %v208 = vld [vmem:[%s1 + $0x590] sm:$0xff]
  %v209 = vld [vmem:[%s1 + $0x598] sm:$0xff]
  %v210 = vld [vmem:[%s1 + $0x5a0] sm:$0xff]
  %v211 = vld [vmem:[%s1 + $0x5a8] sm:$0xff]
  %v212 = vld [vmem:[%s1 + $0x5b0] sm:$0xff]
  %v213 = vld [vmem:[%s1 + $0x5b8] sm:$0xff]
  %v214 = vld [vmem:[%s1 + $0x5c0] sm:$0xff]
  %v215 = vld [vmem:[%s1 + $0x5c8] sm:$0xff]
  %v216 = vld [vmem:[%s1 + $0x5d0] sm:$0xff]
  %v217 = vld [vmem:[%s1 + $0x5d8] sm:$0xff]
  %v218 = vld [vmem:[%s1 + $0x5e0] sm:$0xff]
  %v219 = vld [vmem:[%s1 + $0x5e8] sm:$0xff]
  %v220 = vld [vmem:[%s1 + $0x5f0] sm:$0xff]
  %v221 = vld [vmem:[%s1 + $0x5f8] sm:$0xff]
  %v222 = vld [vmem:[%s1 + $0x600] sm:$0xff]
  %v223 = vld [vmem:[%s1 + $0x608] sm:$0xff]
  %v224 = vld [vmem:[%s1 + $0x610] sm:$0xff]
  %v225 = vld [vmem:[%s1 + $0x618] sm:$0xff]
  %v226 = vld [vmem:[%s1 + $0x620] sm:$0xff]
  %v227 = vld [vmem:[%s1 + $0x628] sm:$0xff]
  %v228 = vld [vmem:[%s1 + $0x630] sm:$0xff]
  %v229 = vld [vmem:[%s1 + $0x638] sm:$0xff]
  %v230 = vld [vmem:[%s1 + $0x640] sm:$0xff]
  %v231 = vld [vmem:[%s1 + $0x648] sm:$0xff]
  %v232 = vld [vmem:[%s1 + $0x650] sm:$0xff]
  %v233 = vld [vmem:[%s1 + $0x658] sm:$0xff]
  %v234 = vld [vmem:[%s1 + $0x660] sm:$0xff]
  %v235 = vld [vmem:[%s1 + $0x668] sm:$0xff]
  %v236 = vld [vmem:[%s1 + $0x670] sm:$0xff]
  %v237 = vld [vmem:[%s1 + $0x678] sm:$0xff]
  %v238 = vld [vmem:[%s1 + $0x680] sm:$0xff]
  %v239 = vld [vmem:[%s1 + $0x688] sm:$0xff]
  %v240 = vld [vmem:[%s1 + $0x690] sm:$0xff]
  %v241 = vld [vmem:[%s1 + $0x698] sm:$0xff]
  %v242 = vld [vmem:[%s1 + $0x6a0] sm:$0xff]
  %v243 = vld [vmem:[%s1 + $0x6a8] sm:$0xff]
  %v244 = vld [vmem:[%s1 + $0x6b0] sm:$0xff]
  %v245 = vld [vmem:[%s1 + $0x6b8] sm:$0xff]
  %v246 = vld [vmem:[%s1 + $0x6c0] sm:$0xff]
  %v247 = vld [vmem:[%s1 + $0x6c8] sm:$0xff]
  %v248 = vld [vmem:[%s1 + $0x6d0] sm:$0xff]
  %v249 = vld [vmem:[%s1 + $0x6d8] sm:$0xff]
  %v250 = vld [vmem:[%s1 + $0x6e0] sm:$0xff]
  %v251 = vld [vmem:[%s1 + $0x6e8] sm:$0xff]
  %v252 = vld [vmem:[%s1 + $0x6f0] sm:$0xff]
  %v253 = vld [vmem:[%s1 + $0x6f8] sm:$0xff]
  %v254 = vld [vmem:[%s1 + $0x700] sm:$0xff]
  %v255 = vld [vmem:[%s1 + $0x708] sm:$0xff]
  %v256 = vld [vmem:[%s1 + $0x710] sm:$0xff]
  %v257 = vld [vmem:[%s1 + $0x718] sm:$0xff]
  %v258 = vld [vmem:[%s1 + $0x720] sm:$0xff]
  %v259 = vld [vmem:[%s1 + $0x728] sm:$0xff]
  %v260 = vld [vmem:[%s1 + $0x730] sm:$0xff]
  %v261 = vld [vmem:[%s1 + $0x738] sm:$0xff]
  %v262 = vld [vmem:[%s1 + $0x740] sm:$0xff]
  %v263 = vld [vmem:[%s1 + $0x748] sm:$0xff]
  %v264 = vld [vmem:[%s1 + $0x750] sm:$0xff]
  %v265 = vld [vmem:[%s1 + $0x758] sm:$0xff]
  %v266 = vld [vmem:[%s1 + $0x760] sm:$0xff]
  %v267 = vld [vmem:[%s1 + $0x768] sm:$0xff]
  %v268 = vld [vmem:[%s1 + $0x770] sm:$0xff]
  %v269 = vld [vmem:[%s1 + $0x778] sm:$0xff]
  %v270 = vld [vmem:[%s1 + $0x780] sm:$0xff]
  %v271 = vld [vmem:[%s1 + $0x788] sm:$0xff]
  %v272 = vld [vmem:[%s1 + $0x790] sm:$0xff]
  %v273 = vld [vmem:[%s1 + $0x798] sm:$0xff]
  %v274 = vld [vmem:[%s1 + $0x7a0] sm:$0xff]
  %v275 = vld [vmem:[%s1 + $0x7a8] sm:$0xff]
  %v276 = vld [vmem:[%s1 + $0x7b0] sm:$0xff]
  %v277 = vld [vmem:[%s1 + $0x7b8] sm:$0xff]
  %v278 = vld [vmem:[%s1 + $0x7c0] sm:$0xff]
  %v279 = vld [vmem:[%s1 + $0x7c8] sm:$0xff]
  %v280 = vld [vmem:[%s1 + $0x7d0] sm:$0xff]
  %v281 = vld [vmem:[%s1 + $0x7d8] sm:$0xff]
  %v282 = vld [vmem:[%s1 + $0x7e0] sm:$0xff]
  %v283 = vld [vmem:[%s1 + $0x7e8] sm:$0xff]
  %v284 = vld [vmem:[%s1 + $0x7f0] sm:$0xff]
  %v285 = vld [vmem:[%s1 + $0x7f8] sm:$0xff]
  %v286 = vld [vmem:[%s1 + $0x800] sm:$0xff]
  %v287 = vld [vmem:[%s1 + $0x808] sm:$0xff]
  %v288 = vld [vmem:[%s1 + $0x810] sm:$0xff]
  %v289 = vld [vmem:[%s1 + $0x818] sm:$0xff]
  %v290 = vld [vmem:[%s1 + $0x820] sm:$0xff]
  %v291 = vld [vmem:[%s1 + $0x828] sm:$0xff]
  %v292 = vld [vmem:[%s1 + $0x830] sm:$0xff]
  %v293 = vld [vmem:[%s1 + $0x838] sm:$0xff]
  %v294 = vld [vmem:[%s1 + $0x840] sm:$0xff]
  %v295 = vld [vmem:[%s1 + $0x848] sm:$0xff]
  %v296 = vld [vmem:[%s1 + $0x850] sm:$0xff]
  %v297 = vld [vmem:[%s1 + $0x858] sm:$0xff]
  %v298 = vld [vmem:[%s1 + $0x860] sm:$0xff]
  %v299 = vld [vmem:[%s1 + $0x868] sm:$0xff]
  %v300 = vld [vmem:[%s1 + $0x870] sm:$0xff]
  %v301 = vld [vmem:[%s1 + $0x878] sm:$0xff]
  %v302 = vld [vmem:[%s1 + $0x880] sm:$0xff]
  %v303 = vld [vmem:[%s1 + $0x888] sm:$0xff]
  %v304 = vld [vmem:[%s1 + $0x890] sm:$0xff]
  %v305 = vld [vmem:[%s1 + $0x898] sm:$0xff]
  %v306 = vld [vmem:[%s1 + $0x8a0] sm:$0xff]
  %v307 = vld [vmem:[%s1 + $0x8a8] sm:$0xff]
  %v308 = vld [vmem:[%s1 + $0x8b0] sm:$0xff]
  %v309 = vld [vmem:[%s1 + $0x8b8] sm:$0xff]
  %v310 = vld [vmem:[%s1 + $0x8c0] sm:$0xff]
  %v311 = vld [vmem:[%s1 + $0x8c8] sm:$0xff]
  %v312 = vld [vmem:[%s1 + $0x8d0] sm:$0xff]
  %v313 = vld [vmem:[%s1 + $0x8d8] sm:$0xff]
  %v314 = vld [vmem:[%s1 + $0x8e0] sm:$0xff]
  %v315 = vld [vmem:[%s1 + $0x8e8] sm:$0xff]
  %v316 = vld [vmem:[%s1 + $0x8f0] sm:$0xff]
  %v317 = vld [vmem:[%s1 + $0x8f8] sm:$0xff]
  %v318 = vld [vmem:[%s1 + $0x900] sm:$0xff]
  %v319 = vld [vmem:[%s1 + $0x908] sm:$0xff]
  %v320 = vld [vmem:[%s1 + $0x910] sm:$0xff]
  %v321 = vld [vmem:[%s1 + $0x918] sm:$0xff]
  %v322 = vld [vmem:[%s1 + $0x920] sm:$0xff]
  %v323 = vld [vmem:[%s1 + $0x928] sm:$0xff]
  %v324 = vld [vmem:[%s1 + $0x930] sm:$0xff]
  %v325 = vld [vmem:[%s1 + $0x938] sm:$0xff]
  %v326 = vld [vmem:[%s1 + $0x940] sm:$0xff]
  %v327 = vld [vmem:[%s1 + $0x948] sm:$0xff]
  %v328 = vld [vmem:[%s1 + $0x950] sm:$0xff]
  %v329 = vld [vmem:[%s1 + $0x958] sm:$0xff]
  %v330 = vld [vmem:[%s1 + $0x960] sm:$0xff]
  %v331 = vld [vmem:[%s1 + $0x968] sm:$0xff]
  %v332 = vld [vmem:[%s1 + $0x970] sm:$0xff]
  %v333 = vld [vmem:[%s1 + $0x978] sm:$0xff]
  %v334 = vld [vmem:[%s1 + $0x980] sm:$0xff]
  %v335 = vld [vmem:[%s1 + $0x988] sm:$0xff]
  %v336 = vld [vmem:[%s1 + $0x990] sm:$0xff]
  %v337 = vld [vmem:[%s1 + $0x998] sm:$0xff]
  %v338 = vld [vmem:[%s1 + $0x9a0] sm:$0xff]
  %v339 = vld [vmem:[%s1 + $0x9a8] sm:$0xff]
  %v340 = vld [vmem:[%s1 + $0x9b0] sm:$0xff]
  %v341 = vld [vmem:[%s1 + $0x9b8] sm:$0xff]
  %v342 = vld [vmem:[%s1 + $0x9c0] sm:$0xff]
  %v343 = vld [vmem:[%s1 + $0x9c8] sm:$0xff]
  %v344 = vld [vmem:[%s1 + $0x9d0] sm:$0xff]
  %v345 = vld [vmem:[%s1 + $0x9d8] sm:$0xff]
  %v346 = vld [vmem:[%s1 + $0x9e0] sm:$0xff]
  %v347 = vld [vmem:[%s1 + $0x9e8] sm:$0xff]
  %v348 = vld [vmem:[%s1 + $0x9f0] sm:$0xff]
  %v349 = vld [vmem:[%s1 + $0x9f8] sm:$0xff]
  %v350 = vld [vmem:[%s1 + $0xa00] sm:$0xff]
  %v351 = vld [vmem:[%s1 + $0xa08] sm:$0xff]
  %v352 = vld [vmem:[%s1 + $0xa10] sm:$0xff]
  %v353 = vld [vmem:[%s1 + $0xa18] sm:$0xff]
  %v354 = vld [vmem:[%s1 + $0xa20] sm:$0xff]
  %v355 = vld [vmem:[%s1 + $0xa28] sm:$0xff]
  %v356 = vld [vmem:[%s1 + $0xa30] sm:$0xff]
  %v357 = vld [vmem:[%s1 + $0xa38] sm:$0xff]
  %v358 = vld [vmem:[%s1 + $0xa40] sm:$0xff]
  %v359 = vld [vmem:[%s1 + $0xa48] sm:$0xff]
  %v360 = vld [vmem:[%s1 + $0xa50] sm:$0xff]
  %v361 = vld [vmem:[%s1 + $0xa58] sm:$0xff]
  %v362 = vld [vmem:[%s1 + $0xa60] sm:$0xff]
  %v363 = vld [vmem:[%s1 + $0xa68] sm:$0xff]
  %v364 = vld [vmem:[%s1 + $0xa70] sm:$0xff]
  %v365 = vld [vmem:[%s1 + $0xa78] sm:$0xff]
  %v366 = vld [vmem:[%s1 + $0xa80] sm:$0xff]
  %v367 = vld [vmem:[%s1 + $0xa88] sm:$0xff]
  %v368 = vld [vmem:[%s1 + $0xa90] sm:$0xff]
  %v369 = vld [vmem:[%s1 + $0xa98] sm:$0xff]
  %v370 = vld [vmem:[%s1 + $0xaa0] sm:$0xff]
  %v371 = vld [vmem:[%s1 + $0xaa8] sm:$0xff]
  %v372 = vld [vmem:[%s1 + $0xab0] sm:$0xff]
  %v373 = vld [vmem:[%s1 + $0xab8] sm:$0xff]
  %v374 = vld [vmem:[%s1 + $0xac0] sm:$0xff]
  %v375 = vld [vmem:[%s1 + $0xac8] sm:$0xff]
  %v376 = vld [vmem:[%s1 + $0xad0] sm:$0xff]
  %v377 = vld [vmem:[%s1 + $0xad8] sm:$0xff]
  %v378 = vld [vmem:[%s1 + $0xae0] sm:$0xff]
  %v379 = vld [vmem:[%s1 + $0xae8] sm:$0xff]
  %v380 = vld [vmem:[%s1 + $0xaf0] sm:$0xff]
  %v381 = vld [vmem:[%s1 + $0xaf8] sm:$0xff]
  %v382 = vld [vmem:[%s1 + $0xb00] sm:$0xff]
  %v383 = vld [vmem:[%s1 + $0xb08] sm:$0xff]
  %v384 = vld [vmem:[%s1 + $0xb10] sm:$0xff]
  %v385 = vld [vmem:[%s1 + $0xb18] sm:$0xff]
  %v386 = vld [vmem:[%s1 + $0xb20] sm:$0xff]
  %v387 = vld [vmem:[%s1 + $0xb28] sm:$0xff]
  %v388 = vld [vmem:[%s1 + $0xb30] sm:$0xff]
  %v389 = vld [vmem:[%s1 + $0xb38] sm:$0xff]
  %v390 = vld [vmem:[%s1 + $0xb40] sm:$0xff]
  %v391 = vld [vmem:[%s1 + $0xb48] sm:$0xff]
  %v392 = vld [vmem:[%s1 + $0xb50] sm:$0xff]
  %v393 = vld [vmem:[%s1 + $0xb58] sm:$0xff]
  %v394 = vld [vmem:[%s1 + $0xb60] sm:$0xff]
  %v395 = vld [vmem:[%s1 + $0xb68] sm:$0xff]
  %v396 = vld [vmem:[%s1 + $0xb70] sm:$0xff]
  %v397 = vld [vmem:[%s1 + $0xb78] sm:$0xff]
  %v398 = vld [vmem:[%s1 + $0xb80] sm:$0xff]
  %v399 = vld [vmem:[%s1 + $0xb88] sm:$0xff]
  %v400 = vld [vmem:[%s1 + $0xb90] sm:$0xff]
  %v401 = vld [vmem:[%s1 + $0xb98] sm:$0xff]
  %v402 = vld [vmem:[%s1 + $0xba0] sm:$0xff]
  %v403 = vld [vmem:[%s1 + $0xba8] sm:$0xff]
  %v404 = vld [vmem:[%s1 + $0xbb0] sm:$0xff]
  %v405 = vld [vmem:[%s1 + $0xbb8] sm:$0xff]
  %v406 = vld [vmem:[%s1 + $0xbc0] sm:$0xff]
  %v407 = vld [vmem:[%s1 + $0xbc8] sm:$0xff]
  %v408 = vld [vmem:[%s1 + $0xbd0] sm:$0xff]
  %v409 = vld [vmem:[%s1 + $0xbd8] sm:$0xff]
  %v410 = vld [vmem:[%s1 + $0xbe0] sm:$0xff]
  %v411 = vld [vmem:[%s1 + $0xbe8] sm:$0xff]
  %v412 = vld [vmem:[%s1 + $0xbf0] sm:$0xff]
  %v413 = vld [vmem:[%s1 + $0xbf8] sm:$0xff]
  %v414 = vld [vmem:[%s1 + $0xc00] sm:$0xff]
  %v415 = vld [vmem:[%s1 + $0xc08] sm:$0xff]
  %v416 = vld [vmem:[%s1 + $0xc10] sm:$0xff]
  %v417 = vld [vmem:[%s1 + $0xc18] sm:$0xff]
  %v418 = vld [vmem:[%s1 + $0xc20] sm:$0xff]
  %v419 = vld [vmem:[%s1 + $0xc28] sm:$0xff]
  %v420 = vld [vmem:[%s1 + $0xc30] sm:$0xff]
  %v421 = vld [vmem:[%s1 + $0xc38] sm:$0xff]
  %v422 = vld [vmem:[%s1 + $0xc40] sm:$0xff]
  %v423 = vld [vmem:[%s1 + $0xc48] sm:$0xff]
  %v424 = vld [vmem:[%s1 + $0xc50] sm:$0xff]
  %v425 = vld [vmem:[%s1 + $0xc58] sm:$0xff]
  %v426 = vld [vmem:[%s1 + $0xc60] sm:$0xff]
  %v427 = vld [vmem:[%s1 + $0xc68] sm:$0xff]
  %v428 = vld [vmem:[%s1 + $0xc70] sm:$0xff]
  %v429 = vld [vmem:[%s1 + $0xc78] sm:$0xff]
  %v430 = vld [vmem:[%s1 + $0xc80] sm:$0xff]
  %v431 = vld [vmem:[%s1 + $0xc88] sm:$0xff]
  %v432 = vld [vmem:[%s1 + $0xc90] sm:$0xff]
  %v433 = vld [vmem:[%s1 + $0xc98] sm:$0xff]
  %v434 = vld [vmem:[%s1 + $0xca0] sm:$0xff]
  %v435 = vld [vmem:[%s1 + $0xca8] sm:$0xff]
  %v436 = vld [vmem:[%s1 + $0xcb0] sm:$0xff]
  %v437 = vld [vmem:[%s1 + $0xcb8] sm:$0xff]
  %v438 = vld [vmem:[%s1 + $0xcc0] sm:$0xff]
  %v439 = vld [vmem:[%s1 + $0xcc8] sm:$0xff]
  %v440 = vld [vmem:[%s1 + $0xcd0] sm:$0xff]
  %v441 = vld [vmem:[%s1 + $0xcd8] sm:$0xff]
  %v442 = vld [vmem:[%s1 + $0xce0] sm:$0xff]
  %v443 = vld [vmem:[%s1 + $0xce8] sm:$0xff]
  %v444 = vld [vmem:[%s1 + $0xcf0] sm:$0xff]
  %v445 = vld [vmem:[%s1 + $0xcf8] sm:$0xff]
  %v446 = vld [vmem:[%s1 + $0xd00] sm:$0xff]
  %v447 = vld [vmem:[%s1 + $0xd08] sm:$0xff]
  %v448 = vld [vmem:[%s1 + $0xd10] sm:$0xff]
  %v449 = vld [vmem:[%s1 + $0xd18] sm:$0xff]
  %v450 = vld [vmem:[%s1 + $0xd20] sm:$0xff]
  %v451 = vld [vmem:[%s1 + $0xd28] sm:$0xff]
  %v452 = vld [vmem:[%s1 + $0xd30] sm:$0xff]
  %v453 = vld [vmem:[%s1 + $0xd38] sm:$0xff]
  %v454 = vld [vmem:[%s1 + $0xd40] sm:$0xff]
  %v455 = vld [vmem:[%s1 + $0xd48] sm:$0xff]
  %v456 = vld [vmem:[%s1 + $0xd50] sm:$0xff]
  %v457 = vld [vmem:[%s1 + $0xd58] sm:$0xff]
  %v458 = vld [vmem:[%s1 + $0xd60] sm:$0xff]
  %v459 = vld [vmem:[%s1 + $0xd68] sm:$0xff]
  %v460 = vld [vmem:[%s1 + $0xd70] sm:$0xff]
  %v461 = vld [vmem:[%s1 + $0xd78] sm:$0xff]
  %v462 = vld [vmem:[%s1 + $0xd80] sm:$0xff]
  %v463 = vld [vmem:[%s1 + $0xd88] sm:$0xff]
  %v464 = vld [vmem:[%s1 + $0xd90] sm:$0xff]
  %v465 = vld [vmem:[%s1 + $0xd98] sm:$0xff]
  %v466 = vld [vmem:[%s1 + $0xda0] sm:$0xff]
  %v467 = vld [vmem:[%s1 + $0xda8] sm:$0xff]
  %v468 = vld [vmem:[%s1 + $0xdb0] sm:$0xff]
  %v469 = vld [vmem:[%s1 + $0xdb8] sm:$0xff]
  %v470 = vld [vmem:[%s1 + $0xdc0] sm:$0xff]
  %v471 = vld [vmem:[%s1 + $0xdc8] sm:$0xff]
  %v472 = vld [vmem:[%s1 + $0xdd0] sm:$0xff]
  %v473 = vld [vmem:[%s1 + $0xdd8] sm:$0xff]
  %v474 = vld [vmem:[%s1 + $0xde0] sm:$0xff]
  %v475 = vld [vmem:[%s1 + $0xde8] sm:$0xff]
  %v476 = vld [vmem:[%s1 + $0xdf0] sm:$0xff]
  %v477 = vld [vmem:[%s1 + $0xdf8] sm:$0xff]
  %v478 = vld [vmem:[%s1 + $0xe00] sm:$0xff]
  %v479 = vld [vmem:[%s1 + $0xe08] sm:$0xff]
  %v480 = vld [vmem:[%s1 + $0xe10] sm:$0xff]
  %v481 = vld [vmem:[%s1 + $0xe18] sm:$0xff]
  %v482 = vld [vmem:[%s1 + $0xe20] sm:$0xff]
  %v483 = vld [vmem:[%s1 + $0xe28] sm:$0xff]
  %v484 = vld [vmem:[%s1 + $0xe30] sm:$0xff]
  %v485 = vld [vmem:[%s1 + $0xe38] sm:$0xff]
  %v486 = vld [vmem:[%s1 + $0xe40] sm:$0xff]
  %v487 = vld [vmem:[%s1 + $0xe48] sm:$0xff]
  %v488 = vld [vmem:[%s1 + $0xe50] sm:$0xff]
  %v489 = vld [vmem:[%s1 + $0xe58] sm:$0xff]
  %v490 = vld [vmem:[%s1 + $0xe60] sm:$0xff]
  %v491 = vld [vmem:[%s1 + $0xe68] sm:$0xff]
  %v492 = vld [vmem:[%s1 + $0xe70] sm:$0xff]
  %v493 = vld [vmem:[%s1 + $0xe78] sm:$0xff]
  %v494 = vld [vmem:[%s1 + $0xe80] sm:$0xff]
  %v495 = vld [vmem:[%s1 + $0xe88] sm:$0xff]
  %v496 = vld [vmem:[%s1 + $0xe90] sm:$0xff]
  %v497 = vld [vmem:[%s1 + $0xe98] sm:$0xff]
  %v498 = vld [vmem:[%s1 + $0xea0] sm:$0xff]
  %v499 = vld [vmem:[%s1 + $0xea8] sm:$0xff]
  %v500 = vld [vmem:[%s1 + $0xeb0] sm:$0xff]
  %v501 = vld [vmem:[%s1 + $0xeb8] sm:$0xff]
  %v502 = vld [vmem:[%s1 + $0xec0] sm:$0xff]
  %v503 = vld [vmem:[%s1 + $0xec8] sm:$0xff]
  %v504 = vld [vmem:[%s1 + $0xed0] sm:$0xff]
  %v505 = vld [vmem:[%s1 + $0xed8] sm:$0xff]
  %v506 = vld [vmem:[%s1 + $0xee0] sm:$0xff]
  %v507 = vld [vmem:[%s1 + $0xee8] sm:$0xff]
  %v508 = vld [vmem:[%s1 + $0xef0] sm:$0xff]
  %v509 = vld [vmem:[%s1 + $0xef8] sm:$0xff]
  %v510 = vld [vmem:[%s1 + $0xf00] sm:$0xff]
  %v511 = vld [vmem:[%s1 + $0xf08] sm:$0xff]
  %v512 = vld [vmem:[%s1 + $0xf10] sm:$0xff]
  %v513 = vld [vmem:[%s1 + $0xf18] sm:$0xff]
  %v514 = vld [vmem:[%s1 + $0xf20] sm:$0xff]
  %v515 = vld [vmem:[%s1 + $0xf28] sm:$0xff]
  %v516 = vld [vmem:[%s1 + $0xf30] sm:$0xff]
  %v517 = vld [vmem:[%s1 + $0xf38] sm:$0xff]
  %v518 = vld [vmem:[%s1 + $0xf40] sm:$0xff]
  %v519 = vld [vmem:[%s1 + $0xf48] sm:$0xff]
  %v520 = vld [vmem:[%s1 + $0xf50] sm:$0xff]
  %v521 = vld [vmem:[%s1 + $0xf58] sm:$0xff]
  %v522 = vld [vmem:[%s1 + $0xf60] sm:$0xff]
  %v523 = vld [vmem:[%s1 + $0xf68] sm:$0xff]
  %v524 = vld [vmem:[%s1 + $0xf70] sm:$0xff]
  %v525 = vld [vmem:[%s1 + $0xf78] sm:$0xff]
  %v526 = vld [vmem:[%s1 + $0xf80] sm:$0xff]
  %v527 = vld [vmem:[%s1 + $0xf88] sm:$0xff]
  %v528 = vld [vmem:[%s1 + $0xf90] sm:$0xff]
  %v529 = vld [vmem:[%s1 + $0xf98] sm:$0xff]
  %v530 = vld [vmem:[%s1 + $0xfa0] sm:$0xff]
  %v531 = vld [vmem:[%s1 + $0xfa8] sm:$0xff]
  %v532 = vld [vmem:[%s1 + $0xfb0] sm:$0xff]
  %v533 = vld [vmem:[%s1 + $0xfb8] sm:$0xff]
  %v534 = vld [vmem:[%s1 + $0xfc0] sm:$0xff]
  %v535 = vld [vmem:[%s1 + $0xfc8] sm:$0xff]
  %v536 = vld [vmem:[%s1 + $0xfd0] sm:$0xff]
  %v537 = vld [vmem:[%s1 + $0xfd8] sm:$0xff]
  %v538 = vld [vmem:[%s1 + $0xfe0] sm:$0xff]
  %v539 = vld [vmem:[%s1 + $0xfe8] sm:$0xff]
  %v540 = vld [vmem:[%s1 + $0xff0] sm:$0xff]
  %v541 = vld [vmem:[%s1 + $0xff8] sm:$0xff]
  %v542 = vld [vmem:[%s1 + $0x1000] sm:$0xff]
  %v543 = vld [vmem:[%s1 + $0x1008] sm:$0xff]
  %v544 = vld [vmem:[%s1 + $0x1010] sm:$0xff]
  %v545 = vld [vmem:[%s1 + $0x1018] sm:$0xff]
  %v546 = vld [vmem:[%s1 + $0x1020] sm:$0xff]
  %v547 = vld [vmem:[%s1 + $0x1028] sm:$0xff]
  %v548 = vld [vmem:[%s1 + $0x1030] sm:$0xff]
  %v549 = vld [vmem:[%s1 + $0x1038] sm:$0xff]
  %v550 = vld [vmem:[%s1 + $0x1040] sm:$0xff]
  %v551 = vld [vmem:[%s1 + $0x1048] sm:$0xff]
  %v552 = vld [vmem:[%s1 + $0x1050] sm:$0xff]
  %v553 = vld [vmem:[%s1 + $0x1058] sm:$0xff]
  %v554 = vld [vmem:[%s1 + $0x1060] sm:$0xff]
  %v555 = vld [vmem:[%s1 + $0x1068] sm:$0xff]
  %v556 = vld [vmem:[%s1 + $0x1070] sm:$0xff]
  %v557 = vld [vmem:[%s1 + $0x1078] sm:$0xff]
  %v558 = vld [vmem:[%s1 + $0x1080] sm:$0xff]
  %v559 = vld [vmem:[%s1 + $0x1088] sm:$0xff]
  %v560 = vld [vmem:[%s1 + $0x1090] sm:$0xff]
  %v561 = vld [vmem:[%s1 + $0x1098] sm:$0xff]
  %v562 = vld [vmem:[%s1 + $0x10a0] sm:$0xff]
  %v563 = vld [vmem:[%s1 + $0x10a8] sm:$0xff]
  %v564 = vld [vmem:[%s1 + $0x10b0] sm:$0xff]
  %v565 = vld [vmem:[%s1 + $0x10b8] sm:$0xff]
  %v566 = vld [vmem:[%s1 + $0x10c0] sm:$0xff]
  %v567 = vld [vmem:[%s1 + $0x10c8] sm:$0xff]
  %v568 = vld [vmem:[%s1 + $0x10d0] sm:$0xff]
  %v569 = vld [vmem:[%s1 + $0x10d8] sm:$0xff]
  %v570 = vld [vmem:[%s1 + $0x10e0] sm:$0xff]
  %v571 = vld [vmem:[%s1 + $0x10e8] sm:$0xff]
  %v572 = vld [vmem:[%s1 + $0x10f0] sm:$0xff]
  %v573 = vld [vmem:[%s1 + $0x10f8] sm:$0xff]
  %v574 = vld [vmem:[%s1 + $0x1100] sm:$0xff]
  %v575 = vld [vmem:[%s1 + $0x1108] sm:$0xff]
  %v576 = vld [vmem:[%s1 + $0x1110] sm:$0xff]
  %v577 = vld [vmem:[%s1 + $0x1118] sm:$0xff]
  %v578 = vld [vmem:[%s1 + $0x1120] sm:$0xff]
  %v579 = vld [vmem:[%s1 + $0x1128] sm:$0xff]
  %v580 = vld [vmem:[%s1 + $0x1130] sm:$0xff]
  %v581 = vld [vmem:[%s1 + $0x1138] sm:$0xff]
  %v582 = vld [vmem:[%s1 + $0x1140] sm:$0xff]
  %v583 = vld [vmem:[%s1 + $0x1148] sm:$0xff]
  %v584 = vld [vmem:[%s1 + $0x1150] sm:$0xff]
  %v585 = vld [vmem:[%s1 + $0x1158] sm:$0xff]
  %v586 = vld [vmem:[%s1 + $0x1160] sm:$0xff]
  %v587 = vld [vmem:[%s1 + $0x1168] sm:$0xff]
  %v588 = vld [vmem:[%s1 + $0x1170] sm:$0xff]
  %v589 = vld [vmem:[%s1 + $0x1178] sm:$0xff]
  %v590 = vld [vmem:[%s1 + $0x1180] sm:$0xff]
  %v591 = vld [vmem:[%s1 + $0x1188] sm:$0xff]
  %v592 = vld [vmem:[%s1 + $0x1190] sm:$0xff]
  %v593 = vld [vmem:[%s1 + $0x1198] sm:$0xff]
  %v594 = vld [vmem:[%s1 + $0x11a0] sm:$0xff]
  %v595 = vld [vmem:[%s1 + $0x11a8] sm:$0xff]
  %v596 = vld [vmem:[%s1 + $0x11b0] sm:$0xff]
  %v597 = vld [vmem:[%s1 + $0x11b8] sm:$0xff]
  %v598 = vld [vmem:[%s1 + $0x11c0] sm:$0xff]
  %v599 = vld [vmem:[%s1 + $0x11c8] sm:$0xff]
  %v600 = vld [vmem:[%s1 + $0x11d0] sm:$0xff]
  %v601 = vld [vmem:[%s1 + $0x11d8] sm:$0xff]
  %v602 = vld [vmem:[%s1 + $0x11e0] sm:$0xff]
  %v603 = vld [vmem:[%s1 + $0x11e8] sm:$0xff]
  %v604 = vld [vmem:[%s1 + $0x11f0] sm:$0xff]
  %v605 = vld [vmem:[%s1 + $0x11f8] sm:$0xff]
  %v606 = vld [vmem:[%s1 + $0x1200] sm:$0xff]
  %v607 = vld [vmem:[%s1 + $0x1208] sm:$0xff]
  %v608 = vld [vmem:[%s1 + $0x1210] sm:$0xff]
  %v609 = vld [vmem:[%s1 + $0x1218] sm:$0xff]
  %v610 = vld [vmem:[%s1 + $0x1220] sm:$0xff]
  %v611 = vld [vmem:[%s1 + $0x1228] sm:$0xff]
  %v612 = vld [vmem:[%s1 + $0x1230] sm:$0xff]
  %v613 = vld [vmem:[%s1 + $0x1238] sm:$0xff]
  %v614 = vld [vmem:[%s1 + $0x1240] sm:$0xff]
  %v615 = vld [vmem:[%s1 + $0x1248] sm:$0xff]
  %v616 = vld [vmem:[%s1 + $0x1250] sm:$0xff]
  %v617 = vld [vmem:[%s1 + $0x1258] sm:$0xff]
  %v618 = vld [vmem:[%s1 + $0x1260] sm:$0xff]
  %v619 = vld [vmem:[%s1 + $0x1268] sm:$0xff]
  %v620 = vld [vmem:[%s1 + $0x1270] sm:$0xff]
  %v621 = vld [vmem:[%s1 + $0x1278] sm:$0xff]
  %v622 = vld [vmem:[%s1 + $0x1280] sm:$0xff]
  %v623 = vld [vmem:[%s1 + $0x1288] sm:$0xff]
  %v624 = vld [vmem:[%s1 + $0x1290] sm:$0xff]
  %v625 = vld [vmem:[%s1 + $0x1298] sm:$0xff]
  %v626 = vld [vmem:[%s1 + $0x12a0] sm:$0xff]
  %v627 = vld [vmem:[%s1 + $0x12a8] sm:$0xff]
  %v628 = vld [vmem:[%s1 + $0x12b0] sm:$0xff]
  %v629 = vld [vmem:[%s1 + $0x12b8] sm:$0xff]
  %v630 = vld [vmem:[%s1 + $0x12c0] sm:$0xff]
  %v631 = vld [vmem:[%s1 + $0x12c8] sm:$0xff]
  %v632 = vld [vmem:[%s1 + $0x12d0] sm:$0xff]
  %v633 = vld [vmem:[%s1 + $0x12d8] sm:$0xff]
  %v634 = vld [vmem:[%s1 + $0x12e0] sm:$0xff]
  %v635 = vld [vmem:[%s1 + $0x12e8] sm:$0xff]
  %v636 = vld [vmem:[%s1 + $0x12f0] sm:$0xff]
  %v637 = vld [vmem:[%s1 + $0x12f8] sm:$0xff]
  %v638 = vld [vmem:[%s1 + $0x1300] sm:$0xff]
  %v639 = vld [vmem:[%s1 + $0x1308] sm:$0xff]
  %v640 = vld [vmem:[%s1 + $0x1310] sm:$0xff]
  %v641 = vld [vmem:[%s1 + $0x1318] sm:$0xff]
  %v642 = vld [vmem:[%s1 + $0x1320] sm:$0xff]
  %v643 = vld [vmem:[%s1 + $0x1328] sm:$0xff]
  %v644 = vld [vmem:[%s1 + $0x1330] sm:$0xff]
  %v645 = vld [vmem:[%s1 + $0x1338] sm:$0xff]
  %v646 = vld [vmem:[%s1 + $0x1340] sm:$0xff]
  %v647 = vld [vmem:[%s1 + $0x1348] sm:$0xff]
  %v648 = vld [vmem:[%s1 + $0x1350] sm:$0xff]
  %v649 = vld [vmem:[%s1 + $0x1358] sm:$0xff]
  %v650 = vld [vmem:[%s1 + $0x1360] sm:$0xff]
  %v651 = vld [vmem:[%s1 + $0x1368] sm:$0xff]
  %v652 = vld [vmem:[%s1 + $0x1370] sm:$0xff]
  %v653 = vld [vmem:[%s1 + $0x1378] sm:$0xff]
  %v654 = vld [vmem:[%s1 + $0x1380] sm:$0xff]
  %v655 = vld [vmem:[%s1 + $0x1388] sm:$0xff]
  %v656 = vld [vmem:[%s1 + $0x1390] sm:$0xff]
  %v657 = vld [vmem:[%s1 + $0x1398] sm:$0xff]
  %v658 = vld [vmem:[%s1 + $0x13a0] sm:$0xff]
  %v659 = vld [vmem:[%s1 + $0x13a8] sm:$0xff]
  %v660 = vld [vmem:[%s1 + $0x13b0] sm:$0xff]
  %v661 = vld [vmem:[%s1 + $0x13b8] sm:$0xff]
  %v662 = vld [vmem:[%s1 + $0x13c0] sm:$0xff]
  %v663 = vld [vmem:[%s1 + $0x13c8] sm:$0xff]
  %v664 = vld [vmem:[%s1 + $0x13d0] sm:$0xff]
  %v665 = vld [vmem:[%s1 + $0x13d8] sm:$0xff]
  %v666 = vld [vmem:[%s1 + $0x13e0] sm:$0xff]
  %v667 = vld [vmem:[%s1 + $0x13e8] sm:$0xff]
  %v668 = vld [vmem:[%s1 + $0x13f0] sm:$0xff]
  %v669 = vld [vmem:[%s1 + $0x13f8] sm:$0xff]
  %v670 = vld [vmem:[%s1 + $0x1400] sm:$0xff]
  %v671 = vld [vmem:[%s1 + $0x1408] sm:$0xff]
  %v672 = vld [vmem:[%s1 + $0x1410] sm:$0xff]
  %v673 = vld [vmem:[%s1 + $0x1418] sm:$0xff]
  %v674 = vld [vmem:[%s1 + $0x1420] sm:$0xff]
  %v675 = vld [vmem:[%s1 + $0x1428] sm:$0xff]
  %v676 = vld [vmem:[%s1 + $0x1430] sm:$0xff]
  %v677 = vld [vmem:[%s1 + $0x1438] sm:$0xff]
  %v678 = vld [vmem:[%s1 + $0x1440] sm:$0xff]
  %v679 = vld [vmem:[%s1 + $0x1448] sm:$0xff]
  %v680 = vld [vmem:[%s1 + $0x1450] sm:$0xff]
  %v681 = vld [vmem:[%s1 + $0x1458] sm:$0xff]
  %v682 = vld [vmem:[%s1 + $0x1460] sm:$0xff]
  %v683 = vld [vmem:[%s1 + $0x1468] sm:$0xff]
  %v684 = vld [vmem:[%s1 + $0x1470] sm:$0xff]
  %v685 = vld [vmem:[%s1 + $0x1478] sm:$0xff]
  %v686 = vld [vmem:[%s1 + $0x1480] sm:$0xff]
  %v687 = vld [vmem:[%s1 + $0x1488] sm:$0xff]
  %v688 = vld [vmem:[%s1 + $0x1490] sm:$0xff]
  %v689 = vld [vmem:[%s1 + $0x1498] sm:$0xff]
  %v690 = vld [vmem:[%s1 + $0x14a0] sm:$0xff]
  %v691 = vld [vmem:[%s1 + $0x14a8] sm:$0xff]
  %v692 = vld [vmem:[%s1 + $0x14b0] sm:$0xff]
  %v693 = vld [vmem:[%s1 + $0x14b8] sm:$0xff]
  %v694 = vld [vmem:[%s1 + $0x14c0] sm:$0xff]
  %v695 = vld [vmem:[%s1 + $0x14c8] sm:$0xff]
  %v696 = vld [vmem:[%s1 + $0x14d0] sm:$0xff]
  %v697 = vld [vmem:[%s1 + $0x14d8] sm:$0xff]
  %v698 = vld [vmem:[%s1 + $0x14e0] sm:$0xff]
  %v699 = vld [vmem:[%s1 + $0x14e8] sm:$0xff]
  %v700 = vld [vmem:[%s1 + $0x14f0] sm:$0xff]
  %v701 = vld [vmem:[%s1 + $0x14f8] sm:$0xff]
  %v702 = vld [vmem:[%s1 + $0x1500] sm:$0xff]
  %v703 = vld [vmem:[%s1 + $0x1508] sm:$0xff]
  %v704 = vld [vmem:[%s1 + $0x1510] sm:$0xff]
  %v705 = vld [vmem:[%s1 + $0x1518] sm:$0xff]
  %v706 = vld [vmem:[%s1 + $0x1520] sm:$0xff]
  %v707 = vld [vmem:[%s1 + $0x1528] sm:$0xff]
  %v708 = vld [vmem:[%s1 + $0x1530] sm:$0xff]
  %v709 = vld [vmem:[%s1 + $0x1538] sm:$0xff]
  %v710 = vld [vmem:[%s1 + $0x1540] sm:$0xff]
  %v711 = vld [vmem:[%s1 + $0x1548] sm:$0xff]
  %v712 = vld [vmem:[%s1 + $0x1550] sm:$0xff]
  %v713 = vld [vmem:[%s1 + $0x1558] sm:$0xff]
  %v714 = vld [vmem:[%s1 + $0x1560] sm:$0xff]
  %v715 = vld [vmem:[%s1 + $0x1568] sm:$0xff]
  %v716 = vld [vmem:[%s1 + $0x1570] sm:$0xff]
  %v717 = vld [vmem:[%s1 + $0x1578] sm:$0xff]
  %v718 = vld [vmem:[%s1 + $0x1580] sm:$0xff]
  %v719 = vld [vmem:[%s1 + $0x1588] sm:$0xff]
  %v720 = vld [vmem:[%s1 + $0x1590] sm:$0xff]
  %v721 = vld [vmem:[%s1 + $0x1598] sm:$0xff]
  %v722 = vld [vmem:[%s1 + $0x15a0] sm:$0xff]
  %v723 = vld [vmem:[%s1 + $0x15a8] sm:$0xff]
  %v724 = vld [vmem:[%s1 + $0x15b0] sm:$0xff]
  %v725 = vld [vmem:[%s1 + $0x15b8] sm:$0xff]
  %v726 = vld [vmem:[%s1 + $0x15c0] sm:$0xff]
  %v727 = vld [vmem:[%s1 + $0x15c8] sm:$0xff]
  %v728 = vld [vmem:[%s1 + $0x15d0] sm:$0xff]
  %v729 = vld [vmem:[%s1 + $0x15d8] sm:$0xff]
  %v730 = vld [vmem:[%s1 + $0x15e0] sm:$0xff]
  %v731 = vld [vmem:[%s1 + $0x15e8] sm:$0xff]
  %v732 = vld [vmem:[%s1 + $0x15f0] sm:$0xff]
  %v733 = vld [vmem:[%s1 + $0x15f8] sm:$0xff]
  %v734 = vld [vmem:[%s1 + $0x1600] sm:$0xff]
  %v735 = vld [vmem:[%s1 + $0x1608] sm:$0xff]
  %v736 = vld [vmem:[%s1 + $0x1610] sm:$0xff]
  %v737 = vld [vmem:[%s1 + $0x1618] sm:$0xff]
  %v738 = vld [vmem:[%s1 + $0x1620] sm:$0xff]
  %v739 = vld [vmem:[%s1 + $0x1628] sm:$0xff]
  %v740 = vld [vmem:[%s1 + $0x1630] sm:$0xff]
  %v741 = vld [vmem:[%s1 + $0x1638] sm:$0xff]
  %v742 = vld [vmem:[%s1 + $0x1640] sm:$0xff]
  %v743 = vld [vmem:[%s1 + $0x1648] sm:$0xff]
  %v744 = vld [vmem:[%s1 + $0x1650] sm:$0xff]
  %v745 = vld [vmem:[%s1 + $0x1658] sm:$0xff]
  %v746 = vld [vmem:[%s1 + $0x1660] sm:$0xff]
  %v747 = vld [vmem:[%s1 + $0x1668] sm:$0xff]
  %v748 = vld [vmem:[%s1 + $0x1670] sm:$0xff]
  %v749 = vld [vmem:[%s1 + $0x1678] sm:$0xff]
  %v750 = vld [vmem:[%s1 + $0x1680] sm:$0xff]
  %v751 = vld [vmem:[%s1 + $0x1688] sm:$0xff]
  %v752 = vld [vmem:[%s1 + $0x1690] sm:$0xff]
  %v753 = vld [vmem:[%s1 + $0x1698] sm:$0xff]
  %v754 = vld [vmem:[%s1 + $0x16a0] sm:$0xff]
  %v755 = vld [vmem:[%s1 + $0x16a8] sm:$0xff]
  %v756 = vld [vmem:[%s1 + $0x16b0] sm:$0xff]
  %v757 = vld [vmem:[%s1 + $0x16b8] sm:$0xff]
  %v758 = vld [vmem:[%s1 + $0x16c0] sm:$0xff]
  %v759 = vld [vmem:[%s1 + $0x16c8] sm:$0xff]
  %v760 = vld [vmem:[%s1 + $0x16d0] sm:$0xff]
  %v761 = vld [vmem:[%s1 + $0x16d8] sm:$0xff]
  %v762 = vld [vmem:[%s1 + $0x16e0] sm:$0xff]
  %v763 = vld [vmem:[%s1 + $0x16e8] sm:$0xff]
  %v764 = vld [vmem:[%s1 + $0x16f0] sm:$0xff]
  %v765 = vld [vmem:[%s1 + $0x16f8] sm:$0xff]
  %v766 = vld [vmem:[%s1 + $0x1700] sm:$0xff]
  %v767 = vld [vmem:[%s1 + $0x1708] sm:$0xff]
  %v768 = vld [vmem:[%s1 + $0x1710] sm:$0xff]
  %v769 = vld [vmem:[%s1 + $0x1718] sm:$0xff]
  %v770 = vld [vmem:[%s1 + $0x1720] sm:$0xff]
  %v771 = vld [vmem:[%s1 + $0x1728] sm:$0xff]
  %v772 = vld [vmem:[%s1 + $0x1730] sm:$0xff]
  %v773 = vld [vmem:[%s1 + $0x1738] sm:$0xff]
  %v774 = vld [vmem:[%s1 + $0x1740] sm:$0xff]
  %v775 = vld [vmem:[%s1 + $0x1748] sm:$0xff]
  %v776 = vld [vmem:[%s1 + $0x1750] sm:$0xff]
  %v777 = vld [vmem:[%s1 + $0x1758] sm:$0xff]
  %v778 = vld [vmem:[%s1 + $0x1760] sm:$0xff]
  %v779 = vld [vmem:[%s1 + $0x1768] sm:$0xff]
  %v780 = vld [vmem:[%s1 + $0x1770] sm:$0xff]
  %v781 = vld [vmem:[%s1 + $0x1778] sm:$0xff]
  %v782 = vld [vmem:[%s1 + $0x1780] sm:$0xff]
  %v783 = vld [vmem:[%s1 + $0x1788] sm:$0xff]
  %v784 = vld [vmem:[%s1 + $0x1790] sm:$0xff]
  %v785 = vld [vmem:[%s1 + $0x1798] sm:$0xff]
  %v786 = vld [vmem:[%s1 + $0x17a0] sm:$0xff]
  %v787 = vld [vmem:[%s1 + $0x17a8] sm:$0xff]
  %v788 = vld [vmem:[%s1 + $0x17b0] sm:$0xff]
  %v789 = vld [vmem:[%s1 + $0x17b8] sm:$0xff]
  %v790 = vld [vmem:[%s1 + $0x17c0] sm:$0xff]
  %v791 = vld [vmem:[%s1 + $0x17c8] sm:$0xff]
  %v792 = vld [vmem:[%s1 + $0x17d0] sm:$0xff]
  %v793 = vld [vmem:[%s1 + $0x17d8] sm:$0xff]
  %v794 = vld [vmem:[%s1 + $0x17e0] sm:$0xff]
  %v795 = vld [vmem:[%s1 + $0x17e8] sm:$0xff]
  %v796 = vld [vmem:[%s1 + $0x17f0] sm:$0xff]
  %v797 = vld [vmem:[%s1 + $0x17f8] sm:$0xff]
  %v798 = vld [vmem:[%s1 + $0x1800] sm:$0xff]
  %v799 = vld [vmem:[%s1 + $0x1808] sm:$0xff]
  %v800 = vld [vmem:[%s1 + $0x1810] sm:$0xff]
  %v801 = vld [vmem:[%s1 + $0x1818] sm:$0xff]
  %v802 = vld [vmem:[%s1 + $0x1820] sm:$0xff]
  %v803 = vld [vmem:[%s1 + $0x1828] sm:$0xff]
  %v804 = vld [vmem:[%s1 + $0x1830] sm:$0xff]
  %v805 = vld [vmem:[%s1 + $0x1838] sm:$0xff]
  %v806 = vld [vmem:[%s1 + $0x1840] sm:$0xff]
  %v807 = vld [vmem:[%s1 + $0x1848] sm:$0xff]
  %v808 = vld [vmem:[%s1 + $0x1850] sm:$0xff]
  %v809 = vld [vmem:[%s1 + $0x1858] sm:$0xff]
  %v810 = vld [vmem:[%s1 + $0x1860] sm:$0xff]
  %v811 = vld [vmem:[%s1 + $0x1868] sm:$0xff]
  %v812 = vld [vmem:[%s1 + $0x1870] sm:$0xff]
  %v813 = vld [vmem:[%s1 + $0x1878] sm:$0xff]
  %v814 = vld [vmem:[%s1 + $0x1880] sm:$0xff]
  %v815 = vld [vmem:[%s1 + $0x1888] sm:$0xff]
  %v816 = vld [vmem:[%s1 + $0x1890] sm:$0xff]
  %v817 = vld [vmem:[%s1 + $0x1898] sm:$0xff]
  %v818 = vld [vmem:[%s1 + $0x18a0] sm:$0xff]
  %v819 = vld [vmem:[%s1 + $0x18a8] sm:$0xff]
  %v820 = vld [vmem:[%s1 + $0x18b0] sm:$0xff]
  %v821 = vld [vmem:[%s1 + $0x18b8] sm:$0xff]
  %v822 = vld [vmem:[%s1 + $0x18c0] sm:$0xff]
  %v823 = vld [vmem:[%s1 + $0x18c8] sm:$0xff]
  %v824 = vld [vmem:[%s1 + $0x18d0] sm:$0xff]
  %v825 = vld [vmem:[%s1 + $0x18d8] sm:$0xff]
  %v826 = vld [vmem:[%s1 + $0x18e0] sm:$0xff]
  %v827 = vld [vmem:[%s1 + $0x18e8] sm:$0xff]
  %v828 = vld [vmem:[%s1 + $0x18f0] sm:$0xff]
  %v829 = vld [vmem:[%s1 + $0x18f8] sm:$0xff]
  %v830 = vld [vmem:[%s1 + $0x1900] sm:$0xff]
  %v831 = vld [vmem:[%s1 + $0x1908] sm:$0xff]
  %v832 = vld [vmem:[%s1 + $0x1910] sm:$0xff]
  %v833 = vld [vmem:[%s1 + $0x1918] sm:$0xff]
  %v834 = vld [vmem:[%s1 + $0x1920] sm:$0xff]
  %v835 = vld [vmem:[%s1 + $0x1928] sm:$0xff]
  %v836 = vld [vmem:[%s1 + $0x1930] sm:$0xff]
  %v837 = vld [vmem:[%s1 + $0x1938] sm:$0xff]
  %v838 = vld [vmem:[%s1 + $0x1940] sm:$0xff]
  %v839 = vld [vmem:[%s1 + $0x1948] sm:$0xff]
  %v840 = vld [vmem:[%s1 + $0x1950] sm:$0xff]
  %v841 = vld [vmem:[%s1 + $0x1958] sm:$0xff]
  %v842 = vld [vmem:[%s1 + $0x1960] sm:$0xff]
  %v843 = vld [vmem:[%s1 + $0x1968] sm:$0xff]
  %v844 = vld [vmem:[%s1 + $0x1970] sm:$0xff]
  %v845 = vld [vmem:[%s1 + $0x1978] sm:$0xff]
  %v846 = vld [vmem:[%s1 + $0x1980] sm:$0xff]
  %v847 = vld [vmem:[%s1 + $0x1988] sm:$0xff]
  %v848 = vld [vmem:[%s1 + $0x1990] sm:$0xff]
  %v849 = vld [vmem:[%s1 + $0x1998] sm:$0xff]
  %v850 = vld [vmem:[%s1 + $0x19a0] sm:$0xff]
  %v851 = vld [vmem:[%s1 + $0x19a8] sm:$0xff]
  %v852 = vld [vmem:[%s1 + $0x19b0] sm:$0xff]
  %v853 = vld [vmem:[%s1 + $0x19b8] sm:$0xff]
  %v854 = vld [vmem:[%s1 + $0x19c0] sm:$0xff]
  %v855 = vld [vmem:[%s1 + $0x19c8] sm:$0xff]
  %v856 = vld [vmem:[%s1 + $0x19d0] sm:$0xff]
  %v857 = vld [vmem:[%s1 + $0x19d8] sm:$0xff]
  %v858 = vld [vmem:[%s1 + $0x19e0] sm:$0xff]
  %v859 = vld [vmem:[%s1 + $0x19e8] sm:$0xff]
  %v860 = vld [vmem:[%s1 + $0x19f0] sm:$0xff]
  %v861 = vld [vmem:[%s1 + $0x19f8] sm:$0xff]
  %v862 = vld [vmem:[%s1 + $0x1a00] sm:$0xff]
  %v863 = vld [vmem:[%s1 + $0x1a08] sm:$0xff]
  %v864 = vld [vmem:[%s1 + $0x1a10] sm:$0xff]
  %v865 = vld [vmem:[%s1 + $0x1a18] sm:$0xff]
  %v866 = vld [vmem:[%s1 + $0x1a20] sm:$0xff]
  %v867 = vld [vmem:[%s1 + $0x1a28] sm:$0xff]
  %v868 = vld [vmem:[%s1 + $0x1a30] sm:$0xff]
  %v869 = vld [vmem:[%s1 + $0x1a38] sm:$0xff]
  %v870 = vld [vmem:[%s1 + $0x1a40] sm:$0xff]
  %v871 = vld [vmem:[%s1 + $0x1a48] sm:$0xff]
  %v872 = vld [vmem:[%s1 + $0x1a50] sm:$0xff]
  %v873 = vld [vmem:[%s1 + $0x1a58] sm:$0xff]
  %v874 = vld [vmem:[%s1 + $0x1a60] sm:$0xff]
  %v875 = vld [vmem:[%s1 + $0x1a68] sm:$0xff]
  %v876 = vld [vmem:[%s1 + $0x1a70] sm:$0xff]
  %v877 = vld [vmem:[%s1 + $0x1a78] sm:$0xff]
  %v878 = vld [vmem:[%s1 + $0x1a80] sm:$0xff]
  %v879 = vld [vmem:[%s1 + $0x1a88] sm:$0xff]
  %v880 = vld [vmem:[%s1 + $0x1a90] sm:$0xff]
  %v881 = vld [vmem:[%s1 + $0x1a98] sm:$0xff]
  %v882 = vld [vmem:[%s1 + $0x1aa0] sm:$0xff]
  %v883 = vld [vmem:[%s1 + $0x1aa8] sm:$0xff]
  %v884 = vld [vmem:[%s1 + $0x1ab0] sm:$0xff]
  %v885 = vld [vmem:[%s1 + $0x1ab8] sm:$0xff]
  %v886 = vld [vmem:[%s1 + $0x1ac0] sm:$0xff]
  %v887 = vld [vmem:[%s1 + $0x1ac8] sm:$0xff]
  %v888 = vld [vmem:[%s1 + $0x1ad0] sm:$0xff]
  %v889 = vld [vmem:[%s1 + $0x1ad8] sm:$0xff]
  %v890 = vld [vmem:[%s1 + $0x1ae0] sm:$0xff]
  %v891 = vld [vmem:[%s1 + $0x1ae8] sm:$0xff]
  %v892 = vld [vmem:[%s1 + $0x1af0] sm:$0xff]
  %v893 = vld [vmem:[%s1 + $0x1af8] sm:$0xff]
  %v894 = vld [vmem:[%s1 + $0x1b00] sm:$0xff]
  %v895 = vld [vmem:[%s1 + $0x1b08] sm:$0xff]
  %v896 = vld [vmem:[%s1 + $0x1b10] sm:$0xff]
  %v897 = vld [vmem:[%s1 + $0x1b18] sm:$0xff]
  %v898 = vld [vmem:[%s1 + $0x1b20] sm:$0xff]
  %v899 = vld [vmem:[%s1 + $0x1b28] sm:$0xff]
  %v900 = vld [vmem:[%s1 + $0x1b30] sm:$0xff]
  %v901 = vld [vmem:[%s1 + $0x1b38] sm:$0xff]
  %v902 = vld [vmem:[%s1 + $0x1b40] sm:$0xff]
  %v903 = vld [vmem:[%s1 + $0x1b48] sm:$0xff]
  %v904 = vld [vmem:[%s1 + $0x1b50] sm:$0xff]
  %v905 = vld [vmem:[%s1 + $0x1b58] sm:$0xff]
  %v906 = vld [vmem:[%s1 + $0x1b60] sm:$0xff]
  %v907 = vld [vmem:[%s1 + $0x1b68] sm:$0xff]
  %v908 = vld [vmem:[%s1 + $0x1b70] sm:$0xff]
  %v909 = vld [vmem:[%s1 + $0x1b78] sm:$0xff]
  %v910 = vld [vmem:[%s1 + $0x1b80] sm:$0xff]
  %v911 = vld [vmem:[%s1 + $0x1b88] sm:$0xff]
  %v912 = vld [vmem:[%s1 + $0x1b90] sm:$0xff]
  %v913 = vld [vmem:[%s1 + $0x1b98] sm:$0xff]
  %v914 = vld [vmem:[%s1 + $0x1ba0] sm:$0xff]
  %v915 = vld [vmem:[%s1 + $0x1ba8] sm:$0xff]
  %v916 = vld [vmem:[%s1 + $0x1bb0] sm:$0xff]
  %v917 = vld [vmem:[%s1 + $0x1bb8] sm:$0xff]
  %v918 = vld [vmem:[%s1 + $0x1bc0] sm:$0xff]
  %v919 = vld [vmem:[%s1 + $0x1bc8] sm:$0xff]
  %v920 = vld [vmem:[%s1 + $0x1bd0] sm:$0xff]
  %v921 = vld [vmem:[%s1 + $0x1bd8] sm:$0xff]
  %v922 = vld [vmem:[%s1 + $0x1be0] sm:$0xff]
  %v923 = vld [vmem:[%s1 + $0x1be8] sm:$0xff]
  %v924 = vld [vmem:[%s1 + $0x1bf0] sm:$0xff]
  %v925 = vld [vmem:[%s1 + $0x1bf8] sm:$0xff]
  %v926 = vld [vmem:[%s1 + $0x1c00] sm:$0xff]
  %v927 = vld [vmem:[%s1 + $0x1c08] sm:$0xff]
  %v928 = vld [vmem:[%s1 + $0x1c10] sm:$0xff]
  %v929 = vld [vmem:[%s1 + $0x1c18] sm:$0xff]
  %v930 = vld [vmem:[%s1 + $0x1c20] sm:$0xff]
  %v931 = vld [vmem:[%s1 + $0x1c28] sm:$0xff]
  %v932 = vld [vmem:[%s1 + $0x1c30] sm:$0xff]
  %v933 = vld [vmem:[%s1 + $0x1c38] sm:$0xff]
  %v934 = vld [vmem:[%s1 + $0x1c40] sm:$0xff]
  %v935 = vld [vmem:[%s1 + $0x1c48] sm:$0xff]
  %v936 = vld [vmem:[%s1 + $0x1c50] sm:$0xff]
  %v937 = vld [vmem:[%s1 + $0x1c58] sm:$0xff]
  %v938 = vld [vmem:[%s1 + $0x1c60] sm:$0xff]
  %v939 = vld [vmem:[%s1 + $0x1c68] sm:$0xff]
  %v940 = vld [vmem:[%s1 + $0x1c70] sm:$0xff]
  %v941 = vld [vmem:[%s1 + $0x1c78] sm:$0xff]
  %v942 = vld [vmem:[%s1 + $0x1c80] sm:$0xff]
  %v943 = vld [vmem:[%s1 + $0x1c88] sm:$0xff]
  %v944 = vld [vmem:[%s1 + $0x1c90] sm:$0xff]
  %v945 = vld [vmem:[%s1 + $0x1c98] sm:$0xff]
  %v946 = vld [vmem:[%s1 + $0x1ca0] sm:$0xff]
  %v947 = vld [vmem:[%s1 + $0x1ca8] sm:$0xff]
  %v948 = vld [vmem:[%s1 + $0x1cb0] sm:$0xff]
  %v949 = vld [vmem:[%s1 + $0x1cb8] sm:$0xff]
  %v950 = vld [vmem:[%s1 + $0x1cc0] sm:$0xff]
  %v951 = vld [vmem:[%s1 + $0x1cc8] sm:$0xff]
  %v952 = vld [vmem:[%s1 + $0x1cd0] sm:$0xff]
  %v953 = vld [vmem:[%s1 + $0x1cd8] sm:$0xff]
  %v954 = vld [vmem:[%s1 + $0x1ce0] sm:$0xff]
  %v955 = vld [vmem:[%s1 + $0x1ce8] sm:$0xff]
  %v956 = vld [vmem:[%s1 + $0x1cf0] sm:$0xff]
  %v957 = vld [vmem:[%s1 + $0x1cf8] sm:$0xff]
  %v958 = vld [vmem:[%s1 + $0x1d00] sm:$0xff]
  %v959 = vld [vmem:[%s1 + $0x1d08] sm:$0xff]
  %v960 = vld [vmem:[%s1 + $0x1d10] sm:$0xff]
  %v961 = vld [vmem:[%s1 + $0x1d18] sm:$0xff]
  %v962 = vld [vmem:[%s1 + $0x1d20] sm:$0xff]
  %v963 = vld [vmem:[%s1 + $0x1d28] sm:$0xff]
  %v964 = vld [vmem:[%s1 + $0x1d30] sm:$0xff]
  %v965 = vld [vmem:[%s1 + $0x1d38] sm:$0xff]
  %v966 = vld [vmem:[%s1 + $0x1d40] sm:$0xff]
  %v967 = vld [vmem:[%s1 + $0x1d48] sm:$0xff]
  %v968 = vld [vmem:[%s1 + $0x1d50] sm:$0xff]
  %v969 = vld [vmem:[%s1 + $0x1d58] sm:$0xff]
  %v970 = vld [vmem:[%s1 + $0x1d60] sm:$0xff]
  %v971 = vld [vmem:[%s1 + $0x1d68] sm:$0xff]
  %v972 = vld [vmem:[%s1 + $0x1d70] sm:$0xff]
  %v973 = vld [vmem:[%s1 + $0x1d78] sm:$0xff]
  %v974 = vld [vmem:[%s1 + $0x1d80] sm:$0xff]
  %v975 = vld [vmem:[%s1 + $0x1d88] sm:$0xff]
  %v976 = vld [vmem:[%s1 + $0x1d90] sm:$0xff]
  %v977 = vld [vmem:[%s1 + $0x1d98] sm:$0xff]
  %v978 = vld [vmem:[%s1 + $0x1da0] sm:$0xff]
  %v979 = vld [vmem:[%s1 + $0x1da8] sm:$0xff]
  %v980 = vld [vmem:[%s1 + $0x1db0] sm:$0xff]
  %v981 = vld [vmem:[%s1 + $0x1db8] sm:$0xff]
  %v982 = vld [vmem:[%s1 + $0x1dc0] sm:$0xff]
  %v983 = vld [vmem:[%s1 + $0x1dc8] sm:$0xff]
  %v984 = vld [vmem:[%s1 + $0x1dd0] sm:$0xff]
  %v985 = vld [vmem:[%s1 + $0x1dd8] sm:$0xff]
  %v986 = vld [vmem:[%s1 + $0x1de0] sm:$0xff]
  %v987 = vld [vmem:[%s1 + $0x1de8] sm:$0xff]
  %v988 = vld [vmem:[%s1 + $0x1df0] sm:$0xff]
  %v989 = vld [vmem:[%s1 + $0x1df8] sm:$0xff]
  %v990 = vld [vmem:[%s1 + $0x1e00] sm:$0xff]
  %v991 = vld [vmem:[%s1 + $0x1e08] sm:$0xff]
  %v992 = vld [vmem:[%s1 + $0x1e10] sm:$0xff]
  %v993 = vld [vmem:[%s1 + $0x1e18] sm:$0xff]
  %v994 = vld [vmem:[%s1 + $0x1e20] sm:$0xff]
  %v995 = vld [vmem:[%s1 + $0x1e28] sm:$0xff]
  %v996 = vld [vmem:[%s1 + $0x1e30] sm:$0xff]
  %v997 = vld [vmem:[%s1 + $0x1e38] sm:$0xff]
  %v998 = vld [vmem:[%s1 + $0x1e40] sm:$0xff]
  %v999 = vld [vmem:[%s1 + $0x1e48] sm:$0xff]
  %v1000 = vld [vmem:[%s1 + $0x1e50] sm:$0xff]
  %v1001 = vld [vmem:[%s1 + $0x1e58] sm:$0xff]
  %v1002 = vld [vmem:[%s1 + $0x1e60] sm:$0xff]
  %v1003 = vld [vmem:[%s1 + $0x1e68] sm:$0xff]
  %v1004 = vld [vmem:[%s1 + $0x1e70] sm:$0xff]
  %v1005 = vld [vmem:[%s1 + $0x1e78] sm:$0xff]
  %v1006 = vld [vmem:[%s1 + $0x1e80] sm:$0xff]
  %v1007 = vld [vmem:[%s1 + $0x1e88] sm:$0xff]
  %v1008 = vld [vmem:[%s1 + $0x1e90] sm:$0xff]
  %v1009 = vld [vmem:[%s1 + $0x1e98] sm:$0xff]
  %v1010 = vld [vmem:[%s1 + $0x1ea0] sm:$0xff]
  %v1011 = vld [vmem:[%s1 + $0x1ea8] sm:$0xff]
  %v1012 = vld [vmem:[%s1 + $0x1eb0] sm:$0xff]
  %v1013 = vld [vmem:[%s1 + $0x1eb8] sm:$0xff]
  %v1014 = vld [vmem:[%s1 + $0x1ec0] sm:$0xff]
  %v1015 = vld [vmem:[%s1 + $0x1ec8] sm:$0xff]
  %v1016 = vld [vmem:[%s1 + $0x1ed0] sm:$0xff]
  %v1017 = vld [vmem:[%s1 + $0x1ed8] sm:$0xff]
  %v1018 = vld [vmem:[%s1 + $0x1ee0] sm:$0xff]
  %v1019 = vld [vmem:[%s1 + $0x1ee8] sm:$0xff]
  %v1020 = vld [vmem:[%s1 + $0x1ef0] sm:$0xff]
  %v1021 = vld [vmem:[%s1 + $0x1ef8] sm:$0xff]
  %v1022 = vld [vmem:[%s1 + $0x1f00] sm:$0xff]
  %v1023 = vld [vmem:[%s1 + $0x1f08] sm:$0xff]
  %v1024 = vld [vmem:[%s1 + $0x1f10] sm:$0xff]
  %v1025 = vld [vmem:[%s1 + $0x1f18] sm:$0xff]
  %v1026 = vld [vmem:[%s1 + $0x1f20] sm:$0xff]
  %v1027 = vld [vmem:[%s1 + $0x1f28] sm:$0xff]
  %v1028 = vld [vmem:[%s1 + $0x1f30] sm:$0xff]
  %v1029 = vld [vmem:[%s1 + $0x1f38] sm:$0xff]
  %v1030 = vld [vmem:[%s1 + $0x1f40] sm:$0xff]
  %v1031 = vld [vmem:[%s1 + $0x1f48] sm:$0xff]
  %v1032 = vld [vmem:[%s1 + $0x1f50] sm:$0xff]
  %v1033 = vld [vmem:[%s1 + $0x1f58] sm:$0xff]
  %v1034 = vld [vmem:[%s1 + $0x1f60] sm:$0xff]
  %v1035 = vld [vmem:[%s1 + $0x1f68] sm:$0xff]
  %v1036 = vld [vmem:[%s1 + $0x1f70] sm:$0xff]
  %v1037 = vld [vmem:[%s1 + $0x1f78] sm:$0xff]
  %v1038 = vld [vmem:[%s1 + $0x1f80] sm:$0xff]
  %v1039 = vld [vmem:[%s1 + $0x1f88] sm:$0xff]
  %v1040 = vld [vmem:[%s1 + $0x1f90] sm:$0xff]
  %v1041 = vld [vmem:[%s1 + $0x1f98] sm:$0xff]
  %v1042 = vld [vmem:[%s1 + $0x1fa0] sm:$0xff]
  %v1043 = vld [vmem:[%s1 + $0x1fa8] sm:$0xff]
  %v1044 = vld [vmem:[%s1 + $0x1fb0] sm:$0xff]
  %v1045 = vld [vmem:[%s1 + $0x1fb8] sm:$0xff]
  %v1046 = vld [vmem:[%s1 + $0x1fc0] sm:$0xff]
  %v1047 = vld [vmem:[%s1 + $0x1fc8] sm:$0xff]
  %v1048 = vld [vmem:[%s1 + $0x1fd0] sm:$0xff]
  %v1049 = vld [vmem:[%s1 + $0x1fd8] sm:$0xff]
  %v1050 = vld [vmem:[%s1 + $0x1fe0] sm:$0xff]
  %v1051 = vld [vmem:[%s1 + $0x1fe8] sm:$0xff]
  %v1052 = vld [vmem:[%s1 + $0x1ff0] sm:$0xff]
  %v1053 = vld [vmem:[%s1 + $0x1ff8] sm:$0xff]
  %v1054 = vld [vmem:[%s2] sm:$0xf]
  %v1056 = vlaneseq
  %v1057 = vshrl.u32 %v1056, 7
  %v1058 = vsub.s32 0, %v1057
  %v1059 = vrot.slane %v1054, %v1058
  %v1060 = vlaneseq
  %v1061 = vshrl.u32 %v1060, 7
  %v1062 = vsub.s32 1, %v1061
  %v1063 = vrot.slane %v1054, %v1062
  %v1064 = vlaneseq
  %v1065 = vshrl.u32 %v1064, 7
  %v1066 = vsub.s32 2, %v1065
  %v1067 = vrot.slane %v1054, %v1066
  %v1068 = vlaneseq
  %v1069 = vshrl.u32 %v1068, 7
  %v1070 = vsub.s32 3, %v1069
  %v1071 = vrot.slane %v1054, %v1070
  %1076 = vmatprep.subr.mxu0 %v31
  %1077 = vmatpush1.msra.mxu0 %v30
  %1078 = vmatprep.subr.mxu0 %v35
  %1079 = vmatpush1.msra.mxu0 %v34
  %1080 = vmatprep.subr.mxu0 %v39
  %1081 = vmatpush1.msra.mxu0 %v38
  %1082 = vmatprep.subr.mxu0 %v43
  %1083 = vmatpush1.msra.mxu0 %v42
  %1084 = vmatprep.subr.mxu0 %v47
  %1085 = vmatpush1.msra.mxu0 %v46
  %1086 = vmatprep.subr.mxu0 %v51
  %1087 = vmatpush1.msra.mxu0 %v50
  %1088 = vmatprep.subr.mxu0 %v55
  %1089 = vmatpush1.msra.mxu0 %v54
  %1090 = vmatprep.subr.mxu0 %v59
  %1091 = vmatpush1.msra.mxu0 %v58
  %1092 = vmatprep.subr.mxu0 %v63
  %1093 = vmatpush1.msra.mxu0 %v62
  %1094 = vmatprep.subr.mxu0 %v67
  %1095 = vmatpush1.msra.mxu0 %v66
  %1096 = vmatprep.subr.mxu0 %v71
  %1097 = vmatpush1.msra.mxu0 %v70
  %1098 = vmatprep.subr.mxu0 %v75
  %1099 = vmatpush1.msra.mxu0 %v74
  %1100 = vmatprep.subr.mxu0 %v79
  %1101 = vmatpush1.msra.mxu0 %v78
  %1102 = vmatprep.subr.mxu0 %v83
  %1103 = vmatpush1.msra.mxu0 %v82
  %1104 = vmatprep.subr.mxu0 %v87
  %1105 = vmatpush1.msra.mxu0 %v86
  %1106 = vmatprep.subr.mxu0 %v91
  %1107 = vmatpush1.msra.mxu0 %v90
  %1108 = vmatprep.subr.mxu0 %v95
  %1109 = vmatpush1.msra.mxu0 %v94
  %1110 = vmatprep.subr.mxu0 %v99
  %1111 = vmatpush1.msra.mxu0 %v98
  %1112 = vmatprep.subr.mxu0 %v103
  %1113 = vmatpush1.msra.mxu0 %v102
  %1114 = vmatprep.subr.mxu0 %v107
  %1115 = vmatpush1.msra.mxu0 %v106
  %1116 = vmatprep.subr.mxu0 %v111
  %1117 = vmatpush1.msra.mxu0 %v110
  %1118 = vmatprep.subr.mxu0 %v115
  %1119 = vmatpush1.msra.mxu0 %v114
  %1120 = vmatprep.subr.mxu0 %v119
  %1121 = vmatpush1.msra.mxu0 %v118
  %1122 = vmatprep.subr.mxu0 %v123
  %1123 = vmatpush1.msra.mxu0 %v122
  %1124 = vmatprep.subr.mxu0 %v127
  %1125 = vmatpush1.msra.mxu0 %v126
  %1126 = vmatprep.subr.mxu0 %v131
  %1127 = vmatpush1.msra.mxu0 %v130
  %1128 = vmatprep.subr.mxu0 %v135
  %1129 = vmatpush1.msra.mxu0 %v134
  %1130 = vmatprep.subr.mxu0 %v139
  %1131 = vmatpush1.msra.mxu0 %v138
  %1132 = vmatprep.subr.mxu0 %v143
  %1133 = vmatpush1.msra.mxu0 %v142
  %1134 = vmatprep.subr.mxu0 %v147
  %1135 = vmatpush1.msra.mxu0 %v146
  %1136 = vmatprep.subr.mxu0 %v151
  %1137 = vmatpush1.msra.mxu0 %v150
  %1138 = vmatprep.subr.mxu0 %v155
  %1139 = vmatpush1.msra.mxu0 %v154
  %1140 = vmatprep.mubr.f32.mxu0 %v15
  %1141 = vmatmul.mubr.f32.gmra.mrb[0].mxu0 %v14
  %v1142 = vpop.f32.mrb[0].mxu0
  %v1143 = vadd.f32 %v1059, %v1142
  %v1144 = vpop.f32.mrb[0].mxu0
  %v1145 = vadd.f32 %v1063, %v1144
  %1146 = vdwg.mxu0
  %1147 = vmatprep.subr.mxu0 %v159
  %1148 = vmatpush1.msra.mxu0 %v158
  %1149 = vmatprep.subr.mxu0 %v163
  %1150 = vmatpush1.msra.mxu0 %v162
  %1151 = vmatprep.subr.mxu0 %v167
  %1152 = vmatpush1.msra.mxu0 %v166
  %1153 = vmatprep.subr.mxu0 %v171
  %1154 = vmatpush1.msra.mxu0 %v170
  %1155 = vmatprep.subr.mxu0 %v175
  %1156 = vmatpush1.msra.mxu0 %v174
  %1157 = vmatprep.subr.mxu0 %v179
  %1158 = vmatpush1.msra.mxu0 %v178
  %1159 = vmatprep.subr.mxu0 %v183
  %1160 = vmatpush1.msra.mxu0 %v182
  %1161 = vmatprep.subr.mxu0 %v187
  %1162 = vmatpush1.msra.mxu0 %v186
  %1163 = vmatprep.subr.mxu0 %v191
  %1164 = vmatpush1.msra.mxu0 %v190
  %1165 = vmatprep.subr.mxu0 %v195
  %1166 = vmatpush1.msra.mxu0 %v194
  %1167 = vmatprep.subr.mxu0 %v199
  %1168 = vmatpush1.msra.mxu0 %v198
  %1169 = vmatprep.subr.mxu0 %v203
  %1170 = vmatpush1.msra.mxu0 %v202
  %1171 = vmatprep.subr.mxu0 %v207
  %1172 = vmatpush1.msra.mxu0 %v206
  %1173 = vmatprep.subr.mxu0 %v211
  %1174 = vmatpush1.msra.mxu0 %v210
  %1175 = vmatprep.subr.mxu0 %v215
  %1176 = vmatpush1.msra.mxu0 %v214
  %1177 = vmatprep.subr.mxu0 %v219
  %1178 = vmatpush1.msra.mxu0 %v218
  %1179 = vmatprep.subr.mxu0 %v223
  %1180 = vmatpush1.msra.mxu0 %v222
  %1181 = vmatprep.subr.mxu0 %v227
  %1182 = vmatpush1.msra.mxu0 %v226
  %1183 = vmatprep.subr.mxu0 %v231
  %1184 = vmatpush1.msra.mxu0 %v230
  %1185 = vmatprep.subr.mxu0 %v235
  %1186 = vmatpush1.msra.mxu0 %v234
  %1187 = vmatprep.subr.mxu0 %v239
  %1188 = vmatpush1.msra.mxu0 %v238
  %1189 = vmatprep.subr.mxu0 %v243
  %1190 = vmatpush1.msra.mxu0 %v242
  %1191 = vmatprep.subr.mxu0 %v247
  %1192 = vmatpush1.msra.mxu0 %v246
  %1193 = vmatprep.subr.mxu0 %v251
  %1194 = vmatpush1.msra.mxu0 %v250
  %1195 = vmatprep.subr.mxu0 %v255
  %1196 = vmatpush1.msra.mxu0 %v254
  %1197 = vmatprep.subr.mxu0 %v259
  %1198 = vmatpush1.msra.mxu0 %v258
  %1199 = vmatprep.subr.mxu0 %v263
  %1200 = vmatpush1.msra.mxu0 %v262
  %1201 = vmatprep.subr.mxu0 %v267
  %1202 = vmatpush1.msra.mxu0 %v266
  %1203 = vmatprep.subr.mxu0 %v271
  %1204 = vmatpush1.msra.mxu0 %v270
  %1205 = vmatprep.subr.mxu0 %v275
  %1206 = vmatpush1.msra.mxu0 %v274
  %1207 = vmatprep.subr.mxu0 %v279
  %1208 = vmatpush1.msra.mxu0 %v278
  %1209 = vmatprep.subr.mxu0 %v283
  %1210 = vmatpush1.msra.mxu0 %v282
  %1211 = vmatprep.mubr.f32.mxu0 %v17
  %1212 = vmatmul.mubr.f32.gmra.mrb[0].mxu0 %v16
  %v1213 = vpop.f32.mrb[0].mxu0
  %v1214 = vadd.f32 %v1143, %v1213
  %v1215 = vpop.f32.mrb[0].mxu0
  %v1216 = vadd.f32 %v1145, %v1215
  %1217 = vdwg.mxu0
  %1218 = vmatprep.subr.mxu0 %v287
  %1219 = vmatpush1.msra.mxu0 %v286
  %1220 = vmatprep.subr.mxu0 %v291
  %1221 = vmatpush1.msra.mxu0 %v290
  %1222 = vmatprep.subr.mxu0 %v295
  %1223 = vmatpush1.msra.mxu0 %v294
  %1224 = vmatprep.subr.mxu0 %v299
  %1225 = vmatpush1.msra.mxu0 %v298
  %1226 = vmatprep.subr.mxu0 %v303
  %1227 = vmatpush1.msra.mxu0 %v302
  %1228 = vmatprep.subr.mxu0 %v307
  %1229 = vmatpush1.msra.mxu0 %v306
  %1230 = vmatprep.subr.mxu0 %v311
  %1231 = vmatpush1.msra.mxu0 %v310
  %1232 = vmatprep.subr.mxu0 %v315
  %1233 = vmatpush1.msra.mxu0 %v314
  %1234 = vmatprep.subr.mxu0 %v319
  %1235 = vmatpush1.msra.mxu0 %v318
  %1236 = vmatprep.subr.mxu0 %v323
  %1237 = vmatpush1.msra.mxu0 %v322
  %1238 = vmatprep.subr.mxu0 %v327
  %1239 = vmatpush1.msra.mxu0 %v326
  %1240 = vmatprep.subr.mxu0 %v331
  %1241 = vmatpush1.msra.mxu0 %v330
  %1242 = vmatprep.subr.mxu0 %v335
  %1243 = vmatpush1.msra.mxu0 %v334
  %1244 = vmatprep.subr.mxu0 %v339
  %1245 = vmatpush1.msra.mxu0 %v338
  %1246 = vmatprep.subr.mxu0 %v343
  %1247 = vmatpush1.msra.mxu0 %v342
  %1248 = vmatprep.subr.mxu0 %v347
  %1249 = vmatpush1.msra.mxu0 %v346
  %1250 = vmatprep.subr.mxu0 %v351
  %1251 = vmatpush1.msra.mxu0 %v350
  %1252 = vmatprep.subr.mxu0 %v355
  %1253 = vmatpush1.msra.mxu0 %v354
  %1254 = vmatprep.subr.mxu0 %v359
  %1255 = vmatpush1.msra.mxu0 %v358
  %1256 = vmatprep.subr.mxu0 %v363
  %1257 = vmatpush1.msra.mxu0 %v362
  %1258 = vmatprep.subr.mxu0 %v367
  %1259 = vmatpush1.msra.mxu0 %v366
  %1260 = vmatprep.subr.mxu0 %v371
  %1261 = vmatpush1.msra.mxu0 %v370
  %1262 = vmatprep.subr.mxu0 %v375
  %1263 = vmatpush1.msra.mxu0 %v374
  %1264 = vmatprep.subr.mxu0 %v379
  %1265 = vmatpush1.msra.mxu0 %v378
  %1266 = vmatprep.subr.mxu0 %v383
  %1267 = vmatpush1.msra.mxu0 %v382
  %1268 = vmatprep.subr.mxu0 %v387
  %1269 = vmatpush1.msra.mxu0 %v386
  %1270 = vmatprep.subr.mxu0 %v391
  %1271 = vmatpush1.msra.mxu0 %v390
  %1272 = vmatprep.subr.mxu0 %v395
  %1273 = vmatpush1.msra.mxu0 %v394
  %1274 = vmatprep.subr.mxu0 %v399
  %1275 = vmatpush1.msra.mxu0 %v398
  %1276 = vmatprep.subr.mxu0 %v403
  %1277 = vmatpush1.msra.mxu0 %v402
  %1278 = vmatprep.subr.mxu0 %v407
  %1279 = vmatpush1.msra.mxu0 %v406
  %1280 = vmatprep.subr.mxu0 %v411
  %1281 = vmatpush1.msra.mxu0 %v410
  %1282 = vmatprep.mubr.f32.mxu0 %v19
  %1283 = vmatmul.mubr.f32.gmra.mrb[0].mxu0 %v18
  %v1284 = vpop.f32.mrb[0].mxu0
  %v1285 = vadd.f32 %v1214, %v1284
  %v1286 = vpop.f32.mrb[0].mxu0
  %v1287 = vadd.f32 %v1216, %v1286
  %1288 = vdwg.mxu0
  %1289 = vmatprep.subr.mxu0 %v415
  %1290 = vmatpush1.msra.mxu0 %v414
  %1291 = vmatprep.subr.mxu0 %v419
  %1292 = vmatpush1.msra.mxu0 %v418
  %1293 = vmatprep.subr.mxu0 %v423
  %1294 = vmatpush1.msra.mxu0 %v422
  %1295 = vmatprep.subr.mxu0 %v427
  %1296 = vmatpush1.msra.mxu0 %v426
  %1297 = vmatprep.subr.mxu0 %v431
  %1298 = vmatpush1.msra.mxu0 %v430
  %1299 = vmatprep.subr.mxu0 %v435
  %1300 = vmatpush1.msra.mxu0 %v434
  %1301 = vmatprep.subr.mxu0 %v439
  %1302 = vmatpush1.msra.mxu0 %v438
  %1303 = vmatprep.subr.mxu0 %v443
  %1304 = vmatpush1.msra.mxu0 %v442
  %1305 = vmatprep.subr.mxu0 %v447
  %1306 = vmatpush1.msra.mxu0 %v446
  %1307 = vmatprep.subr.mxu0 %v451
  %1308 = vmatpush1.msra.mxu0 %v450
  %1309 = vmatprep.subr.mxu0 %v455
  %1310 = vmatpush1.msra.mxu0 %v454
  %1311 = vmatprep.subr.mxu0 %v459
  %1312 = vmatpush1.msra.mxu0 %v458
  %1313 = vmatprep.subr.mxu0 %v463
  %1314 = vmatpush1.msra.mxu0 %v462
  %1315 = vmatprep.subr.mxu0 %v467
  %1316 = vmatpush1.msra.mxu0 %v466
  %1317 = vmatprep.subr.mxu0 %v471
  %1318 = vmatpush1.msra.mxu0 %v470
  %1319 = vmatprep.subr.mxu0 %v475
  %1320 = vmatpush1.msra.mxu0 %v474
  %1321 = vmatprep.subr.mxu0 %v479
  %1322 = vmatpush1.msra.mxu0 %v478
  %1323 = vmatprep.subr.mxu0 %v483
  %1324 = vmatpush1.msra.mxu0 %v482
  %1325 = vmatprep.subr.mxu0 %v487
  %1326 = vmatpush1.msra.mxu0 %v486
  %1327 = vmatprep.subr.mxu0 %v491
  %1328 = vmatpush1.msra.mxu0 %v490
  %1329 = vmatprep.subr.mxu0 %v495
  %1330 = vmatpush1.msra.mxu0 %v494
  %1331 = vmatprep.subr.mxu0 %v499
  %1332 = vmatpush1.msra.mxu0 %v498
  %1333 = vmatprep.subr.mxu0 %v503
  %1334 = vmatpush1.msra.mxu0 %v502
  %1335 = vmatprep.subr.mxu0 %v507
  %1336 = vmatpush1.msra.mxu0 %v506
  %1337 = vmatprep.subr.mxu0 %v511
  %1338 = vmatpush1.msra.mxu0 %v510
  %1339 = vmatprep.subr.mxu0 %v515
  %1340 = vmatpush1.msra.mxu0 %v514
  %1341 = vmatprep.subr.mxu0 %v519
  %1342 = vmatpush1.msra.mxu0 %v518
  %1343 = vmatprep.subr.mxu0 %v523
  %1344 = vmatpush1.msra.mxu0 %v522
  %1345 = vmatprep.subr.mxu0 %v527
  %1346 = vmatpush1.msra.mxu0 %v526
  %1347 = vmatprep.subr.mxu0 %v531
  %1348 = vmatpush1.msra.mxu0 %v530
  %1349 = vmatprep.subr.mxu0 %v535
  %1350 = vmatpush1.msra.mxu0 %v534
  %1351 = vmatprep.subr.mxu0 %v539
  %1352 = vmatpush1.msra.mxu0 %v538
  %1353 = vmatprep.mubr.f32.mxu0 %v21
  %1354 = vmatmul.mubr.f32.gmra.mrb[0].mxu0 %v20
  %v1355 = vpop.f32.mrb[0].mxu0
  %v1356 = vadd.f32 %v1285, %v1355
  %v1357 = vpop.f32.mrb[0].mxu0
  %v1358 = vadd.f32 %v1287, %v1357
  %1359 = vdwg.mxu0
  %1360 = vmatprep.subr.mxu0 %v543
  %1361 = vmatpush1.msra.mxu0 %v542
  %1362 = vmatprep.subr.mxu0 %v547
  %1363 = vmatpush1.msra.mxu0 %v546
  %1364 = vmatprep.subr.mxu0 %v551
  %1365 = vmatpush1.msra.mxu0 %v550
  %1366 = vmatprep.subr.mxu0 %v555
  %1367 = vmatpush1.msra.mxu0 %v554
  %1368 = vmatprep.subr.mxu0 %v559
  %1369 = vmatpush1.msra.mxu0 %v558
  %1370 = vmatprep.subr.mxu0 %v563
  %1371 = vmatpush1.msra.mxu0 %v562
  %1372 = vmatprep.subr.mxu0 %v567
  %1373 = vmatpush1.msra.mxu0 %v566
  %1374 = vmatprep.subr.mxu0 %v571
  %1375 = vmatpush1.msra.mxu0 %v570
  %1376 = vmatprep.subr.mxu0 %v575
  %1377 = vmatpush1.msra.mxu0 %v574
  %1378 = vmatprep.subr.mxu0 %v579
  %1379 = vmatpush1.msra.mxu0 %v578
  %1380 = vmatprep.subr.mxu0 %v583
  %1381 = vmatpush1.msra.mxu0 %v582
  %1382 = vmatprep.subr.mxu0 %v587
  %1383 = vmatpush1.msra.mxu0 %v586
  %1384 = vmatprep.subr.mxu0 %v591
  %1385 = vmatpush1.msra.mxu0 %v590
  %1386 = vmatprep.subr.mxu0 %v595
  %1387 = vmatpush1.msra.mxu0 %v594
  %1388 = vmatprep.subr.mxu0 %v599
  %1389 = vmatpush1.msra.mxu0 %v598
  %1390 = vmatprep.subr.mxu0 %v603
  %1391 = vmatpush1.msra.mxu0 %v602
  %1392 = vmatprep.subr.mxu0 %v607
  %1393 = vmatpush1.msra.mxu0 %v606
  %1394 = vmatprep.subr.mxu0 %v611
  %1395 = vmatpush1.msra.mxu0 %v610
  %1396 = vmatprep.subr.mxu0 %v615
  %1397 = vmatpush1.msra.mxu0 %v614
  %1398 = vmatprep.subr.mxu0 %v619
  %1399 = vmatpush1.msra.mxu0 %v618
  %1400 = vmatprep.subr.mxu0 %v623
  %1401 = vmatpush1.msra.mxu0 %v622
  %1402 = vmatprep.subr.mxu0 %v627
  %1403 = vmatpush1.msra.mxu0 %v626
  %1404 = vmatprep.subr.mxu0 %v631
  %1405 = vmatpush1.msra.mxu0 %v630
  %1406 = vmatprep.subr.mxu0 %v635
  %1407 = vmatpush1.msra.mxu0 %v634
  %1408 = vmatprep.subr.mxu0 %v639
  %1409 = vmatpush1.msra.mxu0 %v638
  %1410 = vmatprep.subr.mxu0 %v643
  %1411 = vmatpush1.msra.mxu0 %v642
  %1412 = vmatprep.subr.mxu0 %v647
  %1413 = vmatpush1.msra.mxu0 %v646
  %1414 = vmatprep.subr.mxu0 %v651
  %1415 = vmatpush1.msra.mxu0 %v650
  %1416 = vmatprep.subr.mxu0 %v655
  %1417 = vmatpush1.msra.mxu0 %v654
  %1418 = vmatprep.subr.mxu0 %v659
  %1419 = vmatpush1.msra.mxu0 %v658
  %1420 = vmatprep.subr.mxu0 %v663
  %1421 = vmatpush1.msra.mxu0 %v662
  %1422 = vmatprep.subr.mxu0 %v667
  %1423 = vmatpush1.msra.mxu0 %v666
  %1424 = vmatprep.mubr.f32.mxu0 %v23
  %1425 = vmatmul.mubr.f32.gmra.mrb[0].mxu0 %v22
  %v1426 = vpop.f32.mrb[0].mxu0
  %v1427 = vadd.f32 %v1356, %v1426
  %v1428 = vpop.f32.mrb[0].mxu0
  %v1429 = vadd.f32 %v1358, %v1428
  %1430 = vdwg.mxu0
  %1431 = vmatprep.subr.mxu0 %v671
  %1432 = vmatpush1.msra.mxu0 %v670
  %1433 = vmatprep.subr.mxu0 %v675
  %1434 = vmatpush1.msra.mxu0 %v674
  %1435 = vmatprep.subr.mxu0 %v679
  %1436 = vmatpush1.msra.mxu0 %v678
  %1437 = vmatprep.subr.mxu0 %v683
  %1438 = vmatpush1.msra.mxu0 %v682
  %1439 = vmatprep.subr.mxu0 %v687
  %1440 = vmatpush1.msra.mxu0 %v686
  %1441 = vmatprep.subr.mxu0 %v691
  %1442 = vmatpush1.msra.mxu0 %v690
  %1443 = vmatprep.subr.mxu0 %v695
  %1444 = vmatpush1.msra.mxu0 %v694
  %1445 = vmatprep.subr.mxu0 %v699
  %1446 = vmatpush1.msra.mxu0 %v698
  %1447 = vmatprep.subr.mxu0 %v703
  %1448 = vmatpush1.msra.mxu0 %v702
  %1449 = vmatprep.subr.mxu0 %v707
  %1450 = vmatpush1.msra.mxu0 %v706
  %1451 = vmatprep.subr.mxu0 %v711
  %1452 = vmatpush1.msra.mxu0 %v710
  %1453 = vmatprep.subr.mxu0 %v715
  %1454 = vmatpush1.msra.mxu0 %v714
  %1455 = vmatprep.subr.mxu0 %v719
  %1456 = vmatpush1.msra.mxu0 %v718
  %1457 = vmatprep.subr.mxu0 %v723
  %1458 = vmatpush1.msra.mxu0 %v722
  %1459 = vmatprep.subr.mxu0 %v727
  %1460 = vmatpush1.msra.mxu0 %v726
  %1461 = vmatprep.subr.mxu0 %v731
  %1462 = vmatpush1.msra.mxu0 %v730
  %1463 = vmatprep.subr.mxu0 %v735
  %1464 = vmatpush1.msra.mxu0 %v734
  %1465 = vmatprep.subr.mxu0 %v739
  %1466 = vmatpush1.msra.mxu0 %v738
  %1467 = vmatprep.subr.mxu0 %v743
  %1468 = vmatpush1.msra.mxu0 %v742
  %1469 = vmatprep.subr.mxu0 %v747
  %1470 = vmatpush1.msra.mxu0 %v746
  %1471 = vmatprep.subr.mxu0 %v751
  %1472 = vmatpush1.msra.mxu0 %v750
  %1473 = vmatprep.subr.mxu0 %v755
  %1474 = vmatpush1.msra.mxu0 %v754
  %1475 = vmatprep.subr.mxu0 %v759
  %1476 = vmatpush1.msra.mxu0 %v758
  %1477 = vmatprep.subr.mxu0 %v763
  %1478 = vmatpush1.msra.mxu0 %v762
  %1479 = vmatprep.subr.mxu0 %v767
  %1480 = vmatpush1.msra.mxu0 %v766
  %1481 = vmatprep.subr.mxu0 %v771
  %1482 = vmatpush1.msra.mxu0 %v770
  %1483 = vmatprep.subr.mxu0 %v775
  %1484 = vmatpush1.msra.mxu0 %v774
  %1485 = vmatprep.subr.mxu0 %v779
  %1486 = vmatpush1.msra.mxu0 %v778
  %1487 = vmatprep.subr.mxu0 %v783
  %1488 = vmatpush1.msra.mxu0 %v782
  %1489 = vmatprep.subr.mxu0 %v787
  %1490 = vmatpush1.msra.mxu0 %v786
  %1491 = vmatprep.subr.mxu0 %v791
  %1492 = vmatpush1.msra.mxu0 %v790
  %1493 = vmatprep.subr.mxu0 %v795
  %1494 = vmatpush1.msra.mxu0 %v794
  %1495 = vmatprep.mubr.f32.mxu0 %v25
  %1496 = vmatmul.mubr.f32.gmra.mrb[0].mxu0 %v24
  %v1497 = vpop.f32.mrb[0].mxu0
  %v1498 = vadd.f32 %v1427, %v1497
  %v1499 = vpop.f32.mrb[0].mxu0
  %v1500 = vadd.f32 %v1429, %v1499
  %1501 = vdwg.mxu0
  %1502 = vmatprep.subr.mxu0 %v799
  %1503 = vmatpush1.msra.mxu0 %v798
  %1504 = vmatprep.subr.mxu0 %v803
  %1505 = vmatpush1.msra.mxu0 %v802
  %1506 = vmatprep.subr.mxu0 %v807
  %1507 = vmatpush1.msra.mxu0 %v806
  %1508 = vmatprep.subr.mxu0 %v811
  %1509 = vmatpush1.msra.mxu0 %v810
  %1510 = vmatprep.subr.mxu0 %v815
  %1511 = vmatpush1.msra.mxu0 %v814
  %1512 = vmatprep.subr.mxu0 %v819
  %1513 = vmatpush1.msra.mxu0 %v818
  %1514 = vmatprep.subr.mxu0 %v823
  %1515 = vmatpush1.msra.mxu0 %v822
  %1516 = vmatprep.subr.mxu0 %v827
  %1517 = vmatpush1.msra.mxu0 %v826
  %1518 = vmatprep.subr.mxu0 %v831
  %1519 = vmatpush1.msra.mxu0 %v830
  %1520 = vmatprep.subr.mxu0 %v835
  %1521 = vmatpush1.msra.mxu0 %v834
  %1522 = vmatprep.subr.mxu0 %v839
  %1523 = vmatpush1.msra.mxu0 %v838
  %1524 = vmatprep.subr.mxu0 %v843
  %1525 = vmatpush1.msra.mxu0 %v842
  %1526 = vmatprep.subr.mxu0 %v847
  %1527 = vmatpush1.msra.mxu0 %v846
  %1528 = vmatprep.subr.mxu0 %v851
  %1529 = vmatpush1.msra.mxu0 %v850
  %1530 = vmatprep.subr.mxu0 %v855
  %1531 = vmatpush1.msra.mxu0 %v854
  %1532 = vmatprep.subr.mxu0 %v859
  %1533 = vmatpush1.msra.mxu0 %v858
  %1534 = vmatprep.subr.mxu0 %v863
  %1535 = vmatpush1.msra.mxu0 %v862
  %1536 = vmatprep.subr.mxu0 %v867
  %1537 = vmatpush1.msra.mxu0 %v866
  %1538 = vmatprep.subr.mxu0 %v871
  %1539 = vmatpush1.msra.mxu0 %v870
  %1540 = vmatprep.subr.mxu0 %v875
  %1541 = vmatpush1.msra.mxu0 %v874
  %1542 = vmatprep.subr.mxu0 %v879
  %1543 = vmatpush1.msra.mxu0 %v878
  %1544 = vmatprep.subr.mxu0 %v883
  %1545 = vmatpush1.msra.mxu0 %v882
  %1546 = vmatprep.subr.mxu0 %v887
  %1547 = vmatpush1.msra.mxu0 %v886
  %1548 = vmatprep.subr.mxu0 %v891
  %1549 = vmatpush1.msra.mxu0 %v890
  %1550 = vmatprep.subr.mxu0 %v895
  %1551 = vmatpush1.msra.mxu0 %v894
  %1552 = vmatprep.subr.mxu0 %v899
  %1553 = vmatpush1.msra.mxu0 %v898
  %1554 = vmatprep.subr.mxu0 %v903
  %1555 = vmatpush1.msra.mxu0 %v902
  %1556 = vmatprep.subr.mxu0 %v907
  %1557 = vmatpush1.msra.mxu0 %v906
  %1558 = vmatprep.subr.mxu0 %v911
  %1559 = vmatpush1.msra.mxu0 %v910
  %1560 = vmatprep.subr.mxu0 %v915
  %1561 = vmatpush1.msra.mxu0 %v914
  %1562 = vmatprep.subr.mxu0 %v919
  %1563 = vmatpush1.msra.mxu0 %v918
  %1564 = vmatprep.subr.mxu0 %v923
  %1565 = vmatpush1.msra.mxu0 %v922
  %1566 = vmatprep.mubr.f32.mxu0 %v27
  %1567 = vmatmul.mubr.f32.gmra.mrb[0].mxu0 %v26
  %v1568 = vpop.f32.mrb[0].mxu0
  %v1569 = vadd.f32 %v1498, %v1568
  %v1570 = vpop.f32.mrb[0].mxu0
  %v1571 = vadd.f32 %v1500, %v1570
  %1572 = vdwg.mxu0
  %1573 = vmatprep.subr.mxu0 %v927
  %1574 = vmatpush1.msra.mxu0 %v926
  %1575 = vmatprep.subr.mxu0 %v931
  %1576 = vmatpush1.msra.mxu0 %v930
  %1577 = vmatprep.subr.mxu0 %v935
  %1578 = vmatpush1.msra.mxu0 %v934
  %1579 = vmatprep.subr.mxu0 %v939
  %1580 = vmatpush1.msra.mxu0 %v938
  %1581 = vmatprep.subr.mxu0 %v943
  %1582 = vmatpush1.msra.mxu0 %v942
  %1583 = vmatprep.subr.mxu0 %v947
  %1584 = vmatpush1.msra.mxu0 %v946
  %1585 = vmatprep.subr.mxu0 %v951
  %1586 = vmatpush1.msra.mxu0 %v950
  %1587 = vmatprep.subr.mxu0 %v955
  %1588 = vmatpush1.msra.mxu0 %v954
  %1589 = vmatprep.subr.mxu0 %v959
  %1590 = vmatpush1.msra.mxu0 %v958
  %1591 = vmatprep.subr.mxu0 %v963
  %1592 = vmatpush1.msra.mxu0 %v962
  %1593 = vmatprep.subr.mxu0 %v967
  %1594 = vmatpush1.msra.mxu0 %v966
  %1595 = vmatprep.subr.mxu0 %v971
  %1596 = vmatpush1.msra.mxu0 %v970
  %1597 = vmatprep.subr.mxu0 %v975
  %1598 = vmatpush1.msra.mxu0 %v974
  %1599 = vmatprep.subr.mxu0 %v979
  %1600 = vmatpush1.msra.mxu0 %v978
  %1601 = vmatprep.subr.mxu0 %v983
  %1602 = vmatpush1.msra.mxu0 %v982
  %1603 = vmatprep.subr.mxu0 %v987
  %1604 = vmatpush1.msra.mxu0 %v986
  %1605 = vmatprep.subr.mxu0 %v991
  %1606 = vmatpush1.msra.mxu0 %v990
  %1607 = vmatprep.subr.mxu0 %v995
  %1608 = vmatpush1.msra.mxu0 %v994
  %1609 = vmatprep.subr.mxu0 %v999
  %1610 = vmatpush1.msra.mxu0 %v998
  %1611 = vmatprep.subr.mxu0 %v1003
  %1612 = vmatpush1.msra.mxu0 %v1002
  %1613 = vmatprep.subr.mxu0 %v1007
  %1614 = vmatpush1.msra.mxu0 %v1006
  %1615 = vmatprep.subr.mxu0 %v1011
  %1616 = vmatpush1.msra.mxu0 %v1010
  %1617 = vmatprep.subr.mxu0 %v1015
  %1618 = vmatpush1.msra.mxu0 %v1014
  %1619 = vmatprep.subr.mxu0 %v1019
  %1620 = vmatpush1.msra.mxu0 %v1018
  %1621 = vmatprep.subr.mxu0 %v1023
  %1622 = vmatpush1.msra.mxu0 %v1022
  %1623 = vmatprep.subr.mxu0 %v1027
  %1624 = vmatpush1.msra.mxu0 %v1026
  %1625 = vmatprep.subr.mxu0 %v1031
  %1626 = vmatpush1.msra.mxu0 %v1030
  %1627 = vmatprep.subr.mxu0 %v1035
  %1628 = vmatpush1.msra.mxu0 %v1034
  %1629 = vmatprep.subr.mxu0 %v1039
  %1630 = vmatpush1.msra.mxu0 %v1038
  %1631 = vmatprep.subr.mxu0 %v1043
  %1632 = vmatpush1.msra.mxu0 %v1042
  %1633 = vmatprep.subr.mxu0 %v1047
  %1634 = vmatpush1.msra.mxu0 %v1046
  %1635 = vmatprep.subr.mxu0 %v1051
  %1636 = vmatpush1.msra.mxu0 %v1050
  %1637 = vmatprep.mubr.f32.mxu0 %v29
  %1638 = vmatmul.mubr.f32.gmra.mrb[0].mxu0 %v28
  %v1639 = vpop.f32.mrb[0].mxu0
  %v1640 = vadd.f32 %v1569, %v1639
  %v1641 = vpop.f32.mrb[0].mxu0
  %v1642 = vadd.f32 %v1571, %v1641
  %1643 = vdwg.mxu0
  %1644 = vmatprep.subr.mxu0 %v33
  %1645 = vmatpush1.msra.mxu0 %v32
  %1646 = vmatprep.subr.mxu0 %v37
  %1647 = vmatpush1.msra.mxu0 %v36
  %1648 = vmatprep.subr.mxu0 %v41
  %1649 = vmatpush1.msra.mxu0 %v40
  %1650 = vmatprep.subr.mxu0 %v45
  %1651 = vmatpush1.msra.mxu0 %v44
  %1652 = vmatprep.subr.mxu0 %v49
  %1653 = vmatpush1.msra.mxu0 %v48
  %1654 = vmatprep.subr.mxu0 %v53
  %1655 = vmatpush1.msra.mxu0 %v52
  %1656 = vmatprep.subr.mxu0 %v57
  %1657 = vmatpush1.msra.mxu0 %v56
  %1658 = vmatprep.subr.mxu0 %v61
  %1659 = vmatpush1.msra.mxu0 %v60
  %1660 = vmatprep.subr.mxu0 %v65
  %1661 = vmatpush1.msra.mxu0 %v64
  %1662 = vmatprep.subr.mxu0 %v69
  %1663 = vmatpush1.msra.mxu0 %v68
  %1664 = vmatprep.subr.mxu0 %v73
  %1665 = vmatpush1.msra.mxu0 %v72
  %1666 = vmatprep.subr.mxu0 %v77
  %1667 = vmatpush1.msra.mxu0 %v76
  %1668 = vmatprep.subr.mxu0 %v81
  %1669 = vmatpush1.msra.mxu0 %v80
  %1670 = vmatprep.subr.mxu0 %v85
  %1671 = vmatpush1.msra.mxu0 %v84
  %1672 = vmatprep.subr.mxu0 %v89
  %1673 = vmatpush1.msra.mxu0 %v88
  %1674 = vmatprep.subr.mxu0 %v93
  %1675 = vmatpush1.msra.mxu0 %v92
  %1676 = vmatprep.subr.mxu0 %v97
  %1677 = vmatpush1.msra.mxu0 %v96
  %1678 = vmatprep.subr.mxu0 %v101
  %1679 = vmatpush1.msra.mxu0 %v100
  %1680 = vmatprep.subr.mxu0 %v105
  %1681 = vmatpush1.msra.mxu0 %v104
  %1682 = vmatprep.subr.mxu0 %v109
  %1683 = vmatpush1.msra.mxu0 %v108
  %1684 = vmatprep.subr.mxu0 %v113
  %1685 = vmatpush1.msra.mxu0 %v112
  %1686 = vmatprep.subr.mxu0 %v117
  %1687 = vmatpush1.msra.mxu0 %v116
  %1688 = vmatprep.subr.mxu0 %v121
  %1689 = vmatpush1.msra.mxu0 %v120
  %1690 = vmatprep.subr.mxu0 %v125
  %1691 = vmatpush1.msra.mxu0 %v124
  %1692 = vmatprep.subr.mxu0 %v129
  %1693 = vmatpush1.msra.mxu0 %v128
  %1694 = vmatprep.subr.mxu0 %v133
  %1695 = vmatpush1.msra.mxu0 %v132
  %1696 = vmatprep.subr.mxu0 %v137
  %1697 = vmatpush1.msra.mxu0 %v136
  %1698 = vmatprep.subr.mxu0 %v141
  %1699 = vmatpush1.msra.mxu0 %v140
  %1700 = vmatprep.subr.mxu0 %v145
  %1701 = vmatpush1.msra.mxu0 %v144
  %1702 = vmatprep.subr.mxu0 %v149
  %1703 = vmatpush1.msra.mxu0 %v148
  %1704 = vmatprep.subr.mxu0 %v153
  %1705 = vmatpush1.msra.mxu0 %v152
  %1706 = vmatprep.subr.mxu0 %v157
  %1707 = vmatpush1.msra.mxu0 %v156
  %1708 = vmatprep.mubr.f32.mxu0 %v15
  %1709 = vmatmul.mubr.f32.gmra.mrb[0].mxu0 %v14
  %v1710 = vpop.f32.mrb[0].mxu0
  %v1711 = vadd.f32 %v1067, %v1710
  %v1712 = vpop.f32.mrb[0].mxu0
  %v1713 = vadd.f32 %v1071, %v1712
  %1714 = vdwg.mxu0
  %1715 = vmatprep.subr.mxu0 %v161
  %1716 = vmatpush1.msra.mxu0 %v160
  %1717 = vmatprep.subr.mxu0 %v165
  %1718 = vmatpush1.msra.mxu0 %v164
  %1719 = vmatprep.subr.mxu0 %v169
  %1720 = vmatpush1.msra.mxu0 %v168
  %1721 = vmatprep.subr.mxu0 %v173
  %1722 = vmatpush1.msra.mxu0 %v172
  %1723 = vmatprep.subr.mxu0 %v177
  %1724 = vmatpush1.msra.mxu0 %v176
  %1725 = vmatprep.subr.mxu0 %v181
  %1726 = vmatpush1.msra.mxu0 %v180
  %1727 = vmatprep.subr.mxu0 %v185
  %1728 = vmatpush1.msra.mxu0 %v184
  %1729 = vmatprep.subr.mxu0 %v189
  %1730 = vmatpush1.msra.mxu0 %v188
  %1731 = vmatprep.subr.mxu0 %v193
  %1732 = vmatpush1.msra.mxu0 %v192
  %1733 = vmatprep.subr.mxu0 %v197
  %1734 = vmatpush1.msra.mxu0 %v196
  %1735 = vmatprep.subr.mxu0 %v201
  %1736 = vmatpush1.msra.mxu0 %v200
  %1737 = vmatprep.subr.mxu0 %v205
  %1738 = vmatpush1.msra.mxu0 %v204
  %1739 = vmatprep.subr.mxu0 %v209
  %1740 = vmatpush1.msra.mxu0 %v208
  %1741 = vmatprep.subr.mxu0 %v213
  %1742 = vmatpush1.msra.mxu0 %v212
  %1743 = vmatprep.subr.mxu0 %v217
  %1744 = vmatpush1.msra.mxu0 %v216
  %1745 = vmatprep.subr.mxu0 %v221
  %1746 = vmatpush1.msra.mxu0 %v220
  %1747 = vmatprep.subr.mxu0 %v225
  %1748 = vmatpush1.msra.mxu0 %v224
  %1749 = vmatprep.subr.mxu0 %v229
  %1750 = vmatpush1.msra.mxu0 %v228
  %1751 = vmatprep.subr.mxu0 %v233
  %1752 = vmatpush1.msra.mxu0 %v232
  %1753 = vmatprep.subr.mxu0 %v237
  %1754 = vmatpush1.msra.mxu0 %v236
  %1755 = vmatprep.subr.mxu0 %v241
  %1756 = vmatpush1.msra.mxu0 %v240
  %1757 = vmatprep.subr.mxu0 %v245
  %1758 = vmatpush1.msra.mxu0 %v244
  %1759 = vmatprep.subr.mxu0 %v249
  %1760 = vmatpush1.msra.mxu0 %v248
  %1761 = vmatprep.subr.mxu0 %v253
  %1762 = vmatpush1.msra.mxu0 %v252
  %1763 = vmatprep.subr.mxu0 %v257
  %1764 = vmatpush1.msra.mxu0 %v256
  %1765 = vmatprep.subr.mxu0 %v261
  %1766 = vmatpush1.msra.mxu0 %v260
  %1767 = vmatprep.subr.mxu0 %v265
  %1768 = vmatpush1.msra.mxu0 %v264
  %1769 = vmatprep.subr.mxu0 %v269
  %1770 = vmatpush1.msra.mxu0 %v268
  %1771 = vmatprep.subr.mxu0 %v273
  %1772 = vmatpush1.msra.mxu0 %v272
  %1773 = vmatprep.subr.mxu0 %v277
  %1774 = vmatpush1.msra.mxu0 %v276
  %1775 = vmatprep.subr.mxu0 %v281
  %1776 = vmatpush1.msra.mxu0 %v280
  %1777 = vmatprep.subr.mxu0 %v285
  %1778 = vmatpush1.msra.mxu0 %v284
  %1779 = vmatprep.mubr.f32.mxu0 %v17
  %1780 = vmatmul.mubr.f32.gmra.mrb[0].mxu0 %v16
  %v1781 = vpop.f32.mrb[0].mxu0
  %v1782 = vadd.f32 %v1711, %v1781
  %v1783 = vpop.f32.mrb[0].mxu0
  %v1784 = vadd.f32 %v1713, %v1783
  %1785 = vdwg.mxu0
  %1786 = vmatprep.subr.mxu0 %v289
  %1787 = vmatpush1.msra.mxu0 %v288
  %1788 = vmatprep.subr.mxu0 %v293
  %1789 = vmatpush1.msra.mxu0 %v292
  %1790 = vmatprep.subr.mxu0 %v297
  %1791 = vmatpush1.msra.mxu0 %v296
  %1792 = vmatprep.subr.mxu0 %v301
  %1793 = vmatpush1.msra.mxu0 %v300
  %1794 = vmatprep.subr.mxu0 %v305
  %1795 = vmatpush1.msra.mxu0 %v304
  %1796 = vmatprep.subr.mxu0 %v309
  %1797 = vmatpush1.msra.mxu0 %v308
  %1798 = vmatprep.subr.mxu0 %v313
  %1799 = vmatpush1.msra.mxu0 %v312
  %1800 = vmatprep.subr.mxu0 %v317
  %1801 = vmatpush1.msra.mxu0 %v316
  %1802 = vmatprep.subr.mxu0 %v321
  %1803 = vmatpush1.msra.mxu0 %v320
  %1804 = vmatprep.subr.mxu0 %v325
  %1805 = vmatpush1.msra.mxu0 %v324
  %1806 = vmatprep.subr.mxu0 %v329
  %1807 = vmatpush1.msra.mxu0 %v328
  %1808 = vmatprep.subr.mxu0 %v333
  %1809 = vmatpush1.msra.mxu0 %v332
  %1810 = vmatprep.subr.mxu0 %v337
  %1811 = vmatpush1.msra.mxu0 %v336
  %1812 = vmatprep.subr.mxu0 %v341
  %1813 = vmatpush1.msra.mxu0 %v340
  %1814 = vmatprep.subr.mxu0 %v345
  %1815 = vmatpush1.msra.mxu0 %v344
  %1816 = vmatprep.subr.mxu0 %v349
  %1817 = vmatpush1.msra.mxu0 %v348
  %1818 = vmatprep.subr.mxu0 %v353
  %1819 = vmatpush1.msra.mxu0 %v352
  %1820 = vmatprep.subr.mxu0 %v357
  %1821 = vmatpush1.msra.mxu0 %v356
  %1822 = vmatprep.subr.mxu0 %v361
  %1823 = vmatpush1.msra.mxu0 %v360
  %1824 = vmatprep.subr.mxu0 %v365
  %1825 = vmatpush1.msra.mxu0 %v364
  %1826 = vmatprep.subr.mxu0 %v369
  %1827 = vmatpush1.msra.mxu0 %v368
  %1828 = vmatprep.subr.mxu0 %v373
  %1829 = vmatpush1.msra.mxu0 %v372
  %1830 = vmatprep.subr.mxu0 %v377
  %1831 = vmatpush1.msra.mxu0 %v376
  %1832 = vmatprep.subr.mxu0 %v381
  %1833 = vmatpush1.msra.mxu0 %v380
  %1834 = vmatprep.subr.mxu0 %v385
  %1835 = vmatpush1.msra.mxu0 %v384
  %1836 = vmatprep.subr.mxu0 %v389
  %1837 = vmatpush1.msra.mxu0 %v388
  %1838 = vmatprep.subr.mxu0 %v393
  %1839 = vmatpush1.msra.mxu0 %v392
  %1840 = vmatprep.subr.mxu0 %v397
  %1841 = vmatpush1.msra.mxu0 %v396
  %1842 = vmatprep.subr.mxu0 %v401
  %1843 = vmatpush1.msra.mxu0 %v400
  %1844 = vmatprep.subr.mxu0 %v405
  %1845 = vmatpush1.msra.mxu0 %v404
  %1846 = vmatprep.subr.mxu0 %v409
  %1847 = vmatpush1.msra.mxu0 %v408
  %1848 = vmatprep.subr.mxu0 %v413
  %1849 = vmatpush1.msra.mxu0 %v412
  %1850 = vmatprep.mubr.f32.mxu0 %v19
  %1851 = vmatmul.mubr.f32.gmra.mrb[0].mxu0 %v18
  %v1852 = vpop.f32.mrb[0].mxu0
  %v1853 = vadd.f32 %v1782, %v1852
  %v1854 = vpop.f32.mrb[0].mxu0
  %v1855 = vadd.f32 %v1784, %v1854
  %1856 = vdwg.mxu0
  %1857 = vmatprep.subr.mxu0 %v417
  %1858 = vmatpush1.msra.mxu0 %v416
  %1859 = vmatprep.subr.mxu0 %v421
  %1860 = vmatpush1.msra.mxu0 %v420
  %1861 = vmatprep.subr.mxu0 %v425
  %1862 = vmatpush1.msra.mxu0 %v424
  %1863 = vmatprep.subr.mxu0 %v429
  %1864 = vmatpush1.msra.mxu0 %v428
  %1865 = vmatprep.subr.mxu0 %v433
  %1866 = vmatpush1.msra.mxu0 %v432
  %1867 = vmatprep.subr.mxu0 %v437
  %1868 = vmatpush1.msra.mxu0 %v436
  %1869 = vmatprep.subr.mxu0 %v441
  %1870 = vmatpush1.msra.mxu0 %v440
  %1871 = vmatprep.subr.mxu0 %v445
  %1872 = vmatpush1.msra.mxu0 %v444
  %1873 = vmatprep.subr.mxu0 %v449
  %1874 = vmatpush1.msra.mxu0 %v448
  %1875 = vmatprep.subr.mxu0 %v453
  %1876 = vmatpush1.msra.mxu0 %v452
  %1877 = vmatprep.subr.mxu0 %v457
  %1878 = vmatpush1.msra.mxu0 %v456
  %1879 = vmatprep.subr.mxu0 %v461
  %1880 = vmatpush1.msra.mxu0 %v460
  %1881 = vmatprep.subr.mxu0 %v465
  %1882 = vmatpush1.msra.mxu0 %v464
  %1883 = vmatprep.subr.mxu0 %v469
  %1884 = vmatpush1.msra.mxu0 %v468
  %1885 = vmatprep.subr.mxu0 %v473
  %1886 = vmatpush1.msra.mxu0 %v472
  %1887 = vmatprep.subr.mxu0 %v477
  %1888 = vmatpush1.msra.mxu0 %v476
  %1889 = vmatprep.subr.mxu0 %v481
  %1890 = vmatpush1.msra.mxu0 %v480
  %1891 = vmatprep.subr.mxu0 %v485
  %1892 = vmatpush1.msra.mxu0 %v484
  %1893 = vmatprep.subr.mxu0 %v489
  %1894 = vmatpush1.msra.mxu0 %v488
  %1895 = vmatprep.subr.mxu0 %v493
  %1896 = vmatpush1.msra.mxu0 %v492
  %1897 = vmatprep.subr.mxu0 %v497
  %1898 = vmatpush1.msra.mxu0 %v496
  %1899 = vmatprep.subr.mxu0 %v501
  %1900 = vmatpush1.msra.mxu0 %v500
  %1901 = vmatprep.subr.mxu0 %v505
  %1902 = vmatpush1.msra.mxu0 %v504
  %1903 = vmatprep.subr.mxu0 %v509
  %1904 = vmatpush1.msra.mxu0 %v508
  %1905 = vmatprep.subr.mxu0 %v513
  %1906 = vmatpush1.msra.mxu0 %v512
  %1907 = vmatprep.subr.mxu0 %v517
  %1908 = vmatpush1.msra.mxu0 %v516
  %1909 = vmatprep.subr.mxu0 %v521
  %1910 = vmatpush1.msra.mxu0 %v520
  %1911 = vmatprep.subr.mxu0 %v525
  %1912 = vmatpush1.msra.mxu0 %v524
  %1913 = vmatprep.subr.mxu0 %v529
  %1914 = vmatpush1.msra.mxu0 %v528
  %1915 = vmatprep.subr.mxu0 %v533
  %1916 = vmatpush1.msra.mxu0 %v532
  %1917 = vmatprep.subr.mxu0 %v537
  %1918 = vmatpush1.msra.mxu0 %v536
  %1919 = vmatprep.subr.mxu0 %v541
  %1920 = vmatpush1.msra.mxu0 %v540
  %1921 = vmatprep.mubr.f32.mxu0 %v21
  %1922 = vmatmul.mubr.f32.gmra.mrb[0].mxu0 %v20
  %v1923 = vpop.f32.mrb[0].mxu0
  %v1924 = vadd.f32 %v1853, %v1923
  %v1925 = vpop.f32.mrb[0].mxu0
  %v1926 = vadd.f32 %v1855, %v1925
  %1927 = vdwg.mxu0
  %1928 = vmatprep.subr.mxu0 %v545
  %1929 = vmatpush1.msra.mxu0 %v544
  %1930 = vmatprep.subr.mxu0 %v549
  %1931 = vmatpush1.msra.mxu0 %v548
  %1932 = vmatprep.subr.mxu0 %v553
  %1933 = vmatpush1.msra.mxu0 %v552
  %1934 = vmatprep.subr.mxu0 %v557
  %1935 = vmatpush1.msra.mxu0 %v556
  %1936 = vmatprep.subr.mxu0 %v561
  %1937 = vmatpush1.msra.mxu0 %v560
  %1938 = vmatprep.subr.mxu0 %v565
  %1939 = vmatpush1.msra.mxu0 %v564
  %1940 = vmatprep.subr.mxu0 %v569
  %1941 = vmatpush1.msra.mxu0 %v568
  %1942 = vmatprep.subr.mxu0 %v573
  %1943 = vmatpush1.msra.mxu0 %v572
  %1944 = vmatprep.subr.mxu0 %v577
  %1945 = vmatpush1.msra.mxu0 %v576
  %1946 = vmatprep.subr.mxu0 %v581
  %1947 = vmatpush1.msra.mxu0 %v580
  %1948 = vmatprep.subr.mxu0 %v585
  %1949 = vmatpush1.msra.mxu0 %v584
  %1950 = vmatprep.subr.mxu0 %v589
  %1951 = vmatpush1.msra.mxu0 %v588
  %1952 = vmatprep.subr.mxu0 %v593
  %1953 = vmatpush1.msra.mxu0 %v592
  %1954 = vmatprep.subr.mxu0 %v597
  %1955 = vmatpush1.msra.mxu0 %v596
  %1956 = vmatprep.subr.mxu0 %v601
  %1957 = vmatpush1.msra.mxu0 %v600
  %1958 = vmatprep.subr.mxu0 %v605
  %1959 = vmatpush1.msra.mxu0 %v604
  %1960 = vmatprep.subr.mxu0 %v609
  %1961 = vmatpush1.msra.mxu0 %v608
  %1962 = vmatprep.subr.mxu0 %v613
  %1963 = vmatpush1.msra.mxu0 %v612
  %1964 = vmatprep.subr.mxu0 %v617
  %1965 = vmatpush1.msra.mxu0 %v616
  %1966 = vmatprep.subr.mxu0 %v621
  %1967 = vmatpush1.msra.mxu0 %v620
  %1968 = vmatprep.subr.mxu0 %v625
  %1969 = vmatpush1.msra.mxu0 %v624
  %1970 = vmatprep.subr.mxu0 %v629
  %1971 = vmatpush1.msra.mxu0 %v628
  %1972 = vmatprep.subr.mxu0 %v633
  %1973 = vmatpush1.msra.mxu0 %v632
  %1974 = vmatprep.subr.mxu0 %v637
  %1975 = vmatpush1.msra.mxu0 %v636
  %1976 = vmatprep.subr.mxu0 %v641
  %1977 = vmatpush1.msra.mxu0 %v640
  %1978 = vmatprep.subr.mxu0 %v645
  %1979 = vmatpush1.msra.mxu0 %v644
  %1980 = vmatprep.subr.mxu0 %v649
  %1981 = vmatpush1.msra.mxu0 %v648
  %1982 = vmatprep.subr.mxu0 %v653
  %1983 = vmatpush1.msra.mxu0 %v652
  %1984 = vmatprep.subr.mxu0 %v657
  %1985 = vmatpush1.msra.mxu0 %v656
  %1986 = vmatprep.subr.mxu0 %v661
  %1987 = vmatpush1.msra.mxu0 %v660
  %1988 = vmatprep.subr.mxu0 %v665
  %1989 = vmatpush1.msra.mxu0 %v664
  %1990 = vmatprep.subr.mxu0 %v669
  %1991 = vmatpush1.msra.mxu0 %v668
  %1992 = vmatprep.mubr.f32.mxu0 %v23
  %1993 = vmatmul.mubr.f32.gmra.mrb[0].mxu0 %v22
  %v1994 = vpop.f32.mrb[0].mxu0
  %v1995 = vadd.f32 %v1924, %v1994
  %v1996 = vpop.f32.mrb[0].mxu0
  %v1997 = vadd.f32 %v1926, %v1996
  %1998 = vdwg.mxu0
  %1999 = vmatprep.subr.mxu0 %v673
  %2000 = vmatpush1.msra.mxu0 %v672
  %2001 = vmatprep.subr.mxu0 %v677
  %2002 = vmatpush1.msra.mxu0 %v676
  %2003 = vmatprep.subr.mxu0 %v681
  %2004 = vmatpush1.msra.mxu0 %v680
  %2005 = vmatprep.subr.mxu0 %v685
  %2006 = vmatpush1.msra.mxu0 %v684
  %2007 = vmatprep.subr.mxu0 %v689
  %2008 = vmatpush1.msra.mxu0 %v688
  %2009 = vmatprep.subr.mxu0 %v693
  %2010 = vmatpush1.msra.mxu0 %v692
  %2011 = vmatprep.subr.mxu0 %v697
  %2012 = vmatpush1.msra.mxu0 %v696
  %2013 = vmatprep.subr.mxu0 %v701
  %2014 = vmatpush1.msra.mxu0 %v700
  %2015 = vmatprep.subr.mxu0 %v705
  %2016 = vmatpush1.msra.mxu0 %v704
  %2017 = vmatprep.subr.mxu0 %v709
  %2018 = vmatpush1.msra.mxu0 %v708
  %2019 = vmatprep.subr.mxu0 %v713
  %2020 = vmatpush1.msra.mxu0 %v712
  %2021 = vmatprep.subr.mxu0 %v717
  %2022 = vmatpush1.msra.mxu0 %v716
  %2023 = vmatprep.subr.mxu0 %v721
  %2024 = vmatpush1.msra.mxu0 %v720
  %2025 = vmatprep.subr.mxu0 %v725
  %2026 = vmatpush1.msra.mxu0 %v724
  %2027 = vmatprep.subr.mxu0 %v729
  %2028 = vmatpush1.msra.mxu0 %v728
  %2029 = vmatprep.subr.mxu0 %v733
  %2030 = vmatpush1.msra.mxu0 %v732
  %2031 = vmatprep.subr.mxu0 %v737
  %2032 = vmatpush1.msra.mxu0 %v736
  %2033 = vmatprep.subr.mxu0 %v741
  %2034 = vmatpush1.msra.mxu0 %v740
  %2035 = vmatprep.subr.mxu0 %v745
  %2036 = vmatpush1.msra.mxu0 %v744
  %2037 = vmatprep.subr.mxu0 %v749
  %2038 = vmatpush1.msra.mxu0 %v748
  %2039 = vmatprep.subr.mxu0 %v753
  %2040 = vmatpush1.msra.mxu0 %v752
  %2041 = vmatprep.subr.mxu0 %v757
  %2042 = vmatpush1.msra.mxu0 %v756
  %2043 = vmatprep.subr.mxu0 %v761
  %2044 = vmatpush1.msra.mxu0 %v760
  %2045 = vmatprep.subr.mxu0 %v765
  %2046 = vmatpush1.msra.mxu0 %v764
  %2047 = vmatprep.subr.mxu0 %v769
  %2048 = vmatpush1.msra.mxu0 %v768
  %2049 = vmatprep.subr.mxu0 %v773
  %2050 = vmatpush1.msra.mxu0 %v772
  %2051 = vmatprep.subr.mxu0 %v777
  %2052 = vmatpush1.msra.mxu0 %v776
  %2053 = vmatprep.subr.mxu0 %v781
  %2054 = vmatpush1.msra.mxu0 %v780
  %2055 = vmatprep.subr.mxu0 %v785
  %2056 = vmatpush1.msra.mxu0 %v784
  %2057 = vmatprep.subr.mxu0 %v789
  %2058 = vmatpush1.msra.mxu0 %v788
  %2059 = vmatprep.subr.mxu0 %v793
  %2060 = vmatpush1.msra.mxu0 %v792
  %2061 = vmatprep.subr.mxu0 %v797
  %2062 = vmatpush1.msra.mxu0 %v796
  %2063 = vmatprep.mubr.f32.mxu0 %v25
  %2064 = vmatmul.mubr.f32.gmra.mrb[0].mxu0 %v24
  %v2065 = vpop.f32.mrb[0].mxu0
  %v2066 = vadd.f32 %v1995, %v2065
  %v2067 = vpop.f32.mrb[0].mxu0
  %v2068 = vadd.f32 %v1997, %v2067
  %2069 = vdwg.mxu0
  %2070 = vmatprep.subr.mxu0 %v801
  %2071 = vmatpush1.msra.mxu0 %v800
  %2072 = vmatprep.subr.mxu0 %v805
  %2073 = vmatpush1.msra.mxu0 %v804
  %2074 = vmatprep.subr.mxu0 %v809
  %2075 = vmatpush1.msra.mxu0 %v808
  %2076 = vmatprep.subr.mxu0 %v813
  %2077 = vmatpush1.msra.mxu0 %v812
  %2078 = vmatprep.subr.mxu0 %v817
  %2079 = vmatpush1.msra.mxu0 %v816
  %2080 = vmatprep.subr.mxu0 %v821
  %2081 = vmatpush1.msra.mxu0 %v820
  %2082 = vmatprep.subr.mxu0 %v825
  %2083 = vmatpush1.msra.mxu0 %v824
  %2084 = vmatprep.subr.mxu0 %v829
  %2085 = vmatpush1.msra.mxu0 %v828
  %2086 = vmatprep.subr.mxu0 %v833
  %2087 = vmatpush1.msra.mxu0 %v832
  %2088 = vmatprep.subr.mxu0 %v837
  %2089 = vmatpush1.msra.mxu0 %v836
  %2090 = vmatprep.subr.mxu0 %v841
  %2091 = vmatpush1.msra.mxu0 %v840
  %2092 = vmatprep.subr.mxu0 %v845
  %2093 = vmatpush1.msra.mxu0 %v844
  %2094 = vmatprep.subr.mxu0 %v849
  %2095 = vmatpush1.msra.mxu0 %v848
  %2096 = vmatprep.subr.mxu0 %v853
  %2097 = vmatpush1.msra.mxu0 %v852
  %2098 = vmatprep.subr.mxu0 %v857
  %2099 = vmatpush1.msra.mxu0 %v856
  %2100 = vmatprep.subr.mxu0 %v861
  %2101 = vmatpush1.msra.mxu0 %v860
  %2102 = vmatprep.subr.mxu0 %v865
  %2103 = vmatpush1.msra.mxu0 %v864
  %2104 = vmatprep.subr.mxu0 %v869
  %2105 = vmatpush1.msra.mxu0 %v868
  %2106 = vmatprep.subr.mxu0 %v873
  %2107 = vmatpush1.msra.mxu0 %v872
  %2108 = vmatprep.subr.mxu0 %v877
  %2109 = vmatpush1.msra.mxu0 %v876
  %2110 = vmatprep.subr.mxu0 %v881
  %2111 = vmatpush1.msra.mxu0 %v880
  %2112 = vmatprep.subr.mxu0 %v885
  %2113 = vmatpush1.msra.mxu0 %v884
  %2114 = vmatprep.subr.mxu0 %v889
  %2115 = vmatpush1.msra.mxu0 %v888
  %2116 = vmatprep.subr.mxu0 %v893
  %2117 = vmatpush1.msra.mxu0 %v892
  %2118 = vmatprep.subr.mxu0 %v897
  %2119 = vmatpush1.msra.mxu0 %v896
  %2120 = vmatprep.subr.mxu0 %v901
  %2121 = vmatpush1.msra.mxu0 %v900
  %2122 = vmatprep.subr.mxu0 %v905
  %2123 = vmatpush1.msra.mxu0 %v904
  %2124 = vmatprep.subr.mxu0 %v909
  %2125 = vmatpush1.msra.mxu0 %v908
  %2126 = vmatprep.subr.mxu0 %v913
  %2127 = vmatpush1.msra.mxu0 %v912
  %2128 = vmatprep.subr.mxu0 %v917
  %2129 = vmatpush1.msra.mxu0 %v916
  %2130 = vmatprep.subr.mxu0 %v921
  %2131 = vmatpush1.msra.mxu0 %v920
  %2132 = vmatprep.subr.mxu0 %v925
  %2133 = vmatpush1.msra.mxu0 %v924
  %2134 = vmatprep.mubr.f32.mxu0 %v27
  %2135 = vmatmul.mubr.f32.gmra.mrb[0].mxu0 %v26
  %v2136 = vpop.f32.mrb[0].mxu0
  %v2137 = vadd.f32 %v2066, %v2136
  %v2138 = vpop.f32.mrb[0].mxu0
  %v2139 = vadd.f32 %v2068, %v2138
  %2140 = vdwg.mxu0
  %2141 = vmatprep.subr.mxu0 %v929
  %2142 = vmatpush1.msra.mxu0 %v928
  %2143 = vmatprep.subr.mxu0 %v933
  %2144 = vmatpush1.msra.mxu0 %v932
  %2145 = vmatprep.subr.mxu0 %v937
  %2146 = vmatpush1.msra.mxu0 %v936
  %2147 = vmatprep.subr.mxu0 %v941
  %2148 = vmatpush1.msra.mxu0 %v940
  %2149 = vmatprep.subr.mxu0 %v945
  %2150 = vmatpush1.msra.mxu0 %v944
  %2151 = vmatprep.subr.mxu0 %v949
  %2152 = vmatpush1.msra.mxu0 %v948
  %2153 = vmatprep.subr.mxu0 %v953
  %2154 = vmatpush1.msra.mxu0 %v952
  %2155 = vmatprep.subr.mxu0 %v957
  %2156 = vmatpush1.msra.mxu0 %v956
  %2157 = vmatprep.subr.mxu0 %v961
  %2158 = vmatpush1.msra.mxu0 %v960
  %2159 = vmatprep.subr.mxu0 %v965
  %2160 = vmatpush1.msra.mxu0 %v964
  %2161 = vmatprep.subr.mxu0 %v969
  %2162 = vmatpush1.msra.mxu0 %v968
  %2163 = vmatprep.subr.mxu0 %v973
  %2164 = vmatpush1.msra.mxu0 %v972
  %2165 = vmatprep.subr.mxu0 %v977
  %2166 = vmatpush1.msra.mxu0 %v976
  %2167 = vmatprep.subr.mxu0 %v981
  %2168 = vmatpush1.msra.mxu0 %v980
  %2169 = vmatprep.subr.mxu0 %v985
  %2170 = vmatpush1.msra.mxu0 %v984
  %2171 = vmatprep.subr.mxu0 %v989
  %2172 = vmatpush1.msra.mxu0 %v988
  %2173 = vmatprep.subr.mxu0 %v993
  %2174 = vmatpush1.msra.mxu0 %v992
  %2175 = vmatprep.subr.mxu0 %v997
  %2176 = vmatpush1.msra.mxu0 %v996
  %2177 = vmatprep.subr.mxu0 %v1001
  %2178 = vmatpush1.msra.mxu0 %v1000
  %2179 = vmatprep.subr.mxu0 %v1005
  %2180 = vmatpush1.msra.mxu0 %v1004
  %2181 = vmatprep.subr.mxu0 %v1009
  %2182 = vmatpush1.msra.mxu0 %v1008
  %2183 = vmatprep.subr.mxu0 %v1013
  %2184 = vmatpush1.msra.mxu0 %v1012
  %2185 = vmatprep.subr.mxu0 %v1017
  %2186 = vmatpush1.msra.mxu0 %v1016
  %2187 = vmatprep.subr.mxu0 %v1021
  %2188 = vmatpush1.msra.mxu0 %v1020
  %2189 = vmatprep.subr.mxu0 %v1025
  %2190 = vmatpush1.msra.mxu0 %v1024
  %2191 = vmatprep.subr.mxu0 %v1029
  %2192 = vmatpush1.msra.mxu0 %v1028
  %2193 = vmatprep.subr.mxu0 %v1033
  %2194 = vmatpush1.msra.mxu0 %v1032
  %2195 = vmatprep.subr.mxu0 %v1037
  %2196 = vmatpush1.msra.mxu0 %v1036
  %2197 = vmatprep.subr.mxu0 %v1041
  %2198 = vmatpush1.msra.mxu0 %v1040
  %2199 = vmatprep.subr.mxu0 %v1045
  %2200 = vmatpush1.msra.mxu0 %v1044
  %2201 = vmatprep.subr.mxu0 %v1049
  %2202 = vmatpush1.msra.mxu0 %v1048
  %2203 = vmatprep.subr.mxu0 %v1053
  %2204 = vmatpush1.msra.mxu0 %v1052
  %2205 = vmatprep.mubr.f32.mxu0 %v29
  %2206 = vmatmul.mubr.f32.gmra.mrb[0].mxu0 %v28
  %v2207 = vpop.f32.mrb[0].mxu0
  %v2208 = vadd.f32 %v2137, %v2207
  %v2209 = vpop.f32.mrb[0].mxu0
  %v2210 = vadd.f32 %v2139, %v2209
  %2211 = vdwg.mxu0
  %2212 = vst [vmem:[%s3] sm:$0xff] %v1640
  %2213 = vst [vmem:[%s3 + $0x8] sm:$0xff] %v1642
  %2214 = vst [vmem:[%s3 + $0x10] sm:$0xff] %v2208
  %vm2215 = vcmask 949248
  %2216 = vst.msk [vmem:[%s3 + $0x18] sm:$0xff] %vm2215, %v2210
  // Predicated region
  $region14: #{lenet_encoder_forward.5} parent=0 // pred_check
    _
  $region15: #{lenet_encoder_forward.5} parent=0 // pred_check_branch
    %2218 = sbr.rel (0) target = $region17
  $region16: #{lenet_encoder_forward.5} parent=0 // pred_region
    _
  $region17: #{lenet_encoder_forward.5} parent=0 // pred_fallthru
    _
  // Predicated region
  $region18: #{lenet_encoder_forward.5} parent=0 // pred_check
    _
  $region19: #{lenet_encoder_forward.5} parent=0 // pred_check_branch
    %2220 = sbr.rel (0) target = $region21
  $region20: #{lenet_encoder_forward.5} parent=0 // pred_region
    _
  $region21: #{lenet_encoder_forward.5} parent=0 // pred_fallthru
    _

</llo_original>
